<compile_context>
chip_gen: v7x
topology: tpu7x:2x2x1
jax: 0.10.0
libtpu: 0.0.40
codegen_flags: <defaults>
</compile_context>

<pallas_src>
import functools

import jax
import jax.numpy as jnp
from jax import lax
from jax.experimental import pallas as pl
from jax.experimental.pallas import tpu as pltpu


def _round_up(n, m):
    return ((n + m - 1) // m) * m


def _gelu(x):
    # tanh-approximate GELU (lowers to the EUP tanh unit).
    # TODO(synk): PyTorch nn.GELU default is the exact erf form; tanh approx deviates ~1e-3.
    return 0.5 * x * (1.0 + jnp.tanh(0.7978845608028654 * (x + 0.044715 * x * x * x)))


def mbconv_residual_kernel(x_ref, col_ref, w1_ref, b1_ref, dw_ref, db_ref,
                           wse1_ref, wse2_ref, w2_ref, b2_ref, o_ref, *, H, W):
    HW = x_ref.shape[1]

    x2d = x_ref[0]                                                # (HW, Cp) f32

    # --- 1x1 expansion conv (MXU: bf16 inputs, f32 accumulation) + GELU ---
    h = jnp.dot(x2d.astype(jnp.bfloat16), w1_ref[...],
                preferred_element_type=jnp.float32) + b1_ref[...]
    h = _gelu(h)                                                  # (HW, Chp) f32

    # --- depthwise 3x3 conv, stride 1, padding 1 ---
    # Register-resident 9-tap shift-and-accumulate on the flattened (HW, Chp) slab.
    # Each tap is a static sublane roll (XLU) + a boundary mask; the mask zeroes exactly
    # the positions that would have read zero padding (or wrapped rows after the roll).
    flat = lax.broadcasted_iota(jnp.int32, (HW, 1), 0)            # flattened index y*W + x
    col = col_ref[...]                                            # x coordinate, (HW, 1) int32
    row_mask = {                                                  # "source row y+dy exists"
        -1: jnp.where(flat >= W, 1.0, 0.0),
        0: None,
        1: jnp.where(flat < (H - 1) * W, 1.0, 0.0),
    }
    col_mask = {                                                  # "source column x+dx exists"
        -1: jnp.where(col >= 1, 1.0, 0.0),
        0: None,
        1: jnp.where(col < (W - 1), 1.0, 0.0),
    }
    acc = jnp.zeros_like(h)
    for k in range(9):                                            # static unrolled 9-tap loop
        dy, dx = k // 3 - 1, k % 3 - 1
        off = dy * W + dx
        shifted = h if off == 0 else pltpu.roll(h, shift=(-off) % HW, axis=0)
        contrib = shifted * dw_ref[k:k + 1, :]
        rm, cm = row_mask[dy], col_mask[dx]
        mask = rm if cm is None else (cm if rm is None else rm * cm)
        if mask is not None:
            contrib = contrib * mask
        acc = acc + contrib
    acc = _gelu(acc + db_ref[...])                                # (HW, Chp) f32

    # --- squeeze-excitation: global mean pool -> Linear -> SiLU -> Linear -> sigmoid ---
    pooled = jnp.mean(acc, axis=0, keepdims=True)                 # (1, Chp)
    s = jnp.dot(pooled, wse1_ref[...], preferred_element_type=jnp.float32)
    s = s * jax.nn.sigmoid(s)                                     # SiLU
    gate = jax.nn.sigmoid(
        jnp.dot(s, wse2_ref[...], preferred_element_type=jnp.float32))    # (1, Chp)
    gated = acc * gate                                            # broadcast over HW

    # --- 1x1 projection conv + residual add (Dropsample(prob=0) == identity) ---
    y = jnp.dot(gated.astype(jnp.bfloat16), w2_ref[...],
                preferred_element_type=jnp.float32) + b2_ref[...]
    o_ref[0] = y + x2d


def mbconv_residual(x_nchw, params):
    (w_expand, b_expand, w_dw, b_dw, w_se1, w_se2, w_proj, b_proj) = params
    B, C, H, W = x_nchw.shape
    Ch = w_expand.shape[0]
    Cr = w_se1.shape[0]
    HW = H * W

    LANE = 128
    Cp, Chp, Crp = _round_up(C, LANE), _round_up(Ch, LANE), _round_up(Cr, LANE)

    # NCHW -> flattened NHWC with a lane-dense (multiple-of-128) channel axis.
    x = jnp.transpose(x_nchw, (0, 2, 3, 1)).astype(jnp.float32).reshape(B, HW, C)
    x = jnp.pad(x, ((0, 0), (0, 0), (0, Cp - C)))

    # Plain-JAX glue: PyTorch-layout params -> matmul-friendly, zero-padded layouts.
    def pad2(a, r, c):
        return jnp.pad(a, ((0, r - a.shape[0]), (0, c - a.shape[1])))

    w1 = pad2(w_expand[:, :, 0, 0].T, Cp, Chp).astype(jnp.bfloat16)          # (Cp, Chp)
    b1 = pad2(b_expand.reshape(1, Ch), 1, Chp).astype(jnp.float32)
    dw = pad2(jnp.transpose(w_dw[:, 0], (1, 2, 0)).reshape(9, Ch), 9, Chp)   # (ky*3+kx, Chp)
    dw = dw.astype(jnp.float32)
    db = pad2(b_dw.reshape(1, Ch), 1, Chp).astype(jnp.float32)
    wse1 = pad2(w_se1.T, Chp, Crp).astype(jnp.float32)                       # (Chp, Crp)
    wse2 = pad2(w_se2.T, Crp, Chp).astype(jnp.float32)                       # (Crp, Chp)
    w2 = pad2(w_proj[:, :, 0, 0].T, Chp, Cp).astype(jnp.bfloat16)            # (Chp, Cp)
    b2 = pad2(b_proj.reshape(1, C), 1, Cp).astype(jnp.float32)
    colidx = (jnp.arange(HW, dtype=jnp.int32) % W).reshape(HW, 1)            # x coordinate

    full = lambda shp: pl.BlockSpec(shp, lambda b: (0,) * len(shp))

    out = pl.pallas_call(
        functools.partial(mbconv_residual_kernel, H=H, W=W),
        out_shape=jax.ShapeDtypeStruct((B, HW, Cp), jnp.float32),
        grid_spec=pltpu.PrefetchScalarGridSpec(
            num_scalar_prefetch=0,
            grid=(B,),
            in_specs=[
                pl.BlockSpec((1, HW, Cp), lambda b: (b, 0, 0)),    # x (flattened NHWC)
                full((HW, 1)),                                     # column index (boundary masks)
                full((Cp, Chp)), full((1, Chp)),                   # expand conv w, b
                full((9, Chp)), full((1, Chp)),                    # depthwise w, b
                full((Chp, Crp)), full((Crp, Chp)),                # SE weights (no bias)
                full((Chp, Cp)), full((1, Cp)),                    # project conv w, b
            ],
            out_specs=pl.BlockSpec((1, HW, Cp), lambda b: (b, 0, 0)),
        ),
        compiler_params=pltpu.CompilerParams(
            dimension_semantics=("parallel",),        # >= 2 steps -> both TCs on v7x
            vmem_limit_bytes=32 * 1024 * 1024,        # lifts v5e's 16 MiB scoped default
        ),
    )(x, colidx, w1, b1, dw, db, wse1, wse2, w2, b2)

    out = out.reshape(B, H, W, Cp)[..., :C]                        # drop channel padding
    return jnp.transpose(out, (0, 3, 1, 2))                        # back to NCHW


if __name__ == "__main__":
    # Small shapes consistent with the module: NCHW input, dim_in == dim_out (residual path).
    B, C, H, W = 2, 8, 16, 16
    expansion_rate, shrinkage_rate = 4, 0.25
    Ch = int(expansion_rate * C)          # 32
    Cr = int(Ch * shrinkage_rate)         # 8

    key = jax.random.PRNGKey(0)
    kx, *kp = jax.random.split(key, 9)
    x = jax.random.normal(kx, (B, C, H, W), jnp.float32)

    # Deterministic synthetic parameters in their PyTorch shapes.
    params = (
        0.05 * jax.random.normal(kp[0], (Ch, C, 1, 1), jnp.float32),   # Conv2d(C, Ch, 1) weight
        0.05 * jax.random.normal(kp[1], (Ch,), jnp.float32),           # Conv2d(C, Ch, 1) bias
        0.05 * jax.random.normal(kp[2], (Ch, 1, 3, 3), jnp.float32),   # depthwise Conv2d weight
        0.05 * jax.random.normal(kp[3], (Ch,), jnp.float32),           # depthwise Conv2d bias
        0.05 * jax.random.normal(kp[4], (Cr, Ch), jnp.float32),        # SE Linear(Ch->Cr), no bias
        0.05 * jax.random.normal(kp[5], (Ch, Cr), jnp.float32),        # SE Linear(Cr->Ch), no bias
        0.05 * jax.random.normal(kp[6], (C, Ch, 1, 1), jnp.float32),   # Conv2d(Ch, C, 1) weight
        0.05 * jax.random.normal(kp[7], (C,), jnp.float32),            # Conv2d(Ch, C, 1) bias
    )

    out = mbconv_residual(x, params)
    jax.block_until_ready(out)
    assert out.shape == (B, C, H, W) and out.dtype == jnp.float32
    print("KERNEL_OK")
</pallas_src>

<mosaic_0001>
module attributes {stable_mosaic.version = 11 : i64} {
  func.func @mbconv_residual_kernel(%arg0: i32, %arg1: memref<1x256x128xf32, #tpu.memory_space<vmem>>, %arg2: memref<256x1xi32, #tpu.memory_space<vmem>>, %arg3: memref<128x128xbf16, #tpu.memory_space<vmem>>, %arg4: memref<1x128xf32, #tpu.memory_space<vmem>>, %arg5: memref<9x128xf32, #tpu.memory_space<vmem>>, %arg6: memref<1x128xf32, #tpu.memory_space<vmem>>, %arg7: memref<128x128xf32, #tpu.memory_space<vmem>>, %arg8: memref<128x128xf32, #tpu.memory_space<vmem>>, %arg9: memref<128x128xbf16, #tpu.memory_space<vmem>>, %arg10: memref<1x128xf32, #tpu.memory_space<vmem>>, %arg11: memref<1x256x128xf32, #tpu.memory_space<vmem>>) attributes {dimension_semantics = [#tpu.dimension_semantics<parallel>], iteration_bounds = array<i64: 2>, scalar_prefetch = 0 : i64, scratch_operands = 0 : i64, tpu.core_type = #tpu.core_type<tc>, window_params = [{transform_indices = @transform_0, window_bounds = array<i64: 1, 256, 128>}, {pipeline_mode = #tpu.pipeline_mode<synchronous>, transform_indices = @transform_1, window_bounds = array<i64: 256, 1>}, {pipeline_mode = #tpu.pipeline_mode<synchronous>, transform_indices = @transform_2, window_bounds = array<i64: 128, 128>}, {pipeline_mode = #tpu.pipeline_mode<synchronous>, transform_indices = @transform_3, window_bounds = array<i64: 1, 128>}, {pipeline_mode = #tpu.pipeline_mode<synchronous>, transform_indices = @transform_4, window_bounds = array<i64: 9, 128>}, {pipeline_mode = #tpu.pipeline_mode<synchronous>, transform_indices = @transform_5, window_bounds = array<i64: 1, 128>}, {pipeline_mode = #tpu.pipeline_mode<synchronous>, transform_indices = @transform_6, window_bounds = array<i64: 128, 128>}, {pipeline_mode = #tpu.pipeline_mode<synchronous>, transform_indices = @transform_7, window_bounds = array<i64: 128, 128>}, {pipeline_mode = #tpu.pipeline_mode<synchronous>, transform_indices = @transform_8, window_bounds = array<i64: 128, 128>}, {pipeline_mode = #tpu.pipeline_mode<synchronous>, transform_indices = @transform_9, window_bounds = array<i64: 1, 128>}, {transform_indices = @transform_10, window_bounds = array<i64: 1, 256, 128>}]} {
    %c0 = arith.constant 0 : index
    %c0_0 = arith.constant 0 : index
    %c0_1 = arith.constant 0 : index
    %0 = vector.load %arg1[%c0, %c0_0, %c0_1] : memref<1x256x128xf32, #tpu.memory_space<vmem>>, vector<1x256x128xf32>
    %1 = vector.shape_cast %0 : vector<1x256x128xf32> to vector<256x128xf32>
    %2 = arith.truncf %1 : vector<256x128xf32> to vector<256x128xbf16>
    %c0_2 = arith.constant 0 : index
    %c0_3 = arith.constant 0 : index
    %3 = vector.load %arg3[%c0_2, %c0_3] : memref<128x128xbf16, #tpu.memory_space<vmem>>, vector<128x128xbf16>
    %cst = arith.constant dense<0.000000e+00> : vector<256x128xf32>
    %4 = tpu.matmul %2, %3, %cst {dimension_numbers = #tpu.dot_dimension_numbers<[1], [0], [0], [1], [0, 0, 1, 1], [], []>} : vector<256x128xbf16>, vector<128x128xbf16>, vector<256x128xf32> -> vector<256x128xf32>
    %c0_4 = arith.constant 0 : index
    %c0_5 = arith.constant 0 : index
    %5 = vector.load %arg4[%c0_4, %c0_5] : memref<1x128xf32, #tpu.memory_space<vmem>>, vector<1x128xf32>
    %6 = vector.broadcast %5 : vector<1x128xf32> to vector<256x128xf32>
    %7 = arith.addf %4, %6 : vector<256x128xf32>
    %cst_6 = arith.constant 5.000000e-01 : f32
    %8 = vector.broadcast %cst_6 : f32 to vector<256x128xf32>
    %9 = arith.mulf %8, %7 : vector<256x128xf32>
    %cst_7 = arith.constant 4.471500e-02 : f32
    %10 = vector.broadcast %cst_7 : f32 to vector<256x128xf32>
    %11 = arith.mulf %10, %7 : vector<256x128xf32>
    %12 = arith.mulf %11, %7 : vector<256x128xf32>
    %13 = arith.mulf %12, %7 : vector<256x128xf32>
    %14 = arith.addf %7, %13 : vector<256x128xf32>
    %cst_8 = arith.constant 0.797884583 : f32
    %15 = vector.broadcast %cst_8 : f32 to vector<256x128xf32>
    %16 = arith.mulf %15, %14 : vector<256x128xf32>
    %17 = math.tanh %16 : vector<256x128xf32>
    %cst_9 = arith.constant 1.000000e+00 : f32
    %18 = vector.broadcast %cst_9 : f32 to vector<256x128xf32>
    %19 = arith.addf %18, %17 : vector<256x128xf32>
    %20 = arith.mulf %9, %19 : vector<256x128xf32>
    %21 = tpu.iota {dimensions = array<i32: 0>} : vector<256x1xi32>
    %c0_10 = arith.constant 0 : index
    %c0_11 = arith.constant 0 : index
    %22 = vector.load %arg2[%c0_10, %c0_11] : memref<256x1xi32, #tpu.memory_space<vmem>>, vector<256x1xi32>
    %c16_i32 = arith.constant 16 : i32
    %23 = vector.broadcast %c16_i32 : i32 to vector<256x1xi32>
    %24 = arith.cmpi sge, %21, %23 : vector<256x1xi32>
    %cst_12 = arith.constant 1.000000e+00 : f32
    %cst_13 = arith.constant 0.000000e+00 : f32
    %25 = vector.broadcast %cst_12 : f32 to vector<256x1xf32>
    %26 = vector.broadcast %cst_13 : f32 to vector<256x1xf32>
    %27 = arith.select %24, %25, %26 : vector<256x1xi1>, vector<256x1xf32>
    %c240_i32 = arith.constant 240 : i32
    %28 = vector.broadcast %c240_i32 : i32 to vector<256x1xi32>
    %29 = arith.cmpi slt, %21, %28 : vector<256x1xi32>
    %cst_14 = arith.constant 1.000000e+00 : f32
    %cst_15 = arith.constant 0.000000e+00 : f32
    %30 = vector.broadcast %cst_14 : f32 to vector<256x1xf32>
    %31 = vector.broadcast %cst_15 : f32 to vector<256x1xf32>
    %32 = arith.select %29, %30, %31 : vector<256x1xi1>, vector<256x1xf32>
    %c1_i32 = arith.constant 1 : i32
    %33 = vector.broadcast %c1_i32 : i32 to vector<256x1xi32>
    %34 = arith.cmpi sge, %22, %33 : vector<256x1xi32>
    %cst_16 = arith.constant 1.000000e+00 : f32
    %cst_17 = arith.constant 0.000000e+00 : f32
    %35 = vector.broadcast %cst_16 : f32 to vector<256x1xf32>
    %36 = vector.broadcast %cst_17 : f32 to vector<256x1xf32>
    %37 = arith.select %34, %35, %36 : vector<256x1xi1>, vector<256x1xf32>
    %c15_i32 = arith.constant 15 : i32
    %38 = vector.broadcast %c15_i32 : i32 to vector<256x1xi32>
    %39 = arith.cmpi slt, %22, %38 : vector<256x1xi32>
    %cst_18 = arith.constant 1.000000e+00 : f32
    %cst_19 = arith.constant 0.000000e+00 : f32
    %40 = vector.broadcast %cst_18 : f32 to vector<256x1xf32>
    %41 = vector.broadcast %cst_19 : f32 to vector<256x1xf32>
    %42 = arith.select %39, %40, %41 : vector<256x1xi1>, vector<256x1xf32>
    %cst_20 = arith.constant 0.000000e+00 : f32
    %43 = vector.broadcast %cst_20 : f32 to vector<256x128xf32>
    %c17_i32 = arith.constant 17 : i32
    %44 = tpu.dynamic_rotate %20 by %c17_i32 dim 0 : vector<256x128xf32>, i32 -> vector<256x128xf32>
    %c0_21 = arith.constant 0 : index
    %c0_22 = arith.constant 0 : index
    %45 = vector.load %arg5[%c0_21, %c0_22] : memref<9x128xf32, #tpu.memory_space<vmem>>, vector<1x128xf32>
    %46 = vector.broadcast %45 : vector<1x128xf32> to vector<256x128xf32>
    %47 = arith.mulf %44, %46 : vector<256x128xf32>
    %48 = arith.mulf %27, %37 : vector<256x1xf32>
    %49 = vector.broadcast %48 : vector<256x1xf32> to vector<256x128xf32>
    %50 = arith.mulf %47, %49 : vector<256x128xf32>
    %51 = arith.addf %43, %50 : vector<256x128xf32>
    %c16_i32_23 = arith.constant 16 : i32
    %52 = tpu.dynamic_rotate %20 by %c16_i32_23 dim 0 : vector<256x128xf32>, i32 -> vector<256x128xf32>
    %c1 = arith.constant 1 : index
    %c0_24 = arith.constant 0 : index
    %53 = vector.load %arg5[%c1, %c0_24] : memref<9x128xf32, #tpu.memory_space<vmem>>, vector<1x128xf32>
    %54 = vector.broadcast %53 : vector<1x128xf32> to vector<256x128xf32>
    %55 = arith.mulf %52, %54 : vector<256x128xf32>
    %56 = vector.broadcast %27 : vector<256x1xf32> to vector<256x128xf32>
    %57 = arith.mulf %55, %56 : vector<256x128xf32>
    %58 = arith.addf %51, %57 : vector<256x128xf32>
    %c15_i32_25 = arith.constant 15 : i32
    %59 = tpu.dynamic_rotate %20 by %c15_i32_25 dim 0 : vector<256x128xf32>, i32 -> vector<256x128xf32>
    %c2 = arith.constant 2 : index
    %c0_26 = arith.constant 0 : index
    %60 = vector.load %arg5[%c2, %c0_26] : memref<9x128xf32, #tpu.memory_space<vmem>>, vector<1x128xf32>
    %61 = vector.broadcast %60 : vector<1x128xf32> to vector<256x128xf32>
    %62 = arith.mulf %59, %61 : vector<256x128xf32>
    %63 = arith.mulf %27, %42 : vector<256x1xf32>
    %64 = vector.broadcast %63 : vector<256x1xf32> to vector<256x128xf32>
    %65 = arith.mulf %62, %64 : vector<256x128xf32>
    %66 = arith.addf %58, %65 : vector<256x128xf32>
    %c1_i32_27 = arith.constant 1 : i32
    %67 = tpu.dynamic_rotate %20 by %c1_i32_27 dim 0 : vector<256x128xf32>, i32 -> vector<256x128xf32>
    %c3 = arith.constant 3 : index
    %c0_28 = arith.constant 0 : index
    %68 = vector.load %arg5[%c3, %c0_28] : memref<9x128xf32, #tpu.memory_space<vmem>>, vector<1x128xf32>
    %69 = vector.broadcast %68 : vector<1x128xf32> to vector<256x128xf32>
    %70 = arith.mulf %67, %69 : vector<256x128xf32>
    %71 = vector.broadcast %37 : vector<256x1xf32> to vector<256x128xf32>
    %72 = arith.mulf %70, %71 : vector<256x128xf32>
    %73 = arith.addf %66, %72 : vector<256x128xf32>
    %c4 = arith.constant 4 : index
    %c0_29 = arith.constant 0 : index
    %74 = vector.load %arg5[%c4, %c0_29] : memref<9x128xf32, #tpu.memory_space<vmem>>, vector<1x128xf32>
    %75 = vector.broadcast %74 : vector<1x128xf32> to vector<256x128xf32>
    %76 = arith.mulf %20, %75 : vector<256x128xf32>
    %77 = arith.addf %73, %76 : vector<256x128xf32>
    %c255_i32 = arith.constant 255 : i32
    %78 = tpu.dynamic_rotate %20 by %c255_i32 dim 0 : vector<256x128xf32>, i32 -> vector<256x128xf32>
    %c5 = arith.constant 5 : index
    %c0_30 = arith.constant 0 : index
    %79 = vector.load %arg5[%c5, %c0_30] : memref<9x128xf32, #tpu.memory_space<vmem>>, vector<1x128xf32>
    %80 = vector.broadcast %79 : vector<1x128xf32> to vector<256x128xf32>
    %81 = arith.mulf %78, %80 : vector<256x128xf32>
    %82 = vector.broadcast %42 : vector<256x1xf32> to vector<256x128xf32>
    %83 = arith.mulf %81, %82 : vector<256x128xf32>
    %84 = arith.addf %77, %83 : vector<256x128xf32>
    %c241_i32 = arith.constant 241 : i32
    %85 = tpu.dynamic_rotate %20 by %c241_i32 dim 0 : vector<256x128xf32>, i32 -> vector<256x128xf32>
    %c6 = arith.constant 6 : index
    %c0_31 = arith.constant 0 : index
    %86 = vector.load %arg5[%c6, %c0_31] : memref<9x128xf32, #tpu.memory_space<vmem>>, vector<1x128xf32>
    %87 = vector.broadcast %86 : vector<1x128xf32> to vector<256x128xf32>
    %88 = arith.mulf %85, %87 : vector<256x128xf32>
    %89 = arith.mulf %32, %37 : vector<256x1xf32>
    %90 = vector.broadcast %89 : vector<256x1xf32> to vector<256x128xf32>
    %91 = arith.mulf %88, %90 : vector<256x128xf32>
    %92 = arith.addf %84, %91 : vector<256x128xf32>
    %c240_i32_32 = arith.constant 240 : i32
    %93 = tpu.dynamic_rotate %20 by %c240_i32_32 dim 0 : vector<256x128xf32>, i32 -> vector<256x128xf32>
    %c7 = arith.constant 7 : index
    %c0_33 = arith.constant 0 : index
    %94 = vector.load %arg5[%c7, %c0_33] : memref<9x128xf32, #tpu.memory_space<vmem>>, vector<1x128xf32>
    %95 = vector.broadcast %94 : vector<1x128xf32> to vector<256x128xf32>
    %96 = arith.mulf %93, %95 : vector<256x128xf32>
    %97 = vector.broadcast %32 : vector<256x1xf32> to vector<256x128xf32>
    %98 = arith.mulf %96, %97 : vector<256x128xf32>
    %99 = arith.addf %92, %98 : vector<256x128xf32>
    %c239_i32 = arith.constant 239 : i32
    %100 = tpu.dynamic_rotate %20 by %c239_i32 dim 0 : vector<256x128xf32>, i32 -> vector<256x128xf32>
    %c8 = arith.constant 8 : index
    %c0_34 = arith.constant 0 : index
    %101 = vector.load %arg5[%c8, %c0_34] : memref<9x128xf32, #tpu.memory_space<vmem>>, vector<1x128xf32>
    %102 = vector.broadcast %101 : vector<1x128xf32> to vector<256x128xf32>
    %103 = arith.mulf %100, %102 : vector<256x128xf32>
    %104 = arith.mulf %32, %42 : vector<256x1xf32>
    %105 = vector.broadcast %104 : vector<256x1xf32> to vector<256x128xf32>
    %106 = arith.mulf %103, %105 : vector<256x128xf32>
    %107 = arith.addf %99, %106 : vector<256x128xf32>
    %c0_35 = arith.constant 0 : index
    %c0_36 = arith.constant 0 : index
    %108 = vector.load %arg6[%c0_35, %c0_36] : memref<1x128xf32, #tpu.memory_space<vmem>>, vector<1x128xf32>
    %109 = vector.broadcast %108 : vector<1x128xf32> to vector<256x128xf32>
    %110 = arith.addf %107, %109 : vector<256x128xf32>
    %cst_37 = arith.constant 5.000000e-01 : f32
    %111 = vector.broadcast %cst_37 : f32 to vector<256x128xf32>
    %112 = arith.mulf %111, %110 : vector<256x128xf32>
    %cst_38 = arith.constant 4.471500e-02 : f32
    %113 = vector.broadcast %cst_38 : f32 to vector<256x128xf32>
    %114 = arith.mulf %113, %110 : vector<256x128xf32>
    %115 = arith.mulf %114, %110 : vector<256x128xf32>
    %116 = arith.mulf %115, %110 : vector<256x128xf32>
    %117 = arith.addf %110, %116 : vector<256x128xf32>
    %cst_39 = arith.constant 0.797884583 : f32
    %118 = vector.broadcast %cst_39 : f32 to vector<256x128xf32>
    %119 = arith.mulf %118, %117 : vector<256x128xf32>
    %120 = math.tanh %119 : vector<256x128xf32>
    %cst_40 = arith.constant 1.000000e+00 : f32
    %121 = vector.broadcast %cst_40 : f32 to vector<256x128xf32>
    %122 = arith.addf %121, %120 : vector<256x128xf32>
    %123 = arith.mulf %112, %122 : vector<256x128xf32>
    %cst_41 = arith.constant dense<0.000000e+00> : vector<128xf32>
    %124 = vector.multi_reduction <add>, %123, %cst_41 [0] : vector<256x128xf32> to vector<128xf32>
    %125 = vector.shape_cast %124 : vector<128xf32> to vector<1x128xf32>
    %cst_42 = arith.constant 2.560000e+02 : f32
    %126 = vector.broadcast %cst_42 : f32 to vector<1x128xf32>
    %127 = arith.divf %125, %126 : vector<1x128xf32>
    %c0_43 = arith.constant 0 : index
    %c0_44 = arith.constant 0 : index
    %128 = vector.load %arg7[%c0_43, %c0_44] : memref<128x128xf32, #tpu.memory_space<vmem>>, vector<128x128xf32>
    %cst_45 = arith.constant dense<0.000000e+00> : vector<1x128xf32>
    %129 = tpu.matmul %127, %128, %cst_45 {dimension_numbers = #tpu.dot_dimension_numbers<[1], [0], [0], [1], [0, 0, 1, 1], [], []>} : vector<1x128xf32>, vector<128x128xf32>, vector<1x128xf32> -> vector<1x128xf32>
    %130 = arith.negf %129 : vector<1x128xf32>
    %131 = math.exp %130 : vector<1x128xf32>
    %cst_46 = arith.constant 1.000000e+00 : f32
    %132 = vector.broadcast %cst_46 : f32 to vector<1x128xf32>
    %133 = arith.addf %132, %131 : vector<1x128xf32>
    %134 = arith.divf %132, %133 : vector<1x128xf32>
    %135 = arith.mulf %129, %134 : vector<1x128xf32>
    %c0_47 = arith.constant 0 : index
    %c0_48 = arith.constant 0 : index
    %136 = vector.load %arg8[%c0_47, %c0_48] : memref<128x128xf32, #tpu.memory_space<vmem>>, vector<128x128xf32>
    %cst_49 = arith.constant dense<0.000000e+00> : vector<1x128xf32>
    %137 = tpu.matmul %135, %136, %cst_49 {dimension_numbers = #tpu.dot_dimension_numbers<[1], [0], [0], [1], [0, 0, 1, 1], [], []>} : vector<1x128xf32>, vector<128x128xf32>, vector<1x128xf32> -> vector<1x128xf32>
    %138 = arith.negf %137 : vector<1x128xf32>
    %139 = math.exp %138 : vector<1x128xf32>
    %cst_50 = arith.constant 1.000000e+00 : f32
    %140 = vector.broadcast %cst_50 : f32 to vector<1x128xf32>
    %141 = arith.addf %140, %139 : vector<1x128xf32>
    %142 = arith.divf %140, %141 : vector<1x128xf32>
    %143 = vector.broadcast %142 : vector<1x128xf32> to vector<256x128xf32>
    %144 = arith.mulf %123, %143 : vector<256x128xf32>
    %145 = arith.truncf %144 : vector<256x128xf32> to vector<256x128xbf16>
    %c0_51 = arith.constant 0 : index
    %c0_52 = arith.constant 0 : index
    %146 = vector.load %arg9[%c0_51, %c0_52] : memref<128x128xbf16, #tpu.memory_space<vmem>>, vector<128x128xbf16>
    %cst_53 = arith.constant dense<0.000000e+00> : vector<256x128xf32>
    %147 = tpu.matmul %145, %146, %cst_53 {dimension_numbers = #tpu.dot_dimension_numbers<[1], [0], [0], [1], [0, 0, 1, 1], [], []>} : vector<256x128xbf16>, vector<128x128xbf16>, vector<256x128xf32> -> vector<256x128xf32>
    %c0_54 = arith.constant 0 : index
    %c0_55 = arith.constant 0 : index
    %148 = vector.load %arg10[%c0_54, %c0_55] : memref<1x128xf32, #tpu.memory_space<vmem>>, vector<1x128xf32>
    %149 = vector.broadcast %148 : vector<1x128xf32> to vector<256x128xf32>
    %150 = arith.addf %147, %149 : vector<256x128xf32>
    %151 = arith.addf %150, %1 : vector<256x128xf32>
    %c0_56 = arith.constant 0 : index
    %c0_57 = arith.constant 0 : index
    %c0_58 = arith.constant 0 : index
    %152 = vector.load %arg11[%c0_56, %c0_57, %c0_58] : memref<1x256x128xf32, #tpu.memory_space<vmem>>, vector<1x256x128xf32>
    %153 = vector.shape_cast %152 : vector<1x256x128xf32> to vector<256x128xf32>
    %154 = vector.shape_cast %151 : vector<256x128xf32> to vector<1x256x128xf32>
    tpu.vector_store %arg11[%c0_56, %c0_57, %c0_58], %154 {strides = array<i32>} : memref<1x256x128xf32, #tpu.memory_space<vmem>>, vector<1x256x128xf32>,
    return
  }
  func.func @transform_0(%arg0: i32) -> (i32, i32, i32) {
    %c0_i32 = arith.constant 0 : i32
    %c0_i32_0 = arith.constant 0 : i32
    %c0_i32_1 = arith.constant 0 : i32
    return %arg0, %c0_i32, %c0_i32_0 : i32, i32, i32
  }
  func.func @transform_1(%arg0: i32) -> (i32, i32) {
    %c0_i32 = arith.constant 0 : i32
    %c0_i32_0 = arith.constant 0 : i32
    %c0_i32_1 = arith.constant 0 : i32
    return %c0_i32, %c0_i32_0 : i32, i32
  }
  func.func @transform_2(%arg0: i32) -> (i32, i32) {
    %c0_i32 = arith.constant 0 : i32
    %c0_i32_0 = arith.constant 0 : i32
    %c0_i32_1 = arith.constant 0 : i32
    return %c0_i32, %c0_i32_0 : i32, i32
  }
  func.func @transform_3(%arg0: i32) -> (i32, i32) {
    %c0_i32 = arith.constant 0 : i32
    %c0_i32_0 = arith.constant 0 : i32
    %c0_i32_1 = arith.constant 0 : i32
    return %c0_i32, %c0_i32_0 : i32, i32
  }
  func.func @transform_4(%arg0: i32) -> (i32, i32) {
    %c0_i32 = arith.constant 0 : i32
    %c0_i32_0 = arith.constant 0 : i32
    %c0_i32_1 = arith.constant 0 : i32
    return %c0_i32, %c0_i32_0 : i32, i32
  }
  func.func @transform_5(%arg0: i32) -> (i32, i32) {
    %c0_i32 = arith.constant 0 : i32
    %c0_i32_0 = arith.constant 0 : i32
    %c0_i32_1 = arith.constant 0 : i32
    return %c0_i32, %c0_i32_0 : i32, i32
  }
  func.func @transform_6(%arg0: i32) -> (i32, i32) {
    %c0_i32 = arith.constant 0 : i32
    %c0_i32_0 = arith.constant 0 : i32
    %c0_i32_1 = arith.constant 0 : i32
    return %c0_i32, %c0_i32_0 : i32, i32
  }
  func.func @transform_7(%arg0: i32) -> (i32, i32) {
    %c0_i32 = arith.constant 0 : i32
    %c0_i32_0 = arith.constant 0 : i32
    %c0_i32_1 = arith.constant 0 : i32
    return %c0_i32, %c0_i32_0 : i32, i32
  }
  func.func @transform_8(%arg0: i32) -> (i32, i32) {
    %c0_i32 = arith.constant 0 : i32
    %c0_i32_0 = arith.constant 0 : i32
    %c0_i32_1 = arith.constant 0 : i32
    return %c0_i32, %c0_i32_0 : i32, i32
  }
  func.func @transform_9(%arg0: i32) -> (i32, i32) {
    %c0_i32 = arith.constant 0 : i32
    %c0_i32_0 = arith.constant 0 : i32
    %c0_i32_1 = arith.constant 0 : i32
    return %c0_i32, %c0_i32_0 : i32, i32
  }
  func.func @transform_10(%arg0: i32) -> (i32, i32, i32) {
    %c0_i32 = arith.constant 0 : i32
    %c0_i32_0 = arith.constant 0 : i32
    %c0_i32_1 = arith.constant 0 : i32
    return %arg0, %c0_i32, %c0_i32_0 : i32, i32, i32
  }
}

</mosaic_0001>

<llo_original>
// kernel: tpu_custom_call.1
$region0: #{tpu_custom_call.1}
  #allocation0 [shape = 'u32[]', space=smem, size = 0x4, offset = 0x4, fixed_abs, tag = 'smem constant byte address 0x4 - core index']
  #allocation1 [shape = 'u32[144,128]{1,0:T(1,128)}', space=vmem, size = 0x12000, scoped, tag = 'internal scratch']
  %s0 = inlined_call_operand.hbm [shape: f32[2,256,128], index: 0, kind: input, shape index: {}]
  %s1 = inlined_call_operand.vmem [shape: s32[256,1], index: 1, kind: input, shape index: {}]
  %s2 = inlined_call_operand.hbm [shape: bf16[128,128], index: 2, kind: input, shape index: {}]
  %s3 = inlined_call_operand.vmem [shape: f32[1,128], index: 3, kind: input, shape index: {}]
  %s4 = inlined_call_operand.vmem [shape: f32[9,128], index: 4, kind: input, shape index: {}]
  %s5 = inlined_call_operand.vmem [shape: f32[1,128], index: 5, kind: input, shape index: {}]
  %s6 = inlined_call_operand.vmem [shape: f32[128,128], index: 6, kind: input, shape index: {}]
  %s7 = inlined_call_operand.vmem [shape: f32[128,128], index: 7, kind: input, shape index: {}]
  %s8 = inlined_call_operand.hbm [shape: bf16[128,128], index: 8, kind: input, shape index: {}]
  %s9 = inlined_call_operand.vmem [shape: f32[1,128], index: 9, kind: input, shape index: {}]
  %s10 = inlined_call_operand.hbm [shape: f32[2,256,128], index: 10, kind: output, shape index: {}]
  %s11 = sld [smem:[#allocation0]]
  $region85: #{tpu_custom_call.1} parent=0
    _
  %s13 = ssub.s32 1, %s11
  %s14 = scalar_select 0, %s13, %s11
  $region1: #{tpu_custom_call.1} parent=0
    #allocation2 [shape = 'u8[262144]{0}', space=vmem, size = 0x40000, scoped, tag = 'input window, operand 0']
    #allocation3 [shape = 's32[2]{0}', space=sflag, size = 0x8, scoped, tag = 'scoped memory for tpu_custom_call.1']
    #allocation4 [shape = 's32[2]{0}', space=sflag, size = 0x8, scoped, tag = 'scoped memory for tpu_custom_call.1']
    #allocation5 [shape = 'u8[32768]{0}', space=vmem, size = 0x8000, scoped, tag = 'input window, operand 2, single buffered']
    #allocation6 [shape = 's32[1]{0}', space=sflag, size = 0x4, scoped, tag = 'scoped memory for tpu_custom_call.1']
    #allocation7 [shape = 'u8[32768]{0}', space=vmem, size = 0x8000, scoped, tag = 'input window, operand 8, single buffered']
    #allocation8 [shape = 'u8[262144]{0}', space=vmem, size = 0x40000, scoped, tag = 'output window, operand 0']
    %15 = vsyncpa [#allocation3], 0
    %s16 = scalar_lea.sflag [#allocation3], 1
    %17 = vsyncpa %s16, 0
    %18 = vsyncpa [#allocation6], 0
    %19 = vsyncpa [#allocation4], 0
    %s20 = scalar_lea.sflag [#allocation4], 1
    %21 = vsyncpa %s20, 0
    loop: start=0, step=1, limit=4
    $region2: #{tpu_custom_call.1} parent=1 // loop_pre_header
      _
    $region3: #{tpu_custom_call.1} parent=1 // loop_header
      %s23 = sphi 0, %s27
      %p24 = scmp.ge.s32.totalorder %s23, 4
      %s33 = sphi 0, %s35
      %s36 = sphi 0, %s33
      %s37 = sphi 0, %s36
      %s53 = sphi 0, %s37
      %s57 = sphi 0, %s57
      %s59 = sphi 0, %s57
      %s60 = sphi 0, %s59
      %s74 = sphi 0, %s60
      %s78 = sphi 0, %s78
      %s80 = sphi 0, %s78
      %s81 = sphi 0, %s80
      %s95 = sphi 0, %s81
      %s99 = sphi 0, %s99
      %s101 = sphi 0, %s99
      %s102 = sphi 0, %s101
      %s116 = sphi 0, %s102
      %s120 = sphi 0, %s120
      %s122 = sphi 0, %s120
      %s123 = sphi 0, %s122
      %s137 = sphi 0, %s123
      %s141 = sphi 0, %s141
      %s143 = sphi 0, %s141
      %s144 = sphi 0, %s143
      %s158 = sphi 0, %s144
      %s162 = sphi 0, %s162
      %s164 = sphi 0, %s162
      %s165 = sphi 0, %s164
      %s179 = sphi 0, %s165
      %s183 = sphi 0, %s183
      %s185 = sphi 0, %s183
      %s186 = sphi 0, %s185
      %s200 = sphi 0, %s186
      %s204 = sphi 0, %s204
      %s206 = sphi 0, %s204
      %s207 = sphi 0, %s206
      %s221 = sphi 0, %s207
      %s225 = sphi 0, %s225
      %s227 = sphi 0, %s225
      %s228 = sphi 0, %s227
      %s242 = sphi 0, %s228
      %s248 = sphi 0, %s250
      %s251 = sphi 0, %s248
      %s252 = sphi 0, %s251
      %s268 = sphi 0, %s252
    $region4: #{tpu_custom_call.1} parent=1 // loop_header_branch
      %26 = sbr.rel (%p24) target = $region8
    $region5: #{tpu_custom_call.1} parent=1 // loop_body
      %s28 = ssub.s32 %s23, 1
      %s29 = ssub.s32 %s23, 2
      %s30 = sadd.s32 %s23, 1
      %s31 = ssub.s32 %s23, %s30
      %p32 = scmp.eq.s32.totalorder %s31, 0
      %s34 = sadd.s32 %s33, 1
      %s35 = scalar_select %p32, %s33, %s34
      %p38 = pneg %p32
      %p39 = scmp.eq.s32.totalorder %s23, 1
      %p40 = por %p38, %p39
      %p41 = scmp.ne.s32.totalorder %s33, %s36
      %p42 = scmp.eq.s32.totalorder %s23, 0
      %p43 = por %p41, %p42
      %p44 = scmp.ne.s32.totalorder %s33, %s36
      %p45 = scmp.eq.s32.totalorder %s28, 1
      %p46 = por %p44, %p45
      %p47 = scmp.ne.s32.totalorder %s36, %s37
      %p48 = scmp.eq.s32.totalorder %s28, 0
      %p49 = por %p47, %p48
      %p50 = scmp.ne.s32.totalorder %s36, %s37
      %p51 = scmp.eq.s32.totalorder %s29, 1
      %p52 = por %p50, %p51
      %p54 = scmp.ne.s32.totalorder %s37, %s53
      %p55 = scmp.eq.s32.totalorder %s29, 0
      %p56 = por %p54, %p55
      %s58 = sadd.s32 %s57, 1
      %p61 = scmp.eq.s32.totalorder %s23, 1
      %p62 = scmp.ne.s32.totalorder %s57, %s59
      %p63 = scmp.eq.s32.totalorder %s23, 0
      %p64 = por %p62, %p63
      %p65 = scmp.ne.s32.totalorder %s57, %s59
      %p66 = scmp.eq.s32.totalorder %s28, 1
      %p67 = por %p65, %p66
      %p68 = scmp.ne.s32.totalorder %s59, %s60
      %p69 = scmp.eq.s32.totalorder %s28, 0
      %p70 = por %p68, %p69
      %p71 = scmp.ne.s32.totalorder %s59, %s60
      %p72 = scmp.eq.s32.totalorder %s29, 1
      %p73 = por %p71, %p72
      %p75 = scmp.ne.s32.totalorder %s60, %s74
      %p76 = scmp.eq.s32.totalorder %s29, 0
      %p77 = por %p75, %p76
      %s79 = sadd.s32 %s78, 1
      %p82 = scmp.eq.s32.totalorder %s23, 1
      %p83 = scmp.ne.s32.totalorder %s78, %s80
      %p84 = scmp.eq.s32.totalorder %s23, 0
      %p85 = por %p83, %p84
      %p86 = scmp.ne.s32.totalorder %s78, %s80
      %p87 = scmp.eq.s32.totalorder %s28, 1
      %p88 = por %p86, %p87
      %p89 = scmp.ne.s32.totalorder %s80, %s81
      %p90 = scmp.eq.s32.totalorder %s28, 0
      %p91 = por %p89, %p90
      %p92 = scmp.ne.s32.totalorder %s80, %s81
      %p93 = scmp.eq.s32.totalorder %s29, 1
      %p94 = por %p92, %p93
      %p96 = scmp.ne.s32.totalorder %s81, %s95
      %p97 = scmp.eq.s32.totalorder %s29, 0
      %p98 = por %p96, %p97
      %s100 = sadd.s32 %s99, 1
      %p103 = scmp.eq.s32.totalorder %s23, 1
      %p104 = scmp.ne.s32.totalorder %s99, %s101
      %p105 = scmp.eq.s32.totalorder %s23, 0
      %p106 = por %p104, %p105
      %p107 = scmp.ne.s32.totalorder %s99, %s101
      %p108 = scmp.eq.s32.totalorder %s28, 1
      %p109 = por %p107, %p108
      %p110 = scmp.ne.s32.totalorder %s101, %s102
      %p111 = scmp.eq.s32.totalorder %s28, 0
      %p112 = por %p110, %p111
      %p113 = scmp.ne.s32.totalorder %s101, %s102
      %p114 = scmp.eq.s32.totalorder %s29, 1
      %p115 = por %p113, %p114
      %p117 = scmp.ne.s32.totalorder %s102, %s116
      %p118 = scmp.eq.s32.totalorder %s29, 0
      %p119 = por %p117, %p118
      %s121 = sadd.s32 %s120, 1
      %p124 = scmp.eq.s32.totalorder %s23, 1
      %p125 = scmp.ne.s32.totalorder %s120, %s122
      %p126 = scmp.eq.s32.totalorder %s23, 0
      %p127 = por %p125, %p126
      %p128 = scmp.ne.s32.totalorder %s120, %s122
      %p129 = scmp.eq.s32.totalorder %s28, 1
      %p130 = por %p128, %p129
      %p131 = scmp.ne.s32.totalorder %s122, %s123
      %p132 = scmp.eq.s32.totalorder %s28, 0
      %p133 = por %p131, %p132
      %p134 = scmp.ne.s32.totalorder %s122, %s123
      %p135 = scmp.eq.s32.totalorder %s29, 1
      %p136 = por %p134, %p135
      %p138 = scmp.ne.s32.totalorder %s123, %s137
      %p139 = scmp.eq.s32.totalorder %s29, 0
      %p140 = por %p138, %p139
      %s142 = sadd.s32 %s141, 1
      %p145 = scmp.eq.s32.totalorder %s23, 1
      %p146 = scmp.ne.s32.totalorder %s141, %s143
      %p147 = scmp.eq.s32.totalorder %s23, 0
      %p148 = por %p146, %p147
      %p149 = scmp.ne.s32.totalorder %s141, %s143
      %p150 = scmp.eq.s32.totalorder %s28, 1
      %p151 = por %p149, %p150
      %p152 = scmp.ne.s32.totalorder %s143, %s144
      %p153 = scmp.eq.s32.totalorder %s28, 0
      %p154 = por %p152, %p153
      %p155 = scmp.ne.s32.totalorder %s143, %s144
      %p156 = scmp.eq.s32.totalorder %s29, 1
      %p157 = por %p155, %p156
      %p159 = scmp.ne.s32.totalorder %s144, %s158
      %p160 = scmp.eq.s32.totalorder %s29, 0
      %p161 = por %p159, %p160
      %s163 = sadd.s32 %s162, 1
      %p166 = scmp.eq.s32.totalorder %s23, 1
      %p167 = scmp.ne.s32.totalorder %s162, %s164
      %p168 = scmp.eq.s32.totalorder %s23, 0
      %p169 = por %p167, %p168
      %p170 = scmp.ne.s32.totalorder %s162, %s164
      %p171 = scmp.eq.s32.totalorder %s28, 1
      %p172 = por %p170, %p171
      %p173 = scmp.ne.s32.totalorder %s164, %s165
      %p174 = scmp.eq.s32.totalorder %s28, 0
      %p175 = por %p173, %p174
      %p176 = scmp.ne.s32.totalorder %s164, %s165
      %p177 = scmp.eq.s32.totalorder %s29, 1
      %p178 = por %p176, %p177
      %p180 = scmp.ne.s32.totalorder %s165, %s179
      %p181 = scmp.eq.s32.totalorder %s29, 0
      %p182 = por %p180, %p181
      %s184 = sadd.s32 %s183, 1
      %p187 = scmp.eq.s32.totalorder %s23, 1
      %p188 = scmp.ne.s32.totalorder %s183, %s185
      %p189 = scmp.eq.s32.totalorder %s23, 0
      %p190 = por %p188, %p189
      %p191 = scmp.ne.s32.totalorder %s183, %s185
      %p192 = scmp.eq.s32.totalorder %s28, 1
      %p193 = por %p191, %p192
      %p194 = scmp.ne.s32.totalorder %s185, %s186
      %p195 = scmp.eq.s32.totalorder %s28, 0
      %p196 = por %p194, %p195
      %p197 = scmp.ne.s32.totalorder %s185, %s186
      %p198 = scmp.eq.s32.totalorder %s29, 1
      %p199 = por %p197, %p198
      %p201 = scmp.ne.s32.totalorder %s186, %s200
      %p202 = scmp.eq.s32.totalorder %s29, 0
      %p203 = por %p201, %p202
      %s205 = sadd.s32 %s204, 1
      %p208 = scmp.eq.s32.totalorder %s23, 1
      %p209 = scmp.ne.s32.totalorder %s204, %s206
      %p210 = scmp.eq.s32.totalorder %s23, 0
      %p211 = por %p209, %p210
      %p212 = scmp.ne.s32.totalorder %s204, %s206
      %p213 = scmp.eq.s32.totalorder %s28, 1
      %p214 = por %p212, %p213
      %p215 = scmp.ne.s32.totalorder %s206, %s207
      %p216 = scmp.eq.s32.totalorder %s28, 0
      %p217 = por %p215, %p216
      %p218 = scmp.ne.s32.totalorder %s206, %s207
      %p219 = scmp.eq.s32.totalorder %s29, 1
      %p220 = por %p218, %p219
      %p222 = scmp.ne.s32.totalorder %s207, %s221
      %p223 = scmp.eq.s32.totalorder %s29, 0
      %p224 = por %p222, %p223
      %s226 = sadd.s32 %s225, 1
      %p229 = scmp.eq.s32.totalorder %s23, 1
      %p230 = scmp.ne.s32.totalorder %s225, %s227
      %p231 = scmp.eq.s32.totalorder %s23, 0
      %p232 = por %p230, %p231
      %p233 = scmp.ne.s32.totalorder %s225, %s227
      %p234 = scmp.eq.s32.totalorder %s28, 1
      %p235 = por %p233, %p234
      %p236 = scmp.ne.s32.totalorder %s227, %s228
      %p237 = scmp.eq.s32.totalorder %s28, 0
      %p238 = por %p236, %p237
      %p239 = scmp.ne.s32.totalorder %s227, %s228
      %p240 = scmp.eq.s32.totalorder %s29, 1
      %p241 = por %p239, %p240
      %p243 = scmp.ne.s32.totalorder %s228, %s242
      %p244 = scmp.eq.s32.totalorder %s29, 0
      %p245 = por %p243, %p244
      %s246 = ssub.s32 %s23, %s30
      %p247 = scmp.eq.s32.totalorder %s246, 0
      %s249 = sadd.s32 %s248, 1
      %s250 = scalar_select %p247, %s248, %s249
      %p253 = pneg %p247
      %p254 = scmp.eq.s32.totalorder %s23, 1
      %p255 = por %p253, %p254
      %p256 = scmp.ne.s32.totalorder %s248, %s251
      %p257 = scmp.eq.s32.totalorder %s23, 0
      %p258 = por %p256, %p257
      %p259 = scmp.ne.s32.totalorder %s248, %s251
      %p260 = scmp.eq.s32.totalorder %s28, 1
      %p261 = por %p259, %p260
      %p262 = scmp.ne.s32.totalorder %s251, %s252
      %p263 = scmp.eq.s32.totalorder %s28, 0
      %p264 = por %p262, %p263
      %p265 = scmp.ne.s32.totalorder %s251, %s252
      %p266 = scmp.eq.s32.totalorder %s29, 1
      %p267 = por %p265, %p266
      %p269 = scmp.ne.s32.totalorder %s252, %s268
      %p270 = scmp.eq.s32.totalorder %s29, 0
      %p271 = por %p269, %p270
      %p272 = scmp.le.s32.totalorder 1, %s23
      %p273 = scmp.lt.s32.totalorder %s23, 3
      %p274 = pnand %p272, %p273
      %p275 = pneg %p274
      // Predicated region
      $region9: #{tpu_custom_call.1} parent=5 // pred_check
        _
      $region10: #{tpu_custom_call.1} parent=5 // pred_check_branch
        %277 = sbr.rel (%p274) target = $region12
      $region11: #{tpu_custom_call.1} parent=5 // pred_region
        %s278 = ssub.s32 %s23, 1
        // Predicated region
        $region13: #{tpu_custom_call.1} parent=11 // pred_check
          %p279 = pneg %p70
        $region14: #{tpu_custom_call.1} parent=11 // pred_check_branch
          %281 = sbr.rel (%p279) target = $region16
        $region15: #{tpu_custom_call.1} parent=11 // pred_region
          _
        $region16: #{tpu_custom_call.1} parent=11 // pred_fallthru
          _
        // Predicated region
        $region17: #{tpu_custom_call.1} parent=11 // pred_check
          %p282 = pneg %p91
        $region18: #{tpu_custom_call.1} parent=11 // pred_check_branch
          %284 = sbr.rel (%p282) target = $region20
        $region19: #{tpu_custom_call.1} parent=11 // pred_region
          %s286 = ssub.s32 1024, 1024
          %287 = vsyncadd [#allocation6], %s286
          %s288 = sshll.u32 [#allocation5], 4
          %s289 = int_to_ptr.vmem [resolvable:$true] %s288
          %294 = dma.hbm_to_vmem [thread:$0]  %s2, 1024, %s289, [#allocation6], 64, 64, 4
        $region20: #{tpu_custom_call.1} parent=11 // pred_fallthru
          _
        // Predicated region
        $region21: #{tpu_custom_call.1} parent=11 // pred_check
          %p295 = pneg %p112
        $region22: #{tpu_custom_call.1} parent=11 // pred_check_branch
          %297 = sbr.rel (%p295) target = $region24
        $region23: #{tpu_custom_call.1} parent=11 // pred_region
          _
        $region24: #{tpu_custom_call.1} parent=11 // pred_fallthru
          _
        // Predicated region
        $region25: #{tpu_custom_call.1} parent=11 // pred_check
          %p298 = pneg %p133
        $region26: #{tpu_custom_call.1} parent=11 // pred_check_branch
          %300 = sbr.rel (%p298) target = $region28
        $region27: #{tpu_custom_call.1} parent=11 // pred_region
          _
        $region28: #{tpu_custom_call.1} parent=11 // pred_fallthru
          _
        // Predicated region
        $region29: #{tpu_custom_call.1} parent=11 // pred_check
          %p301 = pneg %p154
        $region30: #{tpu_custom_call.1} parent=11 // pred_check_branch
          %303 = sbr.rel (%p301) target = $region32
        $region31: #{tpu_custom_call.1} parent=11 // pred_region
          _
        $region32: #{tpu_custom_call.1} parent=11 // pred_fallthru
          _
        // Predicated region
        $region33: #{tpu_custom_call.1} parent=11 // pred_check
          %p304 = pneg %p175
        $region34: #{tpu_custom_call.1} parent=11 // pred_check_branch
          %306 = sbr.rel (%p304) target = $region36
        $region35: #{tpu_custom_call.1} parent=11 // pred_region
          _
        $region36: #{tpu_custom_call.1} parent=11 // pred_fallthru
          _
        // Predicated region
        $region37: #{tpu_custom_call.1} parent=11 // pred_check
          %p307 = pneg %p196
        $region38: #{tpu_custom_call.1} parent=11 // pred_check_branch
          %309 = sbr.rel (%p307) target = $region40
        $region39: #{tpu_custom_call.1} parent=11 // pred_region
          _
        $region40: #{tpu_custom_call.1} parent=11 // pred_fallthru
          _
        // Predicated region
        $region41: #{tpu_custom_call.1} parent=11 // pred_check
          %p310 = pneg %p217
        $region42: #{tpu_custom_call.1} parent=11 // pred_check_branch
          %312 = sbr.rel (%p310) target = $region44
        $region43: #{tpu_custom_call.1} parent=11 // pred_region
          %s314 = ssub.s32 1024, 1024
          %315 = vsyncadd [#allocation6], %s314
          %s316 = sshll.u32 [#allocation7], 4
          %s317 = int_to_ptr.vmem [resolvable:$true] %s316
          %322 = dma.hbm_to_vmem [thread:$0]  %s8, 1024, %s317, [#allocation6], 64, 64, 4
        $region44: #{tpu_custom_call.1} parent=11 // pred_fallthru
          _
        // Predicated region
        $region45: #{tpu_custom_call.1} parent=11 // pred_check
          %p323 = pneg %p238
        $region46: #{tpu_custom_call.1} parent=11 // pred_check_branch
          %325 = sbr.rel (%p323) target = $region48
        $region47: #{tpu_custom_call.1} parent=11 // pred_region
          _
        $region48: #{tpu_custom_call.1} parent=11 // pred_fallthru
          _
      $region12: #{tpu_custom_call.1} parent=5 // pred_fallthru
        _
      %p326 = scmp.lt.s32.totalorder %s23, 2
      // Predicated region
      $region49: #{tpu_custom_call.1} parent=5 // pred_check
        %p327 = pneg %p326
      $region50: #{tpu_custom_call.1} parent=5 // pred_check_branch
        %329 = sbr.rel (%p327) target = $region52
      $region51: #{tpu_custom_call.1} parent=5 // pred_region
        // Predicated region
        $region53: #{tpu_custom_call.1} parent=51 // pred_check
          %p330 = pneg %p43
        $region54: #{tpu_custom_call.1} parent=51 // pred_check_branch
          %332 = sbr.rel (%p330) target = $region56
        $region55: #{tpu_custom_call.1} parent=51 // pred_region
          %s333 = sand.u32 %s33, 1
          %s334 = scalar_lea.sflag [#allocation3], %s333
          %s335 = sand.u32 %s33, 1
          %s336 = smul.addr %s335, 256
          %s337 = scalar_lea.vmem [#allocation2], %s336
          %s339 = ssub.s32 4096, 4096
          %340 = vsyncadd %s334, %s339
          %s341 = smul.addr %s23, 32
          %s342 = smul.addr %s341, 128
          %s343 = scalar_lea.hbm %s0, %s342
          %s344 = sshll.u32 %s337, 4
          %s345 = int_to_ptr.vmem [resolvable:$true] %s344
          %350 = dma.hbm_to_vmem [thread:$0]  %s343, 4096, %s345, %s334, 128, 128, 8
        $region56: #{tpu_custom_call.1} parent=51 // pred_fallthru
          _
      $region52: #{tpu_custom_call.1} parent=5 // pred_fallthru
        _
      %p351 = scmp.le.s32.totalorder 1, %s23
      %p352 = scmp.lt.s32.totalorder %s23, 3
      %p353 = pnand %p351, %p352
      %p354 = pneg %p353
      // Predicated region
      $region57: #{tpu_custom_call.1} parent=5 // pred_check
        _
      $region58: #{tpu_custom_call.1} parent=5 // pred_check_branch
        %356 = sbr.rel (%p353) target = $region60
      $region59: #{tpu_custom_call.1} parent=5 // pred_region
        %s357 = ssub.s32 %s23, 1
        %s358 = sand.u32 %s36, 1
        %s359 = scalar_lea.sflag [#allocation3], %s358
        %s360 = sand.u32 %s36, 1
        %s361 = smul.addr %s360, 256
        %s362 = scalar_lea.vmem [#allocation2], %s361
        // Predicated region
        $region61: #{tpu_custom_call.1} parent=59 // pred_check
          %p363 = pneg %p49
        $region62: #{tpu_custom_call.1} parent=59 // pred_check_branch
          %365 = sbr.rel (%p363) target = $region64
        $region63: #{tpu_custom_call.1} parent=59 // pred_region
          %366 = dma.done %s359, 4096
        $region64: #{tpu_custom_call.1} parent=59 // pred_fallthru
          _
        // Predicated region
        $region65: #{tpu_custom_call.1} parent=59 // pred_check
          %p367 = pneg %p91
        $region66: #{tpu_custom_call.1} parent=59 // pred_check_branch
          %369 = sbr.rel (%p367) target = $region68
        $region67: #{tpu_custom_call.1} parent=59 // pred_region
          %370 = dma.done [#allocation6], 1024
        $region68: #{tpu_custom_call.1} parent=59 // pred_fallthru
          _
        // Predicated region
        $region69: #{tpu_custom_call.1} parent=59 // pred_check
          %p371 = pneg %p217
        $region70: #{tpu_custom_call.1} parent=59 // pred_check_branch
          %373 = sbr.rel (%p371) target = $region72
        $region71: #{tpu_custom_call.1} parent=59 // pred_region
          %374 = dma.done [#allocation6], 1024
        $region72: #{tpu_custom_call.1} parent=59 // pred_fallthru
          _
        %s375 = sand.u32 %s36, 1
        %s376 = scalar_lea.sflag [#allocation3], %s375
        %s377 = sand.u32 %s36, 1
        %s378 = smul.addr %s377, 256
        %s379 = scalar_lea.vmem [#allocation2], %s378
        %p380 = pneg %p49
        %p381 = pneg %p46
        %p382 = pneg %p70
        %p383 = pneg %p67
        %p384 = pneg %p91
        %p385 = pneg %p88
        %p386 = pneg %p112
        %p387 = pneg %p109
        %p388 = pneg %p133
        %p389 = pneg %p130
        %p390 = pneg %p154
        %p391 = pneg %p151
        %p392 = pneg %p175
        %p393 = pneg %p172
        %p394 = pneg %p196
        %p395 = pneg %p193
        %p396 = pneg %p217
        %p397 = pneg %p214
        %p398 = pneg %p238
        %p399 = pneg %p235
        %p400 = pneg %p264
        %p401 = pneg %p261
        %s402 = sand.u32 %s251, 1
        %s403 = scalar_lea.sflag [#allocation4], %s402
        %s404 = sand.u32 %s251, 1
        %s405 = smul.addr %s404, 256
        %s406 = scalar_lea.vmem [#allocation8], %s405
        %v408 = vld [vmem:[%s362] sm:$0xff]
        %v409 = vld [vmem:[%s362 + $0x8] sm:$0xff]
        %v410 = vld [vmem:[%s362 + $0x10] sm:$0xff]
        %v411 = vld [vmem:[%s362 + $0x18] sm:$0xff]
        %v412 = vld [vmem:[%s362 + $0x20] sm:$0xff]
        %v413 = vld [vmem:[%s362 + $0x28] sm:$0xff]
        %v414 = vld [vmem:[%s362 + $0x30] sm:$0xff]
        %v415 = vld [vmem:[%s362 + $0x38] sm:$0xff]
        %v416 = vld [vmem:[%s362 + $0x40] sm:$0xff]
        %v417 = vld [vmem:[%s362 + $0x48] sm:$0xff]
        %v418 = vld [vmem:[%s362 + $0x50] sm:$0xff]
        %v419 = vld [vmem:[%s362 + $0x58] sm:$0xff]
        %v420 = vld [vmem:[%s362 + $0x60] sm:$0xff]
        %v421 = vld [vmem:[%s362 + $0x68] sm:$0xff]
        %v422 = vld [vmem:[%s362 + $0x70] sm:$0xff]
        %v423 = vld [vmem:[%s362 + $0x78] sm:$0xff]
        %v424 = vld [vmem:[%s362 + $0x80] sm:$0xff]
        %v425 = vld [vmem:[%s362 + $0x88] sm:$0xff]
        %v426 = vld [vmem:[%s362 + $0x90] sm:$0xff]
        %v427 = vld [vmem:[%s362 + $0x98] sm:$0xff]
        %v428 = vld [vmem:[%s362 + $0xa0] sm:$0xff]
        %v429 = vld [vmem:[%s362 + $0xa8] sm:$0xff]
        %v430 = vld [vmem:[%s362 + $0xb0] sm:$0xff]
        %v431 = vld [vmem:[%s362 + $0xb8] sm:$0xff]
        %v432 = vld [vmem:[%s362 + $0xc0] sm:$0xff]
        %v433 = vld [vmem:[%s362 + $0xc8] sm:$0xff]
        %v434 = vld [vmem:[%s362 + $0xd0] sm:$0xff]
        %v435 = vld [vmem:[%s362 + $0xd8] sm:$0xff]
        %v436 = vld [vmem:[%s362 + $0xe0] sm:$0xff]
        %v437 = vld [vmem:[%s362 + $0xe8] sm:$0xff]
        %v438 = vld [vmem:[%s362 + $0xf0] sm:$0xff]
        %v439 = vld [vmem:[%s362 + $0xf8] sm:$0xff]
        %v440 = vpack.c.bf16 %v409, %v408
        %v441 = vpack.c.bf16 %v411, %v410
        %v442 = vpack.c.bf16 %v413, %v412
        %v443 = vpack.c.bf16 %v415, %v414
        %v444 = vpack.c.bf16 %v417, %v416
        %v445 = vpack.c.bf16 %v419, %v418
        %v446 = vpack.c.bf16 %v421, %v420
        %v447 = vpack.c.bf16 %v423, %v422
        %v448 = vpack.c.bf16 %v425, %v424
        %v449 = vpack.c.bf16 %v427, %v426
        %v450 = vpack.c.bf16 %v429, %v428
        %v451 = vpack.c.bf16 %v431, %v430
        %v452 = vpack.c.bf16 %v433, %v432
        %v453 = vpack.c.bf16 %v435, %v434
        %v454 = vpack.c.bf16 %v437, %v436
        %v455 = vpack.c.bf16 %v439, %v438
        %v456 = vld [vmem:[#allocation5] sm:$0xf]
        %v457 = vld [vmem:[#allocation5 + $0x4] sm:$0xf]
        %v458 = vld [vmem:[#allocation5 + $0x8] sm:$0xf]
        %v459 = vld [vmem:[#allocation5 + $0xc] sm:$0xf]
        %v460 = vld [vmem:[#allocation5 + $0x10] sm:$0xf]
        %v461 = vld [vmem:[#allocation5 + $0x14] sm:$0xf]
        %v462 = vld [vmem:[#allocation5 + $0x18] sm:$0xf]
        %v463 = vld [vmem:[#allocation5 + $0x1c] sm:$0xf]
        %v464 = vld [vmem:[#allocation5 + $0x20] sm:$0xf]
        %v465 = vld [vmem:[#allocation5 + $0x24] sm:$0xf]
        %v466 = vld [vmem:[#allocation5 + $0x28] sm:$0xf]
        %v467 = vld [vmem:[#allocation5 + $0x2c] sm:$0xf]
        %v468 = vld [vmem:[#allocation5 + $0x30] sm:$0xf]
        %v469 = vld [vmem:[#allocation5 + $0x34] sm:$0xf]
        %v470 = vld [vmem:[#allocation5 + $0x38] sm:$0xf]
        %v471 = vld [vmem:[#allocation5 + $0x3c] sm:$0xf]
        %v472 = vld [vmem:[%s3] sm:$0x1]
        %v474 = vlaneseq
        %v475 = vshrl.u32 %v474, 7
        %v476 = vsub.s32 0, %v475
        %v477 = vrot.slane %v472, %v476
        %v495 = vunpack.c.l.b16 %v456
        %v496 = vunpack.c.l.b16 %v457
        %v497 = vunpack.c.l.b16 %v458
        %v498 = vunpack.c.l.b16 %v459
        %v499 = vunpack.c.l.b16 %v460
        %v500 = vunpack.c.l.b16 %v461
        %v501 = vunpack.c.l.b16 %v462
        %v502 = vunpack.c.l.b16 %v463
        %v503 = vunpack.c.l.b16 %v464
        %v504 = vunpack.c.l.b16 %v465
        %v505 = vunpack.c.l.b16 %v466
        %v506 = vunpack.c.l.b16 %v467
        %v507 = vunpack.c.l.b16 %v468
        %v508 = vunpack.c.l.b16 %v469
        %v509 = vunpack.c.l.b16 %v470
        %v510 = vunpack.c.l.b16 %v471
        %v511 = vpack.c.b16 %v496, %v495
        %v512 = vpack.c.b16 %v498, %v497
        %v513 = vpack.c.b16 %v500, %v499
        %v514 = vpack.c.b16 %v502, %v501
        %v515 = vpack.c.b16 %v504, %v503
        %v516 = vpack.c.b16 %v506, %v505
        %v517 = vpack.c.b16 %v508, %v507
        %v518 = vpack.c.b16 %v510, %v509
        %527 = vmatprep.subr.bf16.mxu0 0
        %528 = vmatpush1.bf16.msra.mxu0 %v511
        %529 = vmatprep.subr.bf16.mxu0 0
        %530 = vmatpush1.bf16.msra.mxu0 %v512
        %531 = vmatprep.subr.bf16.mxu0 0
        %532 = vmatpush1.bf16.msra.mxu0 %v513
        %533 = vmatprep.subr.bf16.mxu0 0
        %534 = vmatpush1.bf16.msra.mxu0 %v514
        %535 = vmatprep.subr.bf16.mxu0 0
        %536 = vmatpush1.bf16.msra.mxu0 %v515
        %537 = vmatprep.subr.bf16.mxu0 0
        %538 = vmatpush1.bf16.msra.mxu0 %v516
        %539 = vmatprep.subr.bf16.mxu0 0
        %540 = vmatpush1.bf16.msra.mxu0 %v517
        %541 = vmatprep.subr.bf16.mxu0 0
        %542 = vmatpush1.bf16.msra.mxu0 %v518
        %543 = vmatprep.subr.bf16.mxu0 0
        %544 = vmatpush1.bf16.msra.mxu0 0
        %545 = vmatprep.subr.bf16.mxu0 0
        %546 = vmatpush1.bf16.msra.mxu0 0
        %547 = vmatprep.subr.bf16.mxu0 0
        %548 = vmatpush1.bf16.msra.mxu0 0
        %549 = vmatprep.subr.bf16.mxu0 0
        %550 = vmatpush1.bf16.msra.mxu0 0
        %551 = vmatprep.subr.bf16.mxu0 0
        %552 = vmatpush1.bf16.msra.mxu0 0
        %553 = vmatprep.subr.bf16.mxu0 0
        %554 = vmatpush1.bf16.msra.mxu0 0
        %555 = vmatprep.subr.bf16.mxu0 0
        %556 = vmatpush1.bf16.msra.mxu0 0
        %557 = vmatprep.subr.bf16.mxu0 0
        %558 = vmatpush1.bf16.msra.mxu0 0
        %559 = vmatprep.mubr.bf16.mxu0 0
        %560 = vmatmul.mubr.bf16.gmra.mrb[0].mxu0 %v440
        %v561 = vpop.f32.mrb[0].mxu0
        %v562 = vadd.f32 %v477, %v561
        %v563 = vpop.f32.mrb[0].mxu0
        %v564 = vpop.f32.mrb[0].mxu0
        %v565 = vadd.f32 %v477, %v564
        %v566 = vpop.f32.mrb[0].mxu0
        %567 = vmatprep.mubr.bf16.mxu0 0
        %568 = vmatmul.mubr.bf16.gmra.mrb[0].mxu0 %v441
        %v569 = vpop.f32.mrb[0].mxu0
        %v570 = vadd.f32 %v477, %v569
        %v571 = vpop.f32.mrb[0].mxu0
        %v572 = vpop.f32.mrb[0].mxu0
        %v573 = vadd.f32 %v477, %v572
        %v574 = vpop.f32.mrb[0].mxu0
        %575 = vmatprep.mubr.bf16.mxu0 0
        %576 = vmatmul.mubr.bf16.gmra.mrb[0].mxu0 %v442
        %v577 = vpop.f32.mrb[0].mxu0
        %v578 = vadd.f32 %v477, %v577
        %v579 = vpop.f32.mrb[0].mxu0
        %v580 = vpop.f32.mrb[0].mxu0
        %v581 = vadd.f32 %v477, %v580
        %v582 = vpop.f32.mrb[0].mxu0
        %583 = vmatprep.mubr.bf16.mxu0 0
        %584 = vmatmul.mubr.bf16.gmra.mrb[0].mxu0 %v443
        %v585 = vpop.f32.mrb[0].mxu0
        %v586 = vadd.f32 %v477, %v585
        %v587 = vpop.f32.mrb[0].mxu0
        %v588 = vpop.f32.mrb[0].mxu0
        %v589 = vadd.f32 %v477, %v588
        %v590 = vpop.f32.mrb[0].mxu0
        %591 = vmatprep.mubr.bf16.mxu0 0
        %592 = vmatmul.mubr.bf16.gmra.mrb[0].mxu0 %v444
        %v593 = vpop.f32.mrb[0].mxu0
        %v594 = vadd.f32 %v477, %v593
        %v595 = vpop.f32.mrb[0].mxu0
        %v596 = vpop.f32.mrb[0].mxu0
        %v597 = vadd.f32 %v477, %v596
        %v598 = vpop.f32.mrb[0].mxu0
        %599 = vmatprep.mubr.bf16.mxu0 0
        %600 = vmatmul.mubr.bf16.gmra.mrb[0].mxu0 %v445
        %v601 = vpop.f32.mrb[0].mxu0
        %v602 = vadd.f32 %v477, %v601
        %v603 = vpop.f32.mrb[0].mxu0
        %v604 = vpop.f32.mrb[0].mxu0
        %v605 = vadd.f32 %v477, %v604
        %v606 = vpop.f32.mrb[0].mxu0
        %607 = vmatprep.mubr.bf16.mxu0 0
        %608 = vmatmul.mubr.bf16.gmra.mrb[0].mxu0 %v446
        %v609 = vpop.f32.mrb[0].mxu0
        %v610 = vadd.f32 %v477, %v609
        %v611 = vpop.f32.mrb[0].mxu0
        %v612 = vpop.f32.mrb[0].mxu0
        %v613 = vadd.f32 %v477, %v612
        %v614 = vpop.f32.mrb[0].mxu0
        %615 = vmatprep.mubr.bf16.mxu0 0
        %616 = vmatmul.mubr.bf16.gmra.mrb[0].mxu0 %v447
        %v617 = vpop.f32.mrb[0].mxu0
        %v618 = vadd.f32 %v477, %v617
        %v619 = vpop.f32.mrb[0].mxu0
        %v620 = vpop.f32.mrb[0].mxu0
        %v621 = vadd.f32 %v477, %v620
        %v622 = vpop.f32.mrb[0].mxu0
        %623 = vmatprep.mubr.bf16.mxu0 0
        %624 = vmatmul.mubr.bf16.gmra.mrb[0].mxu0 %v448
        %v625 = vpop.f32.mrb[0].mxu0
        %v626 = vadd.f32 %v477, %v625
        %v627 = vpop.f32.mrb[0].mxu0
        %v628 = vpop.f32.mrb[0].mxu0
        %v629 = vadd.f32 %v477, %v628
        %v630 = vpop.f32.mrb[0].mxu0
        %631 = vmatprep.mubr.bf16.mxu0 0
        %632 = vmatmul.mubr.bf16.gmra.mrb[0].mxu0 %v449
        %v633 = vpop.f32.mrb[0].mxu0
        %v634 = vadd.f32 %v477, %v633
        %v635 = vpop.f32.mrb[0].mxu0
        %v636 = vpop.f32.mrb[0].mxu0
        %v637 = vadd.f32 %v477, %v636
        %v638 = vpop.f32.mrb[0].mxu0
        %639 = vmatprep.mubr.bf16.mxu0 0
        %640 = vmatmul.mubr.bf16.gmra.mrb[0].mxu0 %v450
        %v641 = vpop.f32.mrb[0].mxu0
        %v642 = vadd.f32 %v477, %v641
        %v643 = vpop.f32.mrb[0].mxu0
        %v644 = vpop.f32.mrb[0].mxu0
        %v645 = vadd.f32 %v477, %v644
        %v646 = vpop.f32.mrb[0].mxu0
        %647 = vmatprep.mubr.bf16.mxu0 0
        %648 = vmatmul.mubr.bf16.gmra.mrb[0].mxu0 %v451
        %v649 = vpop.f32.mrb[0].mxu0
        %v650 = vadd.f32 %v477, %v649
        %v651 = vpop.f32.mrb[0].mxu0
        %v652 = vpop.f32.mrb[0].mxu0
        %v653 = vadd.f32 %v477, %v652
        %v654 = vpop.f32.mrb[0].mxu0
        %655 = vmatprep.mubr.bf16.mxu0 0
        %656 = vmatmul.mubr.bf16.gmra.mrb[0].mxu0 %v452
        %v657 = vpop.f32.mrb[0].mxu0
        %v658 = vadd.f32 %v477, %v657
        %v659 = vpop.f32.mrb[0].mxu0
        %v660 = vpop.f32.mrb[0].mxu0
        %v661 = vadd.f32 %v477, %v660
        %v662 = vpop.f32.mrb[0].mxu0
        %663 = vmatprep.mubr.bf16.mxu0 0
        %664 = vmatmul.mubr.bf16.gmra.mrb[0].mxu0 %v453
        %v665 = vpop.f32.mrb[0].mxu0
        %v666 = vadd.f32 %v477, %v665
        %v667 = vpop.f32.mrb[0].mxu0
        %v668 = vpop.f32.mrb[0].mxu0
        %v669 = vadd.f32 %v477, %v668
        %v670 = vpop.f32.mrb[0].mxu0
        %671 = vmatprep.mubr.bf16.mxu0 0
        %672 = vmatmul.mubr.bf16.gmra.mrb[0].mxu0 %v454
        %v673 = vpop.f32.mrb[0].mxu0
        %v674 = vadd.f32 %v477, %v673
        %v675 = vpop.f32.mrb[0].mxu0
        %v676 = vpop.f32.mrb[0].mxu0
        %v677 = vadd.f32 %v477, %v676
        %v678 = vpop.f32.mrb[0].mxu0
        %679 = vmatprep.mubr.bf16.mxu0 0
        %680 = vmatmul.mubr.bf16.gmra.mrb[0].mxu0 %v455
        %v681 = vpop.f32.mrb[0].mxu0
        %v682 = vadd.f32 %v477, %v681
        %v683 = vpop.f32.mrb[0].mxu0
        %v684 = vpop.f32.mrb[0].mxu0
        %v685 = vadd.f32 %v477, %v684
        %v686 = vpop.f32.mrb[0].mxu0
        %687 = vdwg.mxu0
        %v688 = vmul.f32 %v562, 0.5
        %v689 = vmul.f32 %v565, 0.5
        %v690 = vmul.f32 %v570, 0.5
        %v691 = vmul.f32 %v573, 0.5
        %v692 = vmul.f32 %v578, 0.5
        %v693 = vmul.f32 %v581, 0.5
        %v694 = vmul.f32 %v586, 0.5
        %v695 = vmul.f32 %v589, 0.5
        %v696 = vmul.f32 %v594, 0.5
        %v697 = vmul.f32 %v597, 0.5
        %v698 = vmul.f32 %v602, 0.5
        %v699 = vmul.f32 %v605, 0.5
        %v700 = vmul.f32 %v610, 0.5
        %v701 = vmul.f32 %v613, 0.5
        %v702 = vmul.f32 %v618, 0.5
        %v703 = vmul.f32 %v621, 0.5
        %v704 = vmul.f32 %v626, 0.5
        %v705 = vmul.f32 %v629, 0.5
        %v706 = vmul.f32 %v634, 0.5
        %v707 = vmul.f32 %v637, 0.5
        %v708 = vmul.f32 %v642, 0.5
        %v709 = vmul.f32 %v645, 0.5
        %v710 = vmul.f32 %v650, 0.5
        %v711 = vmul.f32 %v653, 0.5
        %v712 = vmul.f32 %v658, 0.5
        %v713 = vmul.f32 %v661, 0.5
        %v714 = vmul.f32 %v666, 0.5
        %v715 = vmul.f32 %v669, 0.5
        %v716 = vmul.f32 %v674, 0.5
        %v717 = vmul.f32 %v677, 0.5
        %v718 = vmul.f32 %v682, 0.5
        %v719 = vmul.f32 %v685, 0.5
        %v720 = vmul.f32 %v562, 0.044715
        %v721 = vmul.f32 %v565, 0.044715
        %v722 = vmul.f32 %v570, 0.044715
        %v723 = vmul.f32 %v573, 0.044715
        %v724 = vmul.f32 %v578, 0.044715
        %v725 = vmul.f32 %v581, 0.044715
        %v726 = vmul.f32 %v586, 0.044715
        %v727 = vmul.f32 %v589, 0.044715
        %v728 = vmul.f32 %v594, 0.044715
        %v729 = vmul.f32 %v597, 0.044715
        %v730 = vmul.f32 %v602, 0.044715
        %v731 = vmul.f32 %v605, 0.044715
        %v732 = vmul.f32 %v610, 0.044715
        %v733 = vmul.f32 %v613, 0.044715
        %v734 = vmul.f32 %v618, 0.044715
        %v735 = vmul.f32 %v621, 0.044715
        %v736 = vmul.f32 %v626, 0.044715
        %v737 = vmul.f32 %v629, 0.044715
        %v738 = vmul.f32 %v634, 0.044715
        %v739 = vmul.f32 %v637, 0.044715
        %v740 = vmul.f32 %v642, 0.044715
        %v741 = vmul.f32 %v645, 0.044715
        %v742 = vmul.f32 %v650, 0.044715
        %v743 = vmul.f32 %v653, 0.044715
        %v744 = vmul.f32 %v658, 0.044715
        %v745 = vmul.f32 %v661, 0.044715
        %v746 = vmul.f32 %v666, 0.044715
        %v747 = vmul.f32 %v669, 0.044715
        %v748 = vmul.f32 %v674, 0.044715
        %v749 = vmul.f32 %v677, 0.044715
        %v750 = vmul.f32 %v682, 0.044715
        %v751 = vmul.f32 %v685, 0.044715
        %v752 = vmul.f32 %v720, %v562
        %v753 = vmul.f32 %v721, %v565
        %v754 = vmul.f32 %v722, %v570
        %v755 = vmul.f32 %v723, %v573
        %v756 = vmul.f32 %v724, %v578
        %v757 = vmul.f32 %v725, %v581
        %v758 = vmul.f32 %v726, %v586
        %v759 = vmul.f32 %v727, %v589
        %v760 = vmul.f32 %v728, %v594
        %v761 = vmul.f32 %v729, %v597
        %v762 = vmul.f32 %v730, %v602
        %v763 = vmul.f32 %v731, %v605
        %v764 = vmul.f32 %v732, %v610
        %v765 = vmul.f32 %v733, %v613
        %v766 = vmul.f32 %v734, %v618
        %v767 = vmul.f32 %v735, %v621
        %v768 = vmul.f32 %v736, %v626
        %v769 = vmul.f32 %v737, %v629
        %v770 = vmul.f32 %v738, %v634
        %v771 = vmul.f32 %v739, %v637
        %v772 = vmul.f32 %v740, %v642
        %v773 = vmul.f32 %v741, %v645
        %v774 = vmul.f32 %v742, %v650
        %v775 = vmul.f32 %v743, %v653
        %v776 = vmul.f32 %v744, %v658
        %v777 = vmul.f32 %v745, %v661
        %v778 = vmul.f32 %v746, %v666
        %v779 = vmul.f32 %v747, %v669
        %v780 = vmul.f32 %v748, %v674
        %v781 = vmul.f32 %v749, %v677
        %v782 = vmul.f32 %v750, %v682
        %v783 = vmul.f32 %v751, %v685
        %v784 = vmul.f32 %v752, %v562
        %v785 = vmul.f32 %v753, %v565
        %v786 = vmul.f32 %v754, %v570
        %v787 = vmul.f32 %v755, %v573
        %v788 = vmul.f32 %v756, %v578
        %v789 = vmul.f32 %v757, %v581
        %v790 = vmul.f32 %v758, %v586
        %v791 = vmul.f32 %v759, %v589
        %v792 = vmul.f32 %v760, %v594
        %v793 = vmul.f32 %v761, %v597
        %v794 = vmul.f32 %v762, %v602
        %v795 = vmul.f32 %v763, %v605
        %v796 = vmul.f32 %v764, %v610
        %v797 = vmul.f32 %v765, %v613
        %v798 = vmul.f32 %v766, %v618
        %v799 = vmul.f32 %v767, %v621
        %v800 = vmul.f32 %v768, %v626
        %v801 = vmul.f32 %v769, %v629
        %v802 = vmul.f32 %v770, %v634
        %v803 = vmul.f32 %v771, %v637
        %v804 = vmul.f32 %v772, %v642
        %v805 = vmul.f32 %v773, %v645
        %v806 = vmul.f32 %v774, %v650
        %v807 = vmul.f32 %v775, %v653
        %v808 = vmul.f32 %v776, %v658
        %v809 = vmul.f32 %v777, %v661
        %v810 = vmul.f32 %v778, %v666
        %v811 = vmul.f32 %v779, %v669
        %v812 = vmul.f32 %v780, %v674
        %v813 = vmul.f32 %v781, %v677
        %v814 = vmul.f32 %v782, %v682
        %v815 = vmul.f32 %v783, %v685
        %v816 = vadd.f32 %v562, %v784
        %v817 = vadd.f32 %v565, %v785
        %v818 = vadd.f32 %v570, %v786
        %v819 = vadd.f32 %v573, %v787
        %v820 = vadd.f32 %v578, %v788
        %v821 = vadd.f32 %v581, %v789
        %v822 = vadd.f32 %v586, %v790
        %v823 = vadd.f32 %v589, %v791
        %v824 = vadd.f32 %v594, %v792
        %v825 = vadd.f32 %v597, %v793
        %v826 = vadd.f32 %v602, %v794
        %v827 = vadd.f32 %v605, %v795
        %v828 = vadd.f32 %v610, %v796
        %v829 = vadd.f32 %v613, %v797
        %v830 = vadd.f32 %v618, %v798
        %v831 = vadd.f32 %v621, %v799
        %v832 = vadd.f32 %v626, %v800
        %v833 = vadd.f32 %v629, %v801
        %v834 = vadd.f32 %v634, %v802
        %v835 = vadd.f32 %v637, %v803
        %v836 = vadd.f32 %v642, %v804
        %v837 = vadd.f32 %v645, %v805
        %v838 = vadd.f32 %v650, %v806
        %v839 = vadd.f32 %v653, %v807
        %v840 = vadd.f32 %v658, %v808
        %v841 = vadd.f32 %v661, %v809
        %v842 = vadd.f32 %v666, %v810
        %v843 = vadd.f32 %v669, %v811
        %v844 = vadd.f32 %v674, %v812
        %v845 = vadd.f32 %v677, %v813
        %v846 = vadd.f32 %v682, %v814
        %v847 = vadd.f32 %v685, %v815
        %v848 = vmul.f32 %v816, 0.7978846
        %v849 = vmul.f32 %v817, 0.7978846
        %v850 = vmul.f32 %v818, 0.7978846
        %v851 = vmul.f32 %v819, 0.7978846
        %v852 = vmul.f32 %v820, 0.7978846
        %v853 = vmul.f32 %v821, 0.7978846
        %v854 = vmul.f32 %v822, 0.7978846
        %v855 = vmul.f32 %v823, 0.7978846
        %v856 = vmul.f32 %v824, 0.7978846
        %v857 = vmul.f32 %v825, 0.7978846
        %v858 = vmul.f32 %v826, 0.7978846
        %v859 = vmul.f32 %v827, 0.7978846
        %v860 = vmul.f32 %v828, 0.7978846
        %v861 = vmul.f32 %v829, 0.7978846
        %v862 = vmul.f32 %v830, 0.7978846
        %v863 = vmul.f32 %v831, 0.7978846
        %v864 = vmul.f32 %v832, 0.7978846
        %v865 = vmul.f32 %v833, 0.7978846
        %v866 = vmul.f32 %v834, 0.7978846
        %v867 = vmul.f32 %v835, 0.7978846
        %v868 = vmul.f32 %v836, 0.7978846
        %v869 = vmul.f32 %v837, 0.7978846
        %v870 = vmul.f32 %v838, 0.7978846
        %v871 = vmul.f32 %v839, 0.7978846
        %v872 = vmul.f32 %v840, 0.7978846
        %v873 = vmul.f32 %v841, 0.7978846
        %v874 = vmul.f32 %v842, 0.7978846
        %v875 = vmul.f32 %v843, 0.7978846
        %v876 = vmul.f32 %v844, 0.7978846
        %v877 = vmul.f32 %v845, 0.7978846
        %v878 = vmul.f32 %v846, 0.7978846
        %v879 = vmul.f32 %v847, 0.7978846
        %v880 = vtanh.pop %v848
        %v881 = vtanh.pop %v849
        %v882 = vtanh.pop %v850
        %v883 = vtanh.pop %v851
        %v884 = vtanh.pop %v852
        %v885 = vtanh.pop %v853
        %v886 = vtanh.pop %v854
        %v887 = vtanh.pop %v855
        %v888 = vtanh.pop %v856
        %v889 = vtanh.pop %v857
        %v890 = vtanh.pop %v858
        %v891 = vtanh.pop %v859
        %v892 = vtanh.pop %v860
        %v893 = vtanh.pop %v861
        %v894 = vtanh.pop %v862
        %v895 = vtanh.pop %v863
        %v896 = vtanh.pop %v864
        %v897 = vtanh.pop %v865
        %v898 = vtanh.pop %v866
        %v899 = vtanh.pop %v867
        %v900 = vtanh.pop %v868
        %v901 = vtanh.pop %v869
        %v902 = vtanh.pop %v870
        %v903 = vtanh.pop %v871
        %v904 = vtanh.pop %v872
        %v905 = vtanh.pop %v873
        %v906 = vtanh.pop %v874
        %v907 = vtanh.pop %v875
        %v908 = vtanh.pop %v876
        %v909 = vtanh.pop %v877
        %v910 = vtanh.pop %v878
        %v911 = vtanh.pop %v879
        %v912 = vadd.f32 %v880, 1.0
        %v913 = vadd.f32 %v881, 1.0
        %v914 = vadd.f32 %v882, 1.0
        %v915 = vadd.f32 %v883, 1.0
        %v916 = vadd.f32 %v884, 1.0
        %v917 = vadd.f32 %v885, 1.0
        %v918 = vadd.f32 %v886, 1.0
        %v919 = vadd.f32 %v887, 1.0
        %v920 = vadd.f32 %v888, 1.0
        %v921 = vadd.f32 %v889, 1.0
        %v922 = vadd.f32 %v890, 1.0
        %v923 = vadd.f32 %v891, 1.0
        %v924 = vadd.f32 %v892, 1.0
        %v925 = vadd.f32 %v893, 1.0
        %v926 = vadd.f32 %v894, 1.0
        %v927 = vadd.f32 %v895, 1.0
        %v928 = vadd.f32 %v896, 1.0
        %v929 = vadd.f32 %v897, 1.0
        %v930 = vadd.f32 %v898, 1.0
        %v931 = vadd.f32 %v899, 1.0
        %v932 = vadd.f32 %v900, 1.0
        %v933 = vadd.f32 %v901, 1.0
        %v934 = vadd.f32 %v902, 1.0
        %v935 = vadd.f32 %v903, 1.0
        %v936 = vadd.f32 %v904, 1.0
        %v937 = vadd.f32 %v905, 1.0
        %v938 = vadd.f32 %v906, 1.0
        %v939 = vadd.f32 %v907, 1.0
        %v940 = vadd.f32 %v908, 1.0
        %v941 = vadd.f32 %v909, 1.0
        %v942 = vadd.f32 %v910, 1.0
        %v943 = vadd.f32 %v911, 1.0
        %v944 = vmul.f32 %v688, %v912
        %v945 = vmul.f32 %v689, %v913
        %v946 = vmul.f32 %v690, %v914
        %v947 = vmul.f32 %v691, %v915
        %v948 = vmul.f32 %v692, %v916
        %v949 = vmul.f32 %v693, %v917
        %v950 = vmul.f32 %v694, %v918
        %v951 = vmul.f32 %v695, %v919
        %v952 = vmul.f32 %v696, %v920
        %v953 = vmul.f32 %v697, %v921
        %v954 = vmul.f32 %v698, %v922
        %v955 = vmul.f32 %v699, %v923
        %v956 = vmul.f32 %v700, %v924
        %v957 = vmul.f32 %v701, %v925
        %v958 = vmul.f32 %v702, %v926
        %v959 = vmul.f32 %v703, %v927
        %v960 = vmul.f32 %v704, %v928
        %v961 = vmul.f32 %v705, %v929
        %v962 = vmul.f32 %v706, %v930
        %v963 = vmul.f32 %v707, %v931
        %v964 = vmul.f32 %v708, %v932
        %v965 = vmul.f32 %v709, %v933
        %v966 = vmul.f32 %v710, %v934
        %v967 = vmul.f32 %v711, %v935
        %v968 = vmul.f32 %v712, %v936
        %v969 = vmul.f32 %v713, %v937
        %v970 = vmul.f32 %v714, %v938
        %v971 = vmul.f32 %v715, %v939
        %v972 = vmul.f32 %v716, %v940
        %v973 = vmul.f32 %v717, %v941
        %v974 = vmul.f32 %v718, %v942
        %v975 = vmul.f32 %v719, %v943
        %v976 = vlaneseq
        %v977 = vshrl.u32 %v976, 7
        %v978 = vadd.s32 %v977, 8
        %v979 = vadd.s32 %v977, 16
        %v980 = vadd.s32 %v977, 24
        %v981 = vadd.s32 %v977, 32
        %v982 = vadd.s32 %v977, 40
        %v983 = vadd.s32 %v977, 48
        %v984 = vadd.s32 %v977, 56
        %v985 = vadd.s32 %v977, 64
        %v986 = vadd.s32 %v977, 72
        %v987 = vadd.s32 %v977, 80
        %v988 = vadd.s32 %v977, 88
        %v989 = vadd.s32 %v977, 96
        %v990 = vadd.s32 %v977, 104
        %v991 = vadd.s32 %v977, 112
        %v992 = vadd.s32 %v977, 120
        %v993 = vadd.s32 %v977, 128
        %v994 = vadd.s32 %v977, 136
        %v995 = vadd.s32 %v977, 144
        %v996 = vadd.s32 %v977, 152
        %v997 = vadd.s32 %v977, 160
        %v998 = vadd.s32 %v977, 168
        %v999 = vadd.s32 %v977, 176
        %v1000 = vadd.s32 %v977, 184
        %v1001 = vadd.s32 %v977, 192
        %v1002 = vadd.s32 %v977, 200
        %v1003 = vadd.s32 %v977, 208
        %v1004 = vadd.s32 %v977, 216
        %v1005 = vadd.s32 %v977, 224
        %v1006 = vadd.s32 %v977, 232
        %v1007 = vadd.s32 %v977, 240
        %v1008 = vadd.s32 %v977, 248
        %v1009 = vld [vmem:[%s1] sm:$0xff]
        %v1010 = vld [vmem:[%s1 + $0x8] sm:$0xff]
        %v1011 = vld [vmem:[%s1 + $0x10] sm:$0xff]
        %v1012 = vld [vmem:[%s1 + $0x18] sm:$0xff]
        %v1013 = vld [vmem:[%s1 + $0x20] sm:$0xff]
        %v1014 = vld [vmem:[%s1 + $0x28] sm:$0xff]
        %v1015 = vld [vmem:[%s1 + $0x30] sm:$0xff]
        %v1016 = vld [vmem:[%s1 + $0x38] sm:$0xff]
        %v1017 = vld [vmem:[%s1 + $0x40] sm:$0xff]
        %v1018 = vld [vmem:[%s1 + $0x48] sm:$0xff]
        %v1019 = vld [vmem:[%s1 + $0x50] sm:$0xff]
        %v1020 = vld [vmem:[%s1 + $0x58] sm:$0xff]
        %v1021 = vld [vmem:[%s1 + $0x60] sm:$0xff]
        %v1022 = vld [vmem:[%s1 + $0x68] sm:$0xff]
        %v1023 = vld [vmem:[%s1 + $0x70] sm:$0xff]
        %v1024 = vld [vmem:[%s1 + $0x78] sm:$0xff]
        %v1025 = vld [vmem:[%s1 + $0x80] sm:$0xff]
        %v1026 = vld [vmem:[%s1 + $0x88] sm:$0xff]
        %v1027 = vld [vmem:[%s1 + $0x90] sm:$0xff]
        %v1028 = vld [vmem:[%s1 + $0x98] sm:$0xff]
        %v1029 = vld [vmem:[%s1 + $0xa0] sm:$0xff]
        %v1030 = vld [vmem:[%s1 + $0xa8] sm:$0xff]
        %v1031 = vld [vmem:[%s1 + $0xb0] sm:$0xff]
        %v1032 = vld [vmem:[%s1 + $0xb8] sm:$0xff]
        %v1033 = vld [vmem:[%s1 + $0xc0] sm:$0xff]
        %v1034 = vld [vmem:[%s1 + $0xc8] sm:$0xff]
        %v1035 = vld [vmem:[%s1 + $0xd0] sm:$0xff]
        %v1036 = vld [vmem:[%s1 + $0xd8] sm:$0xff]
        %v1037 = vld [vmem:[%s1 + $0xe0] sm:$0xff]
        %v1038 = vld [vmem:[%s1 + $0xe8] sm:$0xff]
        %v1039 = vld [vmem:[%s1 + $0xf0] sm:$0xff]
        %v1040 = vld [vmem:[%s1 + $0xf8] sm:$0xff]
        %vm1041 = vcmp.ge.s32.totalorder %v977, 16
        %vm1042 = vcmp.ge.s32.totalorder %v978, 16
        %vm1043 = vcmp.ge.s32.totalorder %v979, 16
        %vm1044 = vcmp.ge.s32.totalorder %v980, 16
        %vm1045 = vcmp.ge.s32.totalorder %v981, 16
        %vm1046 = vcmp.ge.s32.totalorder %v982, 16
        %vm1047 = vcmp.ge.s32.totalorder %v983, 16
        %vm1048 = vcmp.ge.s32.totalorder %v984, 16
        %vm1049 = vcmp.ge.s32.totalorder %v985, 16
        %vm1050 = vcmp.ge.s32.totalorder %v986, 16
        %vm1051 = vcmp.ge.s32.totalorder %v987, 16
        %vm1052 = vcmp.ge.s32.totalorder %v988, 16
        %vm1053 = vcmp.ge.s32.totalorder %v989, 16
        %vm1054 = vcmp.ge.s32.totalorder %v990, 16
        %vm1055 = vcmp.ge.s32.totalorder %v991, 16
        %vm1056 = vcmp.ge.s32.totalorder %v992, 16
        %vm1057 = vcmp.ge.s32.totalorder %v993, 16
        %vm1058 = vcmp.ge.s32.totalorder %v994, 16
        %vm1059 = vcmp.ge.s32.totalorder %v995, 16
        %vm1060 = vcmp.ge.s32.totalorder %v996, 16
        %vm1061 = vcmp.ge.s32.totalorder %v997, 16
        %vm1062 = vcmp.ge.s32.totalorder %v998, 16
        %vm1063 = vcmp.ge.s32.totalorder %v999, 16
        %vm1064 = vcmp.ge.s32.totalorder %v1000, 16
        %vm1065 = vcmp.ge.s32.totalorder %v1001, 16
        %vm1066 = vcmp.ge.s32.totalorder %v1002, 16
        %vm1067 = vcmp.ge.s32.totalorder %v1003, 16
        %vm1068 = vcmp.ge.s32.totalorder %v1004, 16
        %vm1069 = vcmp.ge.s32.totalorder %v1005, 16
        %vm1070 = vcmp.ge.s32.totalorder %v1006, 16
        %vm1071 = vcmp.ge.s32.totalorder %v1007, 16
        %vm1072 = vcmp.ge.s32.totalorder %v1008, 16
        %v1073 = vsel %vm1041, 1.0, 0.0
        %v1074 = vsel %vm1042, 1.0, 0.0
        %v1075 = vsel %vm1043, 1.0, 0.0
        %v1076 = vsel %vm1044, 1.0, 0.0
        %v1077 = vsel %vm1045, 1.0, 0.0
        %v1078 = vsel %vm1046, 1.0, 0.0
        %v1079 = vsel %vm1047, 1.0, 0.0
        %v1080 = vsel %vm1048, 1.0, 0.0
        %v1081 = vsel %vm1049, 1.0, 0.0
        %v1082 = vsel %vm1050, 1.0, 0.0
        %v1083 = vsel %vm1051, 1.0, 0.0
        %v1084 = vsel %vm1052, 1.0, 0.0
        %v1085 = vsel %vm1053, 1.0, 0.0
        %v1086 = vsel %vm1054, 1.0, 0.0
        %v1087 = vsel %vm1055, 1.0, 0.0
        %v1088 = vsel %vm1056, 1.0, 0.0
        %v1089 = vsel %vm1057, 1.0, 0.0
        %v1090 = vsel %vm1058, 1.0, 0.0
        %v1091 = vsel %vm1059, 1.0, 0.0
        %v1092 = vsel %vm1060, 1.0, 0.0
        %v1093 = vsel %vm1061, 1.0, 0.0
        %v1094 = vsel %vm1062, 1.0, 0.0
        %v1095 = vsel %vm1063, 1.0, 0.0
        %v1096 = vsel %vm1064, 1.0, 0.0
        %v1097 = vsel %vm1065, 1.0, 0.0
        %v1098 = vsel %vm1066, 1.0, 0.0
        %v1099 = vsel %vm1067, 1.0, 0.0
        %v1100 = vsel %vm1068, 1.0, 0.0
        %v1101 = vsel %vm1069, 1.0, 0.0
        %v1102 = vsel %vm1070, 1.0, 0.0
        %v1103 = vsel %vm1071, 1.0, 0.0
        %v1104 = vsel %vm1072, 1.0, 0.0
        %vm1105 = vcmp.lt.s32.totalorder %v977, 240
        %vm1106 = vcmp.lt.s32.totalorder %v978, 240
        %vm1107 = vcmp.lt.s32.totalorder %v979, 240
        %vm1108 = vcmp.lt.s32.totalorder %v980, 240
        %vm1109 = vcmp.lt.s32.totalorder %v981, 240
        %vm1110 = vcmp.lt.s32.totalorder %v982, 240
        %vm1111 = vcmp.lt.s32.totalorder %v983, 240
        %vm1112 = vcmp.lt.s32.totalorder %v984, 240
        %vm1113 = vcmp.lt.s32.totalorder %v985, 240
        %vm1114 = vcmp.lt.s32.totalorder %v986, 240
        %vm1115 = vcmp.lt.s32.totalorder %v987, 240
        %vm1116 = vcmp.lt.s32.totalorder %v988, 240
        %vm1117 = vcmp.lt.s32.totalorder %v989, 240
        %vm1118 = vcmp.lt.s32.totalorder %v990, 240
        %vm1119 = vcmp.lt.s32.totalorder %v991, 240
        %vm1120 = vcmp.lt.s32.totalorder %v992, 240
        %vm1121 = vcmp.lt.s32.totalorder %v993, 240
        %vm1122 = vcmp.lt.s32.totalorder %v994, 240
        %vm1123 = vcmp.lt.s32.totalorder %v995, 240
        %vm1124 = vcmp.lt.s32.totalorder %v996, 240
        %vm1125 = vcmp.lt.s32.totalorder %v997, 240
        %vm1126 = vcmp.lt.s32.totalorder %v998, 240
        %vm1127 = vcmp.lt.s32.totalorder %v999, 240
        %vm1128 = vcmp.lt.s32.totalorder %v1000, 240
        %vm1129 = vcmp.lt.s32.totalorder %v1001, 240
        %vm1130 = vcmp.lt.s32.totalorder %v1002, 240
        %vm1131 = vcmp.lt.s32.totalorder %v1003, 240
        %vm1132 = vcmp.lt.s32.totalorder %v1004, 240
        %vm1133 = vcmp.lt.s32.totalorder %v1005, 240
        %vm1134 = vcmp.lt.s32.totalorder %v1006, 240
        %vm1135 = vcmp.lt.s32.totalorder %v1007, 240
        %vm1136 = vcmp.lt.s32.totalorder %v1008, 240
        %v1137 = vsel %vm1105, 1.0, 0.0
        %v1138 = vsel %vm1106, 1.0, 0.0
        %v1139 = vsel %vm1107, 1.0, 0.0
        %v1140 = vsel %vm1108, 1.0, 0.0
        %v1141 = vsel %vm1109, 1.0, 0.0
        %v1142 = vsel %vm1110, 1.0, 0.0
        %v1143 = vsel %vm1111, 1.0, 0.0
        %v1144 = vsel %vm1112, 1.0, 0.0
        %v1145 = vsel %vm1113, 1.0, 0.0
        %v1146 = vsel %vm1114, 1.0, 0.0
        %v1147 = vsel %vm1115, 1.0, 0.0
        %v1148 = vsel %vm1116, 1.0, 0.0
        %v1149 = vsel %vm1117, 1.0, 0.0
        %v1150 = vsel %vm1118, 1.0, 0.0
        %v1151 = vsel %vm1119, 1.0, 0.0
        %v1152 = vsel %vm1120, 1.0, 0.0
        %v1153 = vsel %vm1121, 1.0, 0.0
        %v1154 = vsel %vm1122, 1.0, 0.0
        %v1155 = vsel %vm1123, 1.0, 0.0
        %v1156 = vsel %vm1124, 1.0, 0.0
        %v1157 = vsel %vm1125, 1.0, 0.0
        %v1158 = vsel %vm1126, 1.0, 0.0
        %v1159 = vsel %vm1127, 1.0, 0.0
        %v1160 = vsel %vm1128, 1.0, 0.0
        %v1161 = vsel %vm1129, 1.0, 0.0
        %v1162 = vsel %vm1130, 1.0, 0.0
        %v1163 = vsel %vm1131, 1.0, 0.0
        %v1164 = vsel %vm1132, 1.0, 0.0
        %v1165 = vsel %vm1133, 1.0, 0.0
        %v1166 = vsel %vm1134, 1.0, 0.0
        %v1167 = vsel %vm1135, 1.0, 0.0
        %v1168 = vsel %vm1136, 1.0, 0.0
        %vm1169 = vcmp.ge.s32.totalorder %v1009, 1
        %vm1170 = vcmp.ge.s32.totalorder %v1010, 1
        %vm1171 = vcmp.ge.s32.totalorder %v1011, 1
        %vm1172 = vcmp.ge.s32.totalorder %v1012, 1
        %vm1173 = vcmp.ge.s32.totalorder %v1013, 1
        %vm1174 = vcmp.ge.s32.totalorder %v1014, 1
        %vm1175 = vcmp.ge.s32.totalorder %v1015, 1
        %vm1176 = vcmp.ge.s32.totalorder %v1016, 1
        %vm1177 = vcmp.ge.s32.totalorder %v1017, 1
        %vm1178 = vcmp.ge.s32.totalorder %v1018, 1
        %vm1179 = vcmp.ge.s32.totalorder %v1019, 1
        %vm1180 = vcmp.ge.s32.totalorder %v1020, 1
        %vm1181 = vcmp.ge.s32.totalorder %v1021, 1
        %vm1182 = vcmp.ge.s32.totalorder %v1022, 1
        %vm1183 = vcmp.ge.s32.totalorder %v1023, 1
        %vm1184 = vcmp.ge.s32.totalorder %v1024, 1
        %vm1185 = vcmp.ge.s32.totalorder %v1025, 1
        %vm1186 = vcmp.ge.s32.totalorder %v1026, 1
        %vm1187 = vcmp.ge.s32.totalorder %v1027, 1
        %vm1188 = vcmp.ge.s32.totalorder %v1028, 1
        %vm1189 = vcmp.ge.s32.totalorder %v1029, 1
        %vm1190 = vcmp.ge.s32.totalorder %v1030, 1
        %vm1191 = vcmp.ge.s32.totalorder %v1031, 1
        %vm1192 = vcmp.ge.s32.totalorder %v1032, 1
        %vm1193 = vcmp.ge.s32.totalorder %v1033, 1
        %vm1194 = vcmp.ge.s32.totalorder %v1034, 1
        %vm1195 = vcmp.ge.s32.totalorder %v1035, 1
        %vm1196 = vcmp.ge.s32.totalorder %v1036, 1
        %vm1197 = vcmp.ge.s32.totalorder %v1037, 1
        %vm1198 = vcmp.ge.s32.totalorder %v1038, 1
        %vm1199 = vcmp.ge.s32.totalorder %v1039, 1
        %vm1200 = vcmp.ge.s32.totalorder %v1040, 1
        %v1201 = vsel %vm1169, 1.0, 0.0
        %v1202 = vsel %vm1170, 1.0, 0.0
        %v1203 = vsel %vm1171, 1.0, 0.0
        %v1204 = vsel %vm1172, 1.0, 0.0
        %v1205 = vsel %vm1173, 1.0, 0.0
        %v1206 = vsel %vm1174, 1.0, 0.0
        %v1207 = vsel %vm1175, 1.0, 0.0
        %v1208 = vsel %vm1176, 1.0, 0.0
        %v1209 = vsel %vm1177, 1.0, 0.0
        %v1210 = vsel %vm1178, 1.0, 0.0
        %v1211 = vsel %vm1179, 1.0, 0.0
        %v1212 = vsel %vm1180, 1.0, 0.0
        %v1213 = vsel %vm1181, 1.0, 0.0
        %v1214 = vsel %vm1182, 1.0, 0.0
        %v1215 = vsel %vm1183, 1.0, 0.0
        %v1216 = vsel %vm1184, 1.0, 0.0
        %v1217 = vsel %vm1185, 1.0, 0.0
        %v1218 = vsel %vm1186, 1.0, 0.0
        %v1219 = vsel %vm1187, 1.0, 0.0
        %v1220 = vsel %vm1188, 1.0, 0.0
        %v1221 = vsel %vm1189, 1.0, 0.0
        %v1222 = vsel %vm1190, 1.0, 0.0
        %v1223 = vsel %vm1191, 1.0, 0.0
        %v1224 = vsel %vm1192, 1.0, 0.0
        %v1225 = vsel %vm1193, 1.0, 0.0
        %v1226 = vsel %vm1194, 1.0, 0.0
        %v1227 = vsel %vm1195, 1.0, 0.0
        %v1228 = vsel %vm1196, 1.0, 0.0
        %v1229 = vsel %vm1197, 1.0, 0.0
        %v1230 = vsel %vm1198, 1.0, 0.0
        %v1231 = vsel %vm1199, 1.0, 0.0
        %v1232 = vsel %vm1200, 1.0, 0.0
        %vm1233 = vcmp.lt.s32.totalorder %v1009, 15
        %vm1234 = vcmp.lt.s32.totalorder %v1010, 15
        %vm1235 = vcmp.lt.s32.totalorder %v1011, 15
        %vm1236 = vcmp.lt.s32.totalorder %v1012, 15
        %vm1237 = vcmp.lt.s32.totalorder %v1013, 15
        %vm1238 = vcmp.lt.s32.totalorder %v1014, 15
        %vm1239 = vcmp.lt.s32.totalorder %v1015, 15
        %vm1240 = vcmp.lt.s32.totalorder %v1016, 15
        %vm1241 = vcmp.lt.s32.totalorder %v1017, 15
        %vm1242 = vcmp.lt.s32.totalorder %v1018, 15
        %vm1243 = vcmp.lt.s32.totalorder %v1019, 15
        %vm1244 = vcmp.lt.s32.totalorder %v1020, 15
        %vm1245 = vcmp.lt.s32.totalorder %v1021, 15
        %vm1246 = vcmp.lt.s32.totalorder %v1022, 15
        %vm1247 = vcmp.lt.s32.totalorder %v1023, 15
        %vm1248 = vcmp.lt.s32.totalorder %v1024, 15
        %vm1249 = vcmp.lt.s32.totalorder %v1025, 15
        %vm1250 = vcmp.lt.s32.totalorder %v1026, 15
        %vm1251 = vcmp.lt.s32.totalorder %v1027, 15
        %vm1252 = vcmp.lt.s32.totalorder %v1028, 15
        %vm1253 = vcmp.lt.s32.totalorder %v1029, 15
        %vm1254 = vcmp.lt.s32.totalorder %v1030, 15
        %vm1255 = vcmp.lt.s32.totalorder %v1031, 15
        %vm1256 = vcmp.lt.s32.totalorder %v1032, 15
        %vm1257 = vcmp.lt.s32.totalorder %v1033, 15
        %vm1258 = vcmp.lt.s32.totalorder %v1034, 15
        %vm1259 = vcmp.lt.s32.totalorder %v1035, 15
        %vm1260 = vcmp.lt.s32.totalorder %v1036, 15
        %vm1261 = vcmp.lt.s32.totalorder %v1037, 15
        %vm1262 = vcmp.lt.s32.totalorder %v1038, 15
        %vm1263 = vcmp.lt.s32.totalorder %v1039, 15
        %vm1264 = vcmp.lt.s32.totalorder %v1040, 15
        %v1265 = vsel %vm1233, 1.0, 0.0
        %v1266 = vsel %vm1234, 1.0, 0.0
        %v1267 = vsel %vm1235, 1.0, 0.0
        %v1268 = vsel %vm1236, 1.0, 0.0
        %v1269 = vsel %vm1237, 1.0, 0.0
        %v1270 = vsel %vm1238, 1.0, 0.0
        %v1271 = vsel %vm1239, 1.0, 0.0
        %v1272 = vsel %vm1240, 1.0, 0.0
        %v1273 = vsel %vm1241, 1.0, 0.0
        %v1274 = vsel %vm1242, 1.0, 0.0
        %v1275 = vsel %vm1243, 1.0, 0.0
        %v1276 = vsel %vm1244, 1.0, 0.0
        %v1277 = vsel %vm1245, 1.0, 0.0
        %v1278 = vsel %vm1246, 1.0, 0.0
        %v1279 = vsel %vm1247, 1.0, 0.0
        %v1280 = vsel %vm1248, 1.0, 0.0
        %v1281 = vsel %vm1249, 1.0, 0.0
        %v1282 = vsel %vm1250, 1.0, 0.0
        %v1283 = vsel %vm1251, 1.0, 0.0
        %v1284 = vsel %vm1252, 1.0, 0.0
        %v1285 = vsel %vm1253, 1.0, 0.0
        %v1286 = vsel %vm1254, 1.0, 0.0
        %v1287 = vsel %vm1255, 1.0, 0.0
        %v1288 = vsel %vm1256, 1.0, 0.0
        %v1289 = vsel %vm1257, 1.0, 0.0
        %v1290 = vsel %vm1258, 1.0, 0.0
        %v1291 = vsel %vm1259, 1.0, 0.0
        %v1292 = vsel %vm1260, 1.0, 0.0
        %v1293 = vsel %vm1261, 1.0, 0.0
        %v1294 = vsel %vm1262, 1.0, 0.0
        %v1295 = vsel %vm1263, 1.0, 0.0
        %v1296 = vsel %vm1264, 1.0, 0.0
        %v1297 = vrot.slane %v944, 7
        %v1298 = vrot.slane %v945, 7
        %v1299 = vrot.slane %v946, 7
        %v1300 = vrot.slane %v947, 7
        %v1301 = vrot.slane %v948, 7
        %v1302 = vrot.slane %v949, 7
        %v1303 = vrot.slane %v950, 7
        %v1304 = vrot.slane %v951, 7
        %v1305 = vrot.slane %v952, 7
        %v1306 = vrot.slane %v953, 7
        %v1307 = vrot.slane %v954, 7
        %v1308 = vrot.slane %v955, 7
        %v1309 = vrot.slane %v956, 7
        %v1310 = vrot.slane %v957, 7
        %v1311 = vrot.slane %v958, 7
        %v1312 = vrot.slane %v959, 7
        %v1313 = vrot.slane %v960, 7
        %v1314 = vrot.slane %v961, 7
        %v1315 = vrot.slane %v962, 7
        %v1316 = vrot.slane %v963, 7
        %v1317 = vrot.slane %v964, 7
        %v1318 = vrot.slane %v965, 7
        %v1319 = vrot.slane %v966, 7
        %v1320 = vrot.slane %v967, 7
        %v1321 = vrot.slane %v968, 7
        %v1322 = vrot.slane %v969, 7
        %v1323 = vrot.slane %v970, 7
        %v1324 = vrot.slane %v971, 7
        %v1325 = vrot.slane %v972, 7
        %v1326 = vrot.slane %v973, 7
        %v1327 = vrot.slane %v974, 7
        %v1328 = vrot.slane %v975, 7
        %vm1329 = vcmp.lt.s32.totalorder %v977, 1
        %v1330 = vsel %vm1329, %v1327, %v1328
        %v1331 = vsel %vm1329, %v1326, %v1327
        %v1332 = vsel %vm1329, %v1325, %v1326
        %v1333 = vsel %vm1329, %v1324, %v1325
        %v1334 = vsel %vm1329, %v1323, %v1324
        %v1335 = vsel %vm1329, %v1322, %v1323
        %v1336 = vsel %vm1329, %v1321, %v1322
        %v1337 = vsel %vm1329, %v1320, %v1321
        %v1338 = vsel %vm1329, %v1319, %v1320
        %v1339 = vsel %vm1329, %v1318, %v1319
        %v1340 = vsel %vm1329, %v1317, %v1318
        %v1341 = vsel %vm1329, %v1316, %v1317
        %v1342 = vsel %vm1329, %v1315, %v1316
        %v1343 = vsel %vm1329, %v1314, %v1315
        %v1344 = vsel %vm1329, %v1313, %v1314
        %v1345 = vsel %vm1329, %v1312, %v1313
        %v1346 = vsel %vm1329, %v1311, %v1312
        %v1347 = vsel %vm1329, %v1310, %v1311
        %v1348 = vsel %vm1329, %v1309, %v1310
        %v1349 = vsel %vm1329, %v1308, %v1309
        %v1350 = vsel %vm1329, %v1307, %v1308
        %v1351 = vsel %vm1329, %v1306, %v1307
        %v1352 = vsel %vm1329, %v1305, %v1306
        %v1353 = vsel %vm1329, %v1304, %v1305
        %v1354 = vsel %vm1329, %v1303, %v1304
        %v1355 = vsel %vm1329, %v1302, %v1303
        %v1356 = vsel %vm1329, %v1301, %v1302
        %v1357 = vsel %vm1329, %v1300, %v1301
        %v1358 = vsel %vm1329, %v1299, %v1300
        %v1359 = vsel %vm1329, %v1298, %v1299
        %v1360 = vsel %vm1329, %v1297, %v1298
        %v1361 = vsel %vm1329, %v1328, %v1297
        %v1362 = vld [vmem:[%s4] sm:$0x1]
        %v1363 = vlaneseq
        %v1364 = vshrl.u32 %v1363, 7
        %v1365 = vsub.s32 0, %v1364
        %v1366 = vrot.slane %v1362, %v1365
        %v1367 = vmul.f32 %v1331, %v1366
        %v1368 = vmul.f32 %v1330, %v1366
        %v1369 = vmul.f32 %v1361, %v1366
        %v1370 = vmul.f32 %v1360, %v1366
        %v1371 = vmul.f32 %v1359, %v1366
        %v1372 = vmul.f32 %v1358, %v1366
        %v1373 = vmul.f32 %v1357, %v1366
        %v1374 = vmul.f32 %v1356, %v1366
        %v1375 = vmul.f32 %v1355, %v1366
        %v1376 = vmul.f32 %v1354, %v1366
        %v1377 = vmul.f32 %v1353, %v1366
        %v1378 = vmul.f32 %v1352, %v1366
        %v1379 = vmul.f32 %v1351, %v1366
        %v1380 = vmul.f32 %v1350, %v1366
        %v1381 = vmul.f32 %v1349, %v1366
        %v1382 = vmul.f32 %v1348, %v1366
        %v1383 = vmul.f32 %v1347, %v1366
        %v1384 = vmul.f32 %v1346, %v1366
        %v1385 = vmul.f32 %v1345, %v1366
        %v1386 = vmul.f32 %v1344, %v1366
        %v1387 = vmul.f32 %v1343, %v1366
        %v1388 = vmul.f32 %v1342, %v1366
        %v1389 = vmul.f32 %v1341, %v1366
        %v1390 = vmul.f32 %v1340, %v1366
        %v1391 = vmul.f32 %v1339, %v1366
        %v1392 = vmul.f32 %v1338, %v1366
        %v1393 = vmul.f32 %v1337, %v1366
        %v1394 = vmul.f32 %v1336, %v1366
        %v1395 = vmul.f32 %v1335, %v1366
        %v1396 = vmul.f32 %v1334, %v1366
        %v1397 = vmul.f32 %v1333, %v1366
        %v1398 = vmul.f32 %v1332, %v1366
        %v1399 = vmul.f32 %v1073, %v1201
        %v1400 = vmul.f32 %v1074, %v1202
        %v1401 = vmul.f32 %v1075, %v1203
        %v1402 = vmul.f32 %v1076, %v1204
        %v1403 = vmul.f32 %v1077, %v1205
        %v1404 = vmul.f32 %v1078, %v1206
        %v1405 = vmul.f32 %v1079, %v1207
        %v1406 = vmul.f32 %v1080, %v1208
        %v1407 = vmul.f32 %v1081, %v1209
        %v1408 = vmul.f32 %v1082, %v1210
        %v1409 = vmul.f32 %v1083, %v1211
        %v1410 = vmul.f32 %v1084, %v1212
        %v1411 = vmul.f32 %v1085, %v1213
        %v1412 = vmul.f32 %v1086, %v1214
        %v1413 = vmul.f32 %v1087, %v1215
        %v1414 = vmul.f32 %v1088, %v1216
        %v1415 = vmul.f32 %v1089, %v1217
        %v1416 = vmul.f32 %v1090, %v1218
        %v1417 = vmul.f32 %v1091, %v1219
        %v1418 = vmul.f32 %v1092, %v1220
        %v1419 = vmul.f32 %v1093, %v1221
        %v1420 = vmul.f32 %v1094, %v1222
        %v1421 = vmul.f32 %v1095, %v1223
        %v1422 = vmul.f32 %v1096, %v1224
        %v1423 = vmul.f32 %v1097, %v1225
        %v1424 = vmul.f32 %v1098, %v1226
        %v1425 = vmul.f32 %v1099, %v1227
        %v1426 = vmul.f32 %v1100, %v1228
        %v1427 = vmul.f32 %v1101, %v1229
        %v1428 = vmul.f32 %v1102, %v1230
        %v1429 = vmul.f32 %v1103, %v1231
        %v1430 = vmul.f32 %v1104, %v1232
        %1432 = vset.pattern.permute.xlu0 0
        %1433 = vperm.xlu0 %1432, %v1399
        %v1434 = vpop.permute.xlu0 %1433
        %1437 = vset.pattern.permute.xlu0 0
        %1438 = vperm.xlu0 %1437, %v1400
        %v1439 = vpop.permute.xlu0 %1438
        %1442 = vset.pattern.permute.xlu0 0
        %1443 = vperm.xlu0 %1442, %v1401
        %v1444 = vpop.permute.xlu0 %1443
        %1447 = vset.pattern.permute.xlu0 0
        %1448 = vperm.xlu0 %1447, %v1402
        %v1449 = vpop.permute.xlu0 %1448
        %1452 = vset.pattern.permute.xlu0 0
        %1453 = vperm.xlu0 %1452, %v1403
        %v1454 = vpop.permute.xlu0 %1453
        %1457 = vset.pattern.permute.xlu0 0
        %1458 = vperm.xlu0 %1457, %v1404
        %v1459 = vpop.permute.xlu0 %1458
        %1462 = vset.pattern.permute.xlu0 0
        %1463 = vperm.xlu0 %1462, %v1405
        %v1464 = vpop.permute.xlu0 %1463
        %1467 = vset.pattern.permute.xlu0 0
        %1468 = vperm.xlu0 %1467, %v1406
        %v1469 = vpop.permute.xlu0 %1468
        %1472 = vset.pattern.permute.xlu0 0
        %1473 = vperm.xlu0 %1472, %v1407
        %v1474 = vpop.permute.xlu0 %1473
        %1477 = vset.pattern.permute.xlu0 0
        %1478 = vperm.xlu0 %1477, %v1408
        %v1479 = vpop.permute.xlu0 %1478
        %1482 = vset.pattern.permute.xlu0 0
        %1483 = vperm.xlu0 %1482, %v1409
        %v1484 = vpop.permute.xlu0 %1483
        %1487 = vset.pattern.permute.xlu0 0
        %1488 = vperm.xlu0 %1487, %v1410
        %v1489 = vpop.permute.xlu0 %1488
        %1492 = vset.pattern.permute.xlu0 0
        %1493 = vperm.xlu0 %1492, %v1411
        %v1494 = vpop.permute.xlu0 %1493
        %1497 = vset.pattern.permute.xlu0 0
        %1498 = vperm.xlu0 %1497, %v1412
        %v1499 = vpop.permute.xlu0 %1498
        %1502 = vset.pattern.permute.xlu0 0
        %1503 = vperm.xlu0 %1502, %v1413
        %v1504 = vpop.permute.xlu0 %1503
        %1507 = vset.pattern.permute.xlu0 0
        %1508 = vperm.xlu0 %1507, %v1414
        %v1509 = vpop.permute.xlu0 %1508
        %1512 = vset.pattern.permute.xlu0 0
        %1513 = vperm.xlu0 %1512, %v1415
        %v1514 = vpop.permute.xlu0 %1513
        %1517 = vset.pattern.permute.xlu0 0
        %1518 = vperm.xlu0 %1517, %v1416
        %v1519 = vpop.permute.xlu0 %1518
        %1522 = vset.pattern.permute.xlu0 0
        %1523 = vperm.xlu0 %1522, %v1417
        %v1524 = vpop.permute.xlu0 %1523
        %1527 = vset.pattern.permute.xlu0 0
        %1528 = vperm.xlu0 %1527, %v1418
        %v1529 = vpop.permute.xlu0 %1528
        %1532 = vset.pattern.permute.xlu0 0
        %1533 = vperm.xlu0 %1532, %v1419
        %v1534 = vpop.permute.xlu0 %1533
        %1537 = vset.pattern.permute.xlu0 0
        %1538 = vperm.xlu0 %1537, %v1420
        %v1539 = vpop.permute.xlu0 %1538
        %1542 = vset.pattern.permute.xlu0 0
        %1543 = vperm.xlu0 %1542, %v1421
        %v1544 = vpop.permute.xlu0 %1543
        %1547 = vset.pattern.permute.xlu0 0
        %1548 = vperm.xlu0 %1547, %v1422
        %v1549 = vpop.permute.xlu0 %1548
        %1552 = vset.pattern.permute.xlu0 0
        %1553 = vperm.xlu0 %1552, %v1423
        %v1554 = vpop.permute.xlu0 %1553
        %1557 = vset.pattern.permute.xlu0 0
        %1558 = vperm.xlu0 %1557, %v1424
        %v1559 = vpop.permute.xlu0 %1558
        %1562 = vset.pattern.permute.xlu0 0
        %1563 = vperm.xlu0 %1562, %v1425
        %v1564 = vpop.permute.xlu0 %1563
        %1567 = vset.pattern.permute.xlu0 0
        %1568 = vperm.xlu0 %1567, %v1426
        %v1569 = vpop.permute.xlu0 %1568
        %1572 = vset.pattern.permute.xlu0 0
        %1573 = vperm.xlu0 %1572, %v1427
        %v1574 = vpop.permute.xlu0 %1573
        %1577 = vset.pattern.permute.xlu0 0
        %1578 = vperm.xlu0 %1577, %v1428
        %v1579 = vpop.permute.xlu0 %1578
        %1582 = vset.pattern.permute.xlu0 0
        %1583 = vperm.xlu0 %1582, %v1429
        %v1584 = vpop.permute.xlu0 %1583
        %1587 = vset.pattern.permute.xlu0 0
        %1588 = vperm.xlu0 %1587, %v1430
        %v1589 = vpop.permute.xlu0 %1588
        %v1591 = vmul.f32 %v1367, %v1434
        %v1592 = vmul.f32 %v1368, %v1439
        %v1593 = vmul.f32 %v1369, %v1444
        %v1594 = vmul.f32 %v1370, %v1449
        %v1595 = vmul.f32 %v1371, %v1454
        %v1596 = vmul.f32 %v1372, %v1459
        %v1597 = vmul.f32 %v1373, %v1464
        %v1598 = vmul.f32 %v1374, %v1469
        %v1599 = vmul.f32 %v1375, %v1474
        %v1600 = vmul.f32 %v1376, %v1479
        %v1601 = vmul.f32 %v1377, %v1484
        %v1602 = vmul.f32 %v1378, %v1489
        %v1603 = vmul.f32 %v1379, %v1494
        %v1604 = vmul.f32 %v1380, %v1499
        %v1605 = vmul.f32 %v1381, %v1504
        %v1606 = vmul.f32 %v1382, %v1509
        %v1607 = vmul.f32 %v1383, %v1514
        %v1608 = vmul.f32 %v1384, %v1519
        %v1609 = vmul.f32 %v1385, %v1524
        %v1610 = vmul.f32 %v1386, %v1529
        %v1611 = vmul.f32 %v1387, %v1534
        %v1612 = vmul.f32 %v1388, %v1539
        %v1613 = vmul.f32 %v1389, %v1544
        %v1614 = vmul.f32 %v1390, %v1549
        %v1615 = vmul.f32 %v1391, %v1554
        %v1616 = vmul.f32 %v1392, %v1559
        %v1617 = vmul.f32 %v1393, %v1564
        %v1618 = vmul.f32 %v1394, %v1569
        %v1619 = vmul.f32 %v1395, %v1574
        %v1620 = vmul.f32 %v1396, %v1579
        %v1621 = vmul.f32 %v1397, %v1584
        %v1622 = vmul.f32 %v1398, %v1589
        %v1623 = vadd.f32 %v1591, 0.0
        %v1624 = vadd.f32 %v1592, 0.0
        %v1625 = vadd.f32 %v1593, 0.0
        %v1626 = vadd.f32 %v1594, 0.0
        %v1627 = vadd.f32 %v1595, 0.0
        %v1628 = vadd.f32 %v1596, 0.0
        %v1629 = vadd.f32 %v1597, 0.0
        %v1630 = vadd.f32 %v1598, 0.0
        %v1631 = vadd.f32 %v1599, 0.0
        %v1632 = vadd.f32 %v1600, 0.0
        %v1633 = vadd.f32 %v1601, 0.0
        %v1634 = vadd.f32 %v1602, 0.0
        %v1635 = vadd.f32 %v1603, 0.0
        %v1636 = vadd.f32 %v1604, 0.0
        %v1637 = vadd.f32 %v1605, 0.0
        %v1638 = vadd.f32 %v1606, 0.0
        %v1639 = vadd.f32 %v1607, 0.0
        %v1640 = vadd.f32 %v1608, 0.0
        %v1641 = vadd.f32 %v1609, 0.0
        %v1642 = vadd.f32 %v1610, 0.0
        %v1643 = vadd.f32 %v1611, 0.0
        %v1644 = vadd.f32 %v1612, 0.0
        %v1645 = vadd.f32 %v1613, 0.0
        %v1646 = vadd.f32 %v1614, 0.0
        %v1647 = vadd.f32 %v1615, 0.0
        %v1648 = vadd.f32 %v1616, 0.0
        %v1649 = vadd.f32 %v1617, 0.0
        %v1650 = vadd.f32 %v1618, 0.0
        %v1651 = vadd.f32 %v1619, 0.0
        %v1652 = vadd.f32 %v1620, 0.0
        %v1653 = vadd.f32 %v1621, 0.0
        %v1654 = vadd.f32 %v1622, 0.0
        %v1655 = vld [vmem:[%s4 + $0x1] sm:$0x1]
        %v1656 = vlaneseq
        %v1657 = vshrl.u32 %v1656, 7
        %v1658 = vsub.s32 0, %v1657
        %v1659 = vrot.slane %v1655, %v1658
        %v1660 = vmul.f32 %v974, %v1659
        %v1661 = vmul.f32 %v975, %v1659
        %v1662 = vmul.f32 %v944, %v1659
        %v1663 = vmul.f32 %v945, %v1659
        %v1664 = vmul.f32 %v946, %v1659
        %v1665 = vmul.f32 %v947, %v1659
        %v1666 = vmul.f32 %v948, %v1659
        %v1667 = vmul.f32 %v949, %v1659
        %v1668 = vmul.f32 %v950, %v1659
        %v1669 = vmul.f32 %v951, %v1659
        %v1670 = vmul.f32 %v952, %v1659
        %v1671 = vmul.f32 %v953, %v1659
        %v1672 = vmul.f32 %v954, %v1659
        %v1673 = vmul.f32 %v955, %v1659
        %v1674 = vmul.f32 %v956, %v1659
        %v1675 = vmul.f32 %v957, %v1659
        %v1676 = vmul.f32 %v958, %v1659
        %v1677 = vmul.f32 %v959, %v1659
        %v1678 = vmul.f32 %v960, %v1659
        %v1679 = vmul.f32 %v961, %v1659
        %v1680 = vmul.f32 %v962, %v1659
        %v1681 = vmul.f32 %v963, %v1659
        %v1682 = vmul.f32 %v964, %v1659
        %v1683 = vmul.f32 %v965, %v1659
        %v1684 = vmul.f32 %v966, %v1659
        %v1685 = vmul.f32 %v967, %v1659
        %v1686 = vmul.f32 %v968, %v1659
        %v1687 = vmul.f32 %v969, %v1659
        %v1688 = vmul.f32 %v970, %v1659
        %v1689 = vmul.f32 %v971, %v1659
        %v1690 = vmul.f32 %v972, %v1659
        %v1691 = vmul.f32 %v973, %v1659
        %v1692 = vmul.f32 %v1660, %v1073
        %v1693 = vmul.f32 %v1661, %v1074
        %v1694 = vmul.f32 %v1662, %v1075
        %v1695 = vmul.f32 %v1663, %v1076
        %v1696 = vmul.f32 %v1664, %v1077
        %v1697 = vmul.f32 %v1665, %v1078
        %v1698 = vmul.f32 %v1666, %v1079
        %v1699 = vmul.f32 %v1667, %v1080
        %v1700 = vmul.f32 %v1668, %v1081
        %v1701 = vmul.f32 %v1669, %v1082
        %v1702 = vmul.f32 %v1670, %v1083
        %v1703 = vmul.f32 %v1671, %v1084
        %v1704 = vmul.f32 %v1672, %v1085
        %v1705 = vmul.f32 %v1673, %v1086
        %v1706 = vmul.f32 %v1674, %v1087
        %v1707 = vmul.f32 %v1675, %v1088
        %v1708 = vmul.f32 %v1676, %v1089
        %v1709 = vmul.f32 %v1677, %v1090
        %v1710 = vmul.f32 %v1678, %v1091
        %v1711 = vmul.f32 %v1679, %v1092
        %v1712 = vmul.f32 %v1680, %v1093
        %v1713 = vmul.f32 %v1681, %v1094
        %v1714 = vmul.f32 %v1682, %v1095
        %v1715 = vmul.f32 %v1683, %v1096
        %v1716 = vmul.f32 %v1684, %v1097
        %v1717 = vmul.f32 %v1685, %v1098
        %v1718 = vmul.f32 %v1686, %v1099
        %v1719 = vmul.f32 %v1687, %v1100
        %v1720 = vmul.f32 %v1688, %v1101
        %v1721 = vmul.f32 %v1689, %v1102
        %v1722 = vmul.f32 %v1690, %v1103
        %v1723 = vmul.f32 %v1691, %v1104
        %v1724 = vadd.f32 %v1623, %v1692
        %v1725 = vadd.f32 %v1624, %v1693
        %v1726 = vadd.f32 %v1625, %v1694
        %v1727 = vadd.f32 %v1626, %v1695
        %v1728 = vadd.f32 %v1627, %v1696
        %v1729 = vadd.f32 %v1628, %v1697
        %v1730 = vadd.f32 %v1629, %v1698
        %v1731 = vadd.f32 %v1630, %v1699
        %v1732 = vadd.f32 %v1631, %v1700
        %v1733 = vadd.f32 %v1632, %v1701
        %v1734 = vadd.f32 %v1633, %v1702
        %v1735 = vadd.f32 %v1634, %v1703
        %v1736 = vadd.f32 %v1635, %v1704
        %v1737 = vadd.f32 %v1636, %v1705
        %v1738 = vadd.f32 %v1637, %v1706
        %v1739 = vadd.f32 %v1638, %v1707
        %v1740 = vadd.f32 %v1639, %v1708
        %v1741 = vadd.f32 %v1640, %v1709
        %v1742 = vadd.f32 %v1641, %v1710
        %v1743 = vadd.f32 %v1642, %v1711
        %v1744 = vadd.f32 %v1643, %v1712
        %v1745 = vadd.f32 %v1644, %v1713
        %v1746 = vadd.f32 %v1645, %v1714
        %v1747 = vadd.f32 %v1646, %v1715
        %v1748 = vadd.f32 %v1647, %v1716
        %v1749 = vadd.f32 %v1648, %v1717
        %v1750 = vadd.f32 %v1649, %v1718
        %v1751 = vadd.f32 %v1650, %v1719
        %v1752 = vadd.f32 %v1651, %v1720
        %v1753 = vadd.f32 %v1652, %v1721
        %v1754 = vadd.f32 %v1653, %v1722
        %v1755 = vadd.f32 %v1654, %v1723
        %v1756 = vrot.slane %v944, 1
        %v1757 = vrot.slane %v945, 1
        %v1758 = vrot.slane %v946, 1
        %v1759 = vrot.slane %v947, 1
        %v1760 = vrot.slane %v948, 1
        %v1761 = vrot.slane %v949, 1
        %v1762 = vrot.slane %v950, 1
        %v1763 = vrot.slane %v951, 1
        %v1764 = vrot.slane %v952, 1
        %v1765 = vrot.slane %v953, 1
        %v1766 = vrot.slane %v954, 1
        %v1767 = vrot.slane %v955, 1
        %v1768 = vrot.slane %v956, 1
        %v1769 = vrot.slane %v957, 1
        %v1770 = vrot.slane %v958, 1
        %v1771 = vrot.slane %v959, 1
        %v1772 = vrot.slane %v960, 1
        %v1773 = vrot.slane %v961, 1
        %v1774 = vrot.slane %v962, 1
        %v1775 = vrot.slane %v963, 1
        %v1776 = vrot.slane %v964, 1
        %v1777 = vrot.slane %v965, 1
        %v1778 = vrot.slane %v966, 1
        %v1779 = vrot.slane %v967, 1
        %v1780 = vrot.slane %v968, 1
        %v1781 = vrot.slane %v969, 1
        %v1782 = vrot.slane %v970, 1
        %v1783 = vrot.slane %v971, 1
        %v1784 = vrot.slane %v972, 1
        %v1785 = vrot.slane %v973, 1
        %v1786 = vrot.slane %v974, 1
        %v1787 = vrot.slane %v975, 1
        %vm1788 = vcmp.lt.s32.totalorder %v977, 7
        %v1789 = vsel %vm1788, %v1786, %v1787
        %v1790 = vsel %vm1788, %v1785, %v1786
        %v1791 = vsel %vm1788, %v1784, %v1785
        %v1792 = vsel %vm1788, %v1783, %v1784
        %v1793 = vsel %vm1788, %v1782, %v1783
        %v1794 = vsel %vm1788, %v1781, %v1782
        %v1795 = vsel %vm1788, %v1780, %v1781
        %v1796 = vsel %vm1788, %v1779, %v1780
        %v1797 = vsel %vm1788, %v1778, %v1779
        %v1798 = vsel %vm1788, %v1777, %v1778
        %v1799 = vsel %vm1788, %v1776, %v1777
        %v1800 = vsel %vm1788, %v1775, %v1776
        %v1801 = vsel %vm1788, %v1774, %v1775
        %v1802 = vsel %vm1788, %v1773, %v1774
        %v1803 = vsel %vm1788, %v1772, %v1773
        %v1804 = vsel %vm1788, %v1771, %v1772
        %v1805 = vsel %vm1788, %v1770, %v1771
        %v1806 = vsel %vm1788, %v1769, %v1770
        %v1807 = vsel %vm1788, %v1768, %v1769
        %v1808 = vsel %vm1788, %v1767, %v1768
        %v1809 = vsel %vm1788, %v1766, %v1767
        %v1810 = vsel %vm1788, %v1765, %v1766
        %v1811 = vsel %vm1788, %v1764, %v1765
        %v1812 = vsel %vm1788, %v1763, %v1764
        %v1813 = vsel %vm1788, %v1762, %v1763
        %v1814 = vsel %vm1788, %v1761, %v1762
        %v1815 = vsel %vm1788, %v1760, %v1761
        %v1816 = vsel %vm1788, %v1759, %v1760
        %v1817 = vsel %vm1788, %v1758, %v1759
        %v1818 = vsel %vm1788, %v1757, %v1758
        %v1819 = vsel %vm1788, %v1756, %v1757
        %v1820 = vsel %vm1788, %v1787, %v1756
        %v1821 = vld [vmem:[%s4 + $0x2] sm:$0x1]
        %v1822 = vlaneseq
        %v1823 = vshrl.u32 %v1822, 7
        %v1824 = vsub.s32 0, %v1823
        %v1825 = vrot.slane %v1821, %v1824
        %v1826 = vmul.f32 %v1789, %v1825
        %v1827 = vmul.f32 %v1820, %v1825
        %v1828 = vmul.f32 %v1819, %v1825
        %v1829 = vmul.f32 %v1818, %v1825
        %v1830 = vmul.f32 %v1817, %v1825
        %v1831 = vmul.f32 %v1816, %v1825
        %v1832 = vmul.f32 %v1815, %v1825
        %v1833 = vmul.f32 %v1814, %v1825
        %v1834 = vmul.f32 %v1813, %v1825
        %v1835 = vmul.f32 %v1812, %v1825
        %v1836 = vmul.f32 %v1811, %v1825
        %v1837 = vmul.f32 %v1810, %v1825
        %v1838 = vmul.f32 %v1809, %v1825
        %v1839 = vmul.f32 %v1808, %v1825
        %v1840 = vmul.f32 %v1807, %v1825
        %v1841 = vmul.f32 %v1806, %v1825
        %v1842 = vmul.f32 %v1805, %v1825
        %v1843 = vmul.f32 %v1804, %v1825
        %v1844 = vmul.f32 %v1803, %v1825
        %v1845 = vmul.f32 %v1802, %v1825
        %v1846 = vmul.f32 %v1801, %v1825
        %v1847 = vmul.f32 %v1800, %v1825
        %v1848 = vmul.f32 %v1799, %v1825
        %v1849 = vmul.f32 %v1798, %v1825
        %v1850 = vmul.f32 %v1797, %v1825
        %v1851 = vmul.f32 %v1796, %v1825
        %v1852 = vmul.f32 %v1795, %v1825
        %v1853 = vmul.f32 %v1794, %v1825
        %v1854 = vmul.f32 %v1793, %v1825
        %v1855 = vmul.f32 %v1792, %v1825
        %v1856 = vmul.f32 %v1791, %v1825
        %v1857 = vmul.f32 %v1790, %v1825
        %v1858 = vmul.f32 %v1073, %v1265
        %v1859 = vmul.f32 %v1074, %v1266
        %v1860 = vmul.f32 %v1075, %v1267
        %v1861 = vmul.f32 %v1076, %v1268
        %v1862 = vmul.f32 %v1077, %v1269
        %v1863 = vmul.f32 %v1078, %v1270
        %v1864 = vmul.f32 %v1079, %v1271
        %v1865 = vmul.f32 %v1080, %v1272
        %v1866 = vmul.f32 %v1081, %v1273
        %v1867 = vmul.f32 %v1082, %v1274
        %v1868 = vmul.f32 %v1083, %v1275
        %v1869 = vmul.f32 %v1084, %v1276
        %v1870 = vmul.f32 %v1085, %v1277
        %v1871 = vmul.f32 %v1086, %v1278
        %v1872 = vmul.f32 %v1087, %v1279
        %v1873 = vmul.f32 %v1088, %v1280
        %v1874 = vmul.f32 %v1089, %v1281
        %v1875 = vmul.f32 %v1090, %v1282
        %v1876 = vmul.f32 %v1091, %v1283
        %v1877 = vmul.f32 %v1092, %v1284
        %v1878 = vmul.f32 %v1093, %v1285
        %v1879 = vmul.f32 %v1094, %v1286
        %v1880 = vmul.f32 %v1095, %v1287
        %v1881 = vmul.f32 %v1096, %v1288
        %v1882 = vmul.f32 %v1097, %v1289
        %v1883 = vmul.f32 %v1098, %v1290
        %v1884 = vmul.f32 %v1099, %v1291
        %v1885 = vmul.f32 %v1100, %v1292
        %v1886 = vmul.f32 %v1101, %v1293
        %v1887 = vmul.f32 %v1102, %v1294
        %v1888 = vmul.f32 %v1103, %v1295
        %v1889 = vmul.f32 %v1104, %v1296
        %1891 = vset.pattern.permute.xlu0 0
        %1892 = vperm.xlu0 %1891, %v1858
        %v1893 = vpop.permute.xlu0 %1892
        %1896 = vset.pattern.permute.xlu0 0
        %1897 = vperm.xlu0 %1896, %v1859
        %v1898 = vpop.permute.xlu0 %1897
        %1901 = vset.pattern.permute.xlu0 0
        %1902 = vperm.xlu0 %1901, %v1860
        %v1903 = vpop.permute.xlu0 %1902
        %1906 = vset.pattern.permute.xlu0 0
        %1907 = vperm.xlu0 %1906, %v1861
        %v1908 = vpop.permute.xlu0 %1907
        %1911 = vset.pattern.permute.xlu0 0
        %1912 = vperm.xlu0 %1911, %v1862
        %v1913 = vpop.permute.xlu0 %1912
        %1916 = vset.pattern.permute.xlu0 0
        %1917 = vperm.xlu0 %1916, %v1863
        %v1918 = vpop.permute.xlu0 %1917
        %1921 = vset.pattern.permute.xlu0 0
        %1922 = vperm.xlu0 %1921, %v1864
        %v1923 = vpop.permute.xlu0 %1922
        %1926 = vset.pattern.permute.xlu0 0
        %1927 = vperm.xlu0 %1926, %v1865
        %v1928 = vpop.permute.xlu0 %1927
        %1931 = vset.pattern.permute.xlu0 0
        %1932 = vperm.xlu0 %1931, %v1866
        %v1933 = vpop.permute.xlu0 %1932
        %1936 = vset.pattern.permute.xlu0 0
        %1937 = vperm.xlu0 %1936, %v1867
        %v1938 = vpop.permute.xlu0 %1937
        %1941 = vset.pattern.permute.xlu0 0
        %1942 = vperm.xlu0 %1941, %v1868
        %v1943 = vpop.permute.xlu0 %1942
        %1946 = vset.pattern.permute.xlu0 0
        %1947 = vperm.xlu0 %1946, %v1869
        %v1948 = vpop.permute.xlu0 %1947
        %1951 = vset.pattern.permute.xlu0 0
        %1952 = vperm.xlu0 %1951, %v1870
        %v1953 = vpop.permute.xlu0 %1952
        %1956 = vset.pattern.permute.xlu0 0
        %1957 = vperm.xlu0 %1956, %v1871
        %v1958 = vpop.permute.xlu0 %1957
        %1961 = vset.pattern.permute.xlu0 0
        %1962 = vperm.xlu0 %1961, %v1872
        %v1963 = vpop.permute.xlu0 %1962
        %1966 = vset.pattern.permute.xlu0 0
        %1967 = vperm.xlu0 %1966, %v1873
        %v1968 = vpop.permute.xlu0 %1967
        %1971 = vset.pattern.permute.xlu0 0
        %1972 = vperm.xlu0 %1971, %v1874
        %v1973 = vpop.permute.xlu0 %1972
        %1976 = vset.pattern.permute.xlu0 0
        %1977 = vperm.xlu0 %1976, %v1875
        %v1978 = vpop.permute.xlu0 %1977
        %1981 = vset.pattern.permute.xlu0 0
        %1982 = vperm.xlu0 %1981, %v1876
        %v1983 = vpop.permute.xlu0 %1982
        %1986 = vset.pattern.permute.xlu0 0
        %1987 = vperm.xlu0 %1986, %v1877
        %v1988 = vpop.permute.xlu0 %1987
        %1991 = vset.pattern.permute.xlu0 0
        %1992 = vperm.xlu0 %1991, %v1878
        %v1993 = vpop.permute.xlu0 %1992
        %1996 = vset.pattern.permute.xlu0 0
        %1997 = vperm.xlu0 %1996, %v1879
        %v1998 = vpop.permute.xlu0 %1997
        %2001 = vset.pattern.permute.xlu0 0
        %2002 = vperm.xlu0 %2001, %v1880
        %v2003 = vpop.permute.xlu0 %2002
        %2006 = vset.pattern.permute.xlu0 0
        %2007 = vperm.xlu0 %2006, %v1881
        %v2008 = vpop.permute.xlu0 %2007
        %2011 = vset.pattern.permute.xlu0 0
        %2012 = vperm.xlu0 %2011, %v1882
        %v2013 = vpop.permute.xlu0 %2012
        %2016 = vset.pattern.permute.xlu0 0
        %2017 = vperm.xlu0 %2016, %v1883
        %v2018 = vpop.permute.xlu0 %2017
        %2021 = vset.pattern.permute.xlu0 0
        %2022 = vperm.xlu0 %2021, %v1884
        %v2023 = vpop.permute.xlu0 %2022
        %2026 = vset.pattern.permute.xlu0 0
        %2027 = vperm.xlu0 %2026, %v1885
        %v2028 = vpop.permute.xlu0 %2027
        %2031 = vset.pattern.permute.xlu0 0
        %2032 = vperm.xlu0 %2031, %v1886
        %v2033 = vpop.permute.xlu0 %2032
        %2036 = vset.pattern.permute.xlu0 0
        %2037 = vperm.xlu0 %2036, %v1887
        %v2038 = vpop.permute.xlu0 %2037
        %2041 = vset.pattern.permute.xlu0 0
        %2042 = vperm.xlu0 %2041, %v1888
        %v2043 = vpop.permute.xlu0 %2042
        %2046 = vset.pattern.permute.xlu0 0
        %2047 = vperm.xlu0 %2046, %v1889
        %v2048 = vpop.permute.xlu0 %2047
        %v2050 = vmul.f32 %v1826, %v1893
        %v2051 = vmul.f32 %v1827, %v1898
        %v2052 = vmul.f32 %v1828, %v1903
        %v2053 = vmul.f32 %v1829, %v1908
        %v2054 = vmul.f32 %v1830, %v1913
        %v2055 = vmul.f32 %v1831, %v1918
        %v2056 = vmul.f32 %v1832, %v1923
        %v2057 = vmul.f32 %v1833, %v1928
        %v2058 = vmul.f32 %v1834, %v1933
        %v2059 = vmul.f32 %v1835, %v1938
        %v2060 = vmul.f32 %v1836, %v1943
        %v2061 = vmul.f32 %v1837, %v1948
        %v2062 = vmul.f32 %v1838, %v1953
        %v2063 = vmul.f32 %v1839, %v1958
        %v2064 = vmul.f32 %v1840, %v1963
        %v2065 = vmul.f32 %v1841, %v1968
        %v2066 = vmul.f32 %v1842, %v1973
        %v2067 = vmul.f32 %v1843, %v1978
        %v2068 = vmul.f32 %v1844, %v1983
        %v2069 = vmul.f32 %v1845, %v1988
        %v2070 = vmul.f32 %v1846, %v1993
        %v2071 = vmul.f32 %v1847, %v1998
        %v2072 = vmul.f32 %v1848, %v2003
        %v2073 = vmul.f32 %v1849, %v2008
        %v2074 = vmul.f32 %v1850, %v2013
        %v2075 = vmul.f32 %v1851, %v2018
        %v2076 = vmul.f32 %v1852, %v2023
        %v2077 = vmul.f32 %v1853, %v2028
        %v2078 = vmul.f32 %v1854, %v2033
        %v2079 = vmul.f32 %v1855, %v2038
        %v2080 = vmul.f32 %v1856, %v2043
        %v2081 = vmul.f32 %v1857, %v2048
        %v2082 = vadd.f32 %v1724, %v2050
        %v2083 = vadd.f32 %v1725, %v2051
        %v2084 = vadd.f32 %v1726, %v2052
        %v2085 = vadd.f32 %v1727, %v2053
        %v2086 = vadd.f32 %v1728, %v2054
        %v2087 = vadd.f32 %v1729, %v2055
        %v2088 = vadd.f32 %v1730, %v2056
        %v2089 = vadd.f32 %v1731, %v2057
        %v2090 = vadd.f32 %v1732, %v2058
        %v2091 = vadd.f32 %v1733, %v2059
        %v2092 = vadd.f32 %v1734, %v2060
        %v2093 = vadd.f32 %v1735, %v2061
        %v2094 = vadd.f32 %v1736, %v2062
        %v2095 = vadd.f32 %v1737, %v2063
        %v2096 = vadd.f32 %v1738, %v2064
        %v2097 = vadd.f32 %v1739, %v2065
        %v2098 = vadd.f32 %v1740, %v2066
        %v2099 = vadd.f32 %v1741, %v2067
        %v2100 = vadd.f32 %v1742, %v2068
        %v2101 = vadd.f32 %v1743, %v2069
        %v2102 = vadd.f32 %v1744, %v2070
        %v2103 = vadd.f32 %v1745, %v2071
        %v2104 = vadd.f32 %v1746, %v2072
        %v2105 = vadd.f32 %v1747, %v2073
        %v2106 = vadd.f32 %v1748, %v2074
        %v2107 = vadd.f32 %v1749, %v2075
        %v2108 = vadd.f32 %v1750, %v2076
        %v2109 = vadd.f32 %v1751, %v2077
        %v2110 = vadd.f32 %v1752, %v2078
        %v2111 = vadd.f32 %v1753, %v2079
        %v2112 = vadd.f32 %v1754, %v2080
        %v2113 = vadd.f32 %v1755, %v2081
        %v2114 = vld [vmem:[%s4 + $0x3] sm:$0x1]
        %v2115 = vlaneseq
        %v2116 = vshrl.u32 %v2115, 7
        %v2117 = vsub.s32 0, %v2116
        %v2118 = vrot.slane %v2114, %v2117
        %v2119 = vmul.f32 %v1361, %v2118
        %v2120 = vmul.f32 %v1360, %v2118
        %v2121 = vmul.f32 %v1359, %v2118
        %v2122 = vmul.f32 %v1358, %v2118
        %v2123 = vmul.f32 %v1357, %v2118
        %v2124 = vmul.f32 %v1356, %v2118
        %v2125 = vmul.f32 %v1355, %v2118
        %v2126 = vmul.f32 %v1354, %v2118
        %v2127 = vmul.f32 %v1353, %v2118
        %v2128 = vmul.f32 %v1352, %v2118
        %v2129 = vmul.f32 %v1351, %v2118
        %v2130 = vmul.f32 %v1350, %v2118
        %v2131 = vmul.f32 %v1349, %v2118
        %v2132 = vmul.f32 %v1348, %v2118
        %v2133 = vmul.f32 %v1347, %v2118
        %v2134 = vmul.f32 %v1346, %v2118
        %v2135 = vmul.f32 %v1345, %v2118
        %v2136 = vmul.f32 %v1344, %v2118
        %v2137 = vmul.f32 %v1343, %v2118
        %v2138 = vmul.f32 %v1342, %v2118
        %v2139 = vmul.f32 %v1341, %v2118
        %v2140 = vmul.f32 %v1340, %v2118
        %v2141 = vmul.f32 %v1339, %v2118
        %v2142 = vmul.f32 %v1338, %v2118
        %v2143 = vmul.f32 %v1337, %v2118
        %v2144 = vmul.f32 %v1336, %v2118
        %v2145 = vmul.f32 %v1335, %v2118
        %v2146 = vmul.f32 %v1334, %v2118
        %v2147 = vmul.f32 %v1333, %v2118
        %v2148 = vmul.f32 %v1332, %v2118
        %v2149 = vmul.f32 %v1331, %v2118
        %v2150 = vmul.f32 %v1330, %v2118
        %2152 = vset.pattern.permute.xlu0 0
        %2153 = vperm.xlu0 %2152, %v1201
        %v2154 = vpop.permute.xlu0 %2153
        %2157 = vset.pattern.permute.xlu0 0
        %2158 = vperm.xlu0 %2157, %v1202
        %v2159 = vpop.permute.xlu0 %2158
        %2162 = vset.pattern.permute.xlu0 0
        %2163 = vperm.xlu0 %2162, %v1203
        %v2164 = vpop.permute.xlu0 %2163
        %2167 = vset.pattern.permute.xlu0 0
        %2168 = vperm.xlu0 %2167, %v1204
        %v2169 = vpop.permute.xlu0 %2168
        %2172 = vset.pattern.permute.xlu0 0
        %2173 = vperm.xlu0 %2172, %v1205
        %v2174 = vpop.permute.xlu0 %2173
        %2177 = vset.pattern.permute.xlu0 0
        %2178 = vperm.xlu0 %2177, %v1206
        %v2179 = vpop.permute.xlu0 %2178
        %2182 = vset.pattern.permute.xlu0 0
        %2183 = vperm.xlu0 %2182, %v1207
        %v2184 = vpop.permute.xlu0 %2183
        %2187 = vset.pattern.permute.xlu0 0
        %2188 = vperm.xlu0 %2187, %v1208
        %v2189 = vpop.permute.xlu0 %2188
        %2192 = vset.pattern.permute.xlu0 0
        %2193 = vperm.xlu0 %2192, %v1209
        %v2194 = vpop.permute.xlu0 %2193
        %2197 = vset.pattern.permute.xlu0 0
        %2198 = vperm.xlu0 %2197, %v1210
        %v2199 = vpop.permute.xlu0 %2198
        %2202 = vset.pattern.permute.xlu0 0
        %2203 = vperm.xlu0 %2202, %v1211
        %v2204 = vpop.permute.xlu0 %2203
        %2207 = vset.pattern.permute.xlu0 0
        %2208 = vperm.xlu0 %2207, %v1212
        %v2209 = vpop.permute.xlu0 %2208
        %2212 = vset.pattern.permute.xlu0 0
        %2213 = vperm.xlu0 %2212, %v1213
        %v2214 = vpop.permute.xlu0 %2213
        %2217 = vset.pattern.permute.xlu0 0
        %2218 = vperm.xlu0 %2217, %v1214
        %v2219 = vpop.permute.xlu0 %2218
        %2222 = vset.pattern.permute.xlu0 0
        %2223 = vperm.xlu0 %2222, %v1215
        %v2224 = vpop.permute.xlu0 %2223
        %2227 = vset.pattern.permute.xlu0 0
        %2228 = vperm.xlu0 %2227, %v1216
        %v2229 = vpop.permute.xlu0 %2228
        %2232 = vset.pattern.permute.xlu0 0
        %2233 = vperm.xlu0 %2232, %v1217
        %v2234 = vpop.permute.xlu0 %2233
        %2237 = vset.pattern.permute.xlu0 0
        %2238 = vperm.xlu0 %2237, %v1218
        %v2239 = vpop.permute.xlu0 %2238
        %2242 = vset.pattern.permute.xlu0 0
        %2243 = vperm.xlu0 %2242, %v1219
        %v2244 = vpop.permute.xlu0 %2243
        %2247 = vset.pattern.permute.xlu0 0
        %2248 = vperm.xlu0 %2247, %v1220
        %v2249 = vpop.permute.xlu0 %2248
        %2252 = vset.pattern.permute.xlu0 0
        %2253 = vperm.xlu0 %2252, %v1221
        %v2254 = vpop.permute.xlu0 %2253
        %2257 = vset.pattern.permute.xlu0 0
        %2258 = vperm.xlu0 %2257, %v1222
        %v2259 = vpop.permute.xlu0 %2258
        %2262 = vset.pattern.permute.xlu0 0
        %2263 = vperm.xlu0 %2262, %v1223
        %v2264 = vpop.permute.xlu0 %2263
        %2267 = vset.pattern.permute.xlu0 0
        %2268 = vperm.xlu0 %2267, %v1224
        %v2269 = vpop.permute.xlu0 %2268
        %2272 = vset.pattern.permute.xlu0 0
        %2273 = vperm.xlu0 %2272, %v1225
        %v2274 = vpop.permute.xlu0 %2273
        %2277 = vset.pattern.permute.xlu0 0
        %2278 = vperm.xlu0 %2277, %v1226
        %v2279 = vpop.permute.xlu0 %2278
        %2282 = vset.pattern.permute.xlu0 0
        %2283 = vperm.xlu0 %2282, %v1227
        %v2284 = vpop.permute.xlu0 %2283
        %2287 = vset.pattern.permute.xlu0 0
        %2288 = vperm.xlu0 %2287, %v1228
        %v2289 = vpop.permute.xlu0 %2288
        %2292 = vset.pattern.permute.xlu0 0
        %2293 = vperm.xlu0 %2292, %v1229
        %v2294 = vpop.permute.xlu0 %2293
        %2297 = vset.pattern.permute.xlu0 0
        %2298 = vperm.xlu0 %2297, %v1230
        %v2299 = vpop.permute.xlu0 %2298
        %2302 = vset.pattern.permute.xlu0 0
        %2303 = vperm.xlu0 %2302, %v1231
        %v2304 = vpop.permute.xlu0 %2303
        %2307 = vset.pattern.permute.xlu0 0
        %2308 = vperm.xlu0 %2307, %v1232
        %v2309 = vpop.permute.xlu0 %2308
        %v2311 = vmul.f32 %v2119, %v2154
        %v2312 = vmul.f32 %v2120, %v2159
        %v2313 = vmul.f32 %v2121, %v2164
        %v2314 = vmul.f32 %v2122, %v2169
        %v2315 = vmul.f32 %v2123, %v2174
        %v2316 = vmul.f32 %v2124, %v2179
        %v2317 = vmul.f32 %v2125, %v2184
        %v2318 = vmul.f32 %v2126, %v2189
        %v2319 = vmul.f32 %v2127, %v2194
        %v2320 = vmul.f32 %v2128, %v2199
        %v2321 = vmul.f32 %v2129, %v2204
        %v2322 = vmul.f32 %v2130, %v2209
        %v2323 = vmul.f32 %v2131, %v2214
        %v2324 = vmul.f32 %v2132, %v2219
        %v2325 = vmul.f32 %v2133, %v2224
        %v2326 = vmul.f32 %v2134, %v2229
        %v2327 = vmul.f32 %v2135, %v2234
        %v2328 = vmul.f32 %v2136, %v2239
        %v2329 = vmul.f32 %v2137, %v2244
        %v2330 = vmul.f32 %v2138, %v2249
        %v2331 = vmul.f32 %v2139, %v2254
        %v2332 = vmul.f32 %v2140, %v2259
        %v2333 = vmul.f32 %v2141, %v2264
        %v2334 = vmul.f32 %v2142, %v2269
        %v2335 = vmul.f32 %v2143, %v2274
        %v2336 = vmul.f32 %v2144, %v2279
        %v2337 = vmul.f32 %v2145, %v2284
        %v2338 = vmul.f32 %v2146, %v2289
        %v2339 = vmul.f32 %v2147, %v2294
        %v2340 = vmul.f32 %v2148, %v2299
        %v2341 = vmul.f32 %v2149, %v2304
        %v2342 = vmul.f32 %v2150, %v2309
        %v2343 = vadd.f32 %v2082, %v2311
        %v2344 = vadd.f32 %v2083, %v2312
        %v2345 = vadd.f32 %v2084, %v2313
        %v2346 = vadd.f32 %v2085, %v2314
        %v2347 = vadd.f32 %v2086, %v2315
        %v2348 = vadd.f32 %v2087, %v2316
        %v2349 = vadd.f32 %v2088, %v2317
        %v2350 = vadd.f32 %v2089, %v2318
        %v2351 = vadd.f32 %v2090, %v2319
        %v2352 = vadd.f32 %v2091, %v2320
        %v2353 = vadd.f32 %v2092, %v2321
        %v2354 = vadd.f32 %v2093, %v2322
        %v2355 = vadd.f32 %v2094, %v2323
        %v2356 = vadd.f32 %v2095, %v2324
        %v2357 = vadd.f32 %v2096, %v2325
        %v2358 = vadd.f32 %v2097, %v2326
        %v2359 = vadd.f32 %v2098, %v2327
        %v2360 = vadd.f32 %v2099, %v2328
        %v2361 = vadd.f32 %v2100, %v2329
        %v2362 = vadd.f32 %v2101, %v2330
        %v2363 = vadd.f32 %v2102, %v2331
        %v2364 = vadd.f32 %v2103, %v2332
        %v2365 = vadd.f32 %v2104, %v2333
        %v2366 = vadd.f32 %v2105, %v2334
        %v2367 = vadd.f32 %v2106, %v2335
        %v2368 = vadd.f32 %v2107, %v2336
        %v2369 = vadd.f32 %v2108, %v2337
        %v2370 = vadd.f32 %v2109, %v2338
        %v2371 = vadd.f32 %v2110, %v2339
        %v2372 = vadd.f32 %v2111, %v2340
        %v2373 = vadd.f32 %v2112, %v2341
        %v2374 = vadd.f32 %v2113, %v2342
        %v2375 = vld [vmem:[%s4 + $0x4] sm:$0x1]
        %v2376 = vlaneseq
        %v2377 = vshrl.u32 %v2376, 7
        %v2378 = vsub.s32 0, %v2377
        %v2379 = vrot.slane %v2375, %v2378
        %v2380 = vmul.f32 %v944, %v2379
        %v2381 = vmul.f32 %v945, %v2379
        %v2382 = vmul.f32 %v946, %v2379
        %v2383 = vmul.f32 %v947, %v2379
        %v2384 = vmul.f32 %v948, %v2379
        %v2385 = vmul.f32 %v949, %v2379
        %v2386 = vmul.f32 %v950, %v2379
        %v2387 = vmul.f32 %v951, %v2379
        %v2388 = vmul.f32 %v952, %v2379
        %v2389 = vmul.f32 %v953, %v2379
        %v2390 = vmul.f32 %v954, %v2379
        %v2391 = vmul.f32 %v955, %v2379
        %v2392 = vmul.f32 %v956, %v2379
        %v2393 = vmul.f32 %v957, %v2379
        %v2394 = vmul.f32 %v958, %v2379
        %v2395 = vmul.f32 %v959, %v2379
        %v2396 = vmul.f32 %v960, %v2379
        %v2397 = vmul.f32 %v961, %v2379
        %v2398 = vmul.f32 %v962, %v2379
        %v2399 = vmul.f32 %v963, %v2379
        %v2400 = vmul.f32 %v964, %v2379
        %v2401 = vmul.f32 %v965, %v2379
        %v2402 = vmul.f32 %v966, %v2379
        %v2403 = vmul.f32 %v967, %v2379
        %v2404 = vmul.f32 %v968, %v2379
        %v2405 = vmul.f32 %v969, %v2379
        %v2406 = vmul.f32 %v970, %v2379
        %v2407 = vmul.f32 %v971, %v2379
        %v2408 = vmul.f32 %v972, %v2379
        %v2409 = vmul.f32 %v973, %v2379
        %v2410 = vmul.f32 %v974, %v2379
        %v2411 = vmul.f32 %v975, %v2379
        %v2412 = vadd.f32 %v2343, %v2380
        %v2413 = vadd.f32 %v2344, %v2381
        %v2414 = vadd.f32 %v2345, %v2382
        %v2415 = vadd.f32 %v2346, %v2383
        %v2416 = vadd.f32 %v2347, %v2384
        %v2417 = vadd.f32 %v2348, %v2385
        %v2418 = vadd.f32 %v2349, %v2386
        %v2419 = vadd.f32 %v2350, %v2387
        %v2420 = vadd.f32 %v2351, %v2388
        %v2421 = vadd.f32 %v2352, %v2389
        %v2422 = vadd.f32 %v2353, %v2390
        %v2423 = vadd.f32 %v2354, %v2391
        %v2424 = vadd.f32 %v2355, %v2392
        %v2425 = vadd.f32 %v2356, %v2393
        %v2426 = vadd.f32 %v2357, %v2394
        %v2427 = vadd.f32 %v2358, %v2395
        %v2428 = vadd.f32 %v2359, %v2396
        %v2429 = vadd.f32 %v2360, %v2397
        %v2430 = vadd.f32 %v2361, %v2398
        %v2431 = vadd.f32 %v2362, %v2399
        %v2432 = vadd.f32 %v2363, %v2400
        %v2433 = vadd.f32 %v2364, %v2401
        %v2434 = vadd.f32 %v2365, %v2402
        %v2435 = vadd.f32 %v2366, %v2403
        %v2436 = vadd.f32 %v2367, %v2404
        %v2437 = vadd.f32 %v2368, %v2405
        %v2438 = vadd.f32 %v2369, %v2406
        %v2439 = vadd.f32 %v2370, %v2407
        %v2440 = vadd.f32 %v2371, %v2408
        %v2441 = vadd.f32 %v2372, %v2409
        %v2442 = vadd.f32 %v2373, %v2410
        %v2443 = vadd.f32 %v2374, %v2411
        %v2444 = vld [vmem:[%s4 + $0x5] sm:$0x1]
        %v2445 = vlaneseq
        %v2446 = vshrl.u32 %v2445, 7
        %v2447 = vsub.s32 0, %v2446
        %v2448 = vrot.slane %v2444, %v2447
        %v2449 = vmul.f32 %v1819, %v2448
        %v2450 = vmul.f32 %v1818, %v2448
        %v2451 = vmul.f32 %v1817, %v2448
        %v2452 = vmul.f32 %v1816, %v2448
        %v2453 = vmul.f32 %v1815, %v2448
        %v2454 = vmul.f32 %v1814, %v2448
        %v2455 = vmul.f32 %v1813, %v2448
        %v2456 = vmul.f32 %v1812, %v2448
        %v2457 = vmul.f32 %v1811, %v2448
        %v2458 = vmul.f32 %v1810, %v2448
        %v2459 = vmul.f32 %v1809, %v2448
        %v2460 = vmul.f32 %v1808, %v2448
        %v2461 = vmul.f32 %v1807, %v2448
        %v2462 = vmul.f32 %v1806, %v2448
        %v2463 = vmul.f32 %v1805, %v2448
        %v2464 = vmul.f32 %v1804, %v2448
        %v2465 = vmul.f32 %v1803, %v2448
        %v2466 = vmul.f32 %v1802, %v2448
        %v2467 = vmul.f32 %v1801, %v2448
        %v2468 = vmul.f32 %v1800, %v2448
        %v2469 = vmul.f32 %v1799, %v2448
        %v2470 = vmul.f32 %v1798, %v2448
        %v2471 = vmul.f32 %v1797, %v2448
        %v2472 = vmul.f32 %v1796, %v2448
        %v2473 = vmul.f32 %v1795, %v2448
        %v2474 = vmul.f32 %v1794, %v2448
        %v2475 = vmul.f32 %v1793, %v2448
        %v2476 = vmul.f32 %v1792, %v2448
        %v2477 = vmul.f32 %v1791, %v2448
        %v2478 = vmul.f32 %v1790, %v2448
        %v2479 = vmul.f32 %v1789, %v2448
        %v2480 = vmul.f32 %v1820, %v2448
        %2482 = vset.pattern.permute.xlu0 0
        %2483 = vperm.xlu0 %2482, %v1265
        %v2484 = vpop.permute.xlu0 %2483
        %2487 = vset.pattern.permute.xlu0 0
        %2488 = vperm.xlu0 %2487, %v1266
        %v2489 = vpop.permute.xlu0 %2488
        %2492 = vset.pattern.permute.xlu0 0
        %2493 = vperm.xlu0 %2492, %v1267
        %v2494 = vpop.permute.xlu0 %2493
        %2497 = vset.pattern.permute.xlu0 0
        %2498 = vperm.xlu0 %2497, %v1268
        %v2499 = vpop.permute.xlu0 %2498
        %2502 = vset.pattern.permute.xlu0 0
        %2503 = vperm.xlu0 %2502, %v1269
        %v2504 = vpop.permute.xlu0 %2503
        %2507 = vset.pattern.permute.xlu0 0
        %2508 = vperm.xlu0 %2507, %v1270
        %v2509 = vpop.permute.xlu0 %2508
        %2512 = vset.pattern.permute.xlu0 0
        %2513 = vperm.xlu0 %2512, %v1271
        %v2514 = vpop.permute.xlu0 %2513
        %2517 = vset.pattern.permute.xlu0 0
        %2518 = vperm.xlu0 %2517, %v1272
        %v2519 = vpop.permute.xlu0 %2518
        %2522 = vset.pattern.permute.xlu0 0
        %2523 = vperm.xlu0 %2522, %v1273
        %v2524 = vpop.permute.xlu0 %2523
        %2527 = vset.pattern.permute.xlu0 0
        %2528 = vperm.xlu0 %2527, %v1274
        %v2529 = vpop.permute.xlu0 %2528
        %2532 = vset.pattern.permute.xlu0 0
        %2533 = vperm.xlu0 %2532, %v1275
        %v2534 = vpop.permute.xlu0 %2533
        %2537 = vset.pattern.permute.xlu0 0
        %2538 = vperm.xlu0 %2537, %v1276
        %v2539 = vpop.permute.xlu0 %2538
        %2542 = vset.pattern.permute.xlu0 0
        %2543 = vperm.xlu0 %2542, %v1277
        %v2544 = vpop.permute.xlu0 %2543
        %2547 = vset.pattern.permute.xlu0 0
        %2548 = vperm.xlu0 %2547, %v1278
        %v2549 = vpop.permute.xlu0 %2548
        %2552 = vset.pattern.permute.xlu0 0
        %2553 = vperm.xlu0 %2552, %v1279
        %v2554 = vpop.permute.xlu0 %2553
        %2557 = vset.pattern.permute.xlu0 0
        %2558 = vperm.xlu0 %2557, %v1280
        %v2559 = vpop.permute.xlu0 %2558
        %2562 = vset.pattern.permute.xlu0 0
        %2563 = vperm.xlu0 %2562, %v1281
        %v2564 = vpop.permute.xlu0 %2563
        %2567 = vset.pattern.permute.xlu0 0
        %2568 = vperm.xlu0 %2567, %v1282
        %v2569 = vpop.permute.xlu0 %2568
        %2572 = vset.pattern.permute.xlu0 0
        %2573 = vperm.xlu0 %2572, %v1283
        %v2574 = vpop.permute.xlu0 %2573
        %2577 = vset.pattern.permute.xlu0 0
        %2578 = vperm.xlu0 %2577, %v1284
        %v2579 = vpop.permute.xlu0 %2578
        %2582 = vset.pattern.permute.xlu0 0
        %2583 = vperm.xlu0 %2582, %v1285
        %v2584 = vpop.permute.xlu0 %2583
        %2587 = vset.pattern.permute.xlu0 0
        %2588 = vperm.xlu0 %2587, %v1286
        %v2589 = vpop.permute.xlu0 %2588
        %2592 = vset.pattern.permute.xlu0 0
        %2593 = vperm.xlu0 %2592, %v1287
        %v2594 = vpop.permute.xlu0 %2593
        %2597 = vset.pattern.permute.xlu0 0
        %2598 = vperm.xlu0 %2597, %v1288
        %v2599 = vpop.permute.xlu0 %2598
        %2602 = vset.pattern.permute.xlu0 0
        %2603 = vperm.xlu0 %2602, %v1289
        %v2604 = vpop.permute.xlu0 %2603
        %2607 = vset.pattern.permute.xlu0 0
        %2608 = vperm.xlu0 %2607, %v1290
        %v2609 = vpop.permute.xlu0 %2608
        %2612 = vset.pattern.permute.xlu0 0
        %2613 = vperm.xlu0 %2612, %v1291
        %v2614 = vpop.permute.xlu0 %2613
        %2617 = vset.pattern.permute.xlu0 0
        %2618 = vperm.xlu0 %2617, %v1292
        %v2619 = vpop.permute.xlu0 %2618
        %2622 = vset.pattern.permute.xlu0 0
        %2623 = vperm.xlu0 %2622, %v1293
        %v2624 = vpop.permute.xlu0 %2623
        %2627 = vset.pattern.permute.xlu0 0
        %2628 = vperm.xlu0 %2627, %v1294
        %v2629 = vpop.permute.xlu0 %2628
        %2632 = vset.pattern.permute.xlu0 0
        %2633 = vperm.xlu0 %2632, %v1295
        %v2634 = vpop.permute.xlu0 %2633
        %2637 = vset.pattern.permute.xlu0 0
        %2638 = vperm.xlu0 %2637, %v1296
        %v2639 = vpop.permute.xlu0 %2638
        %v2641 = vmul.f32 %v2449, %v2484
        %v2642 = vmul.f32 %v2450, %v2489
        %v2643 = vmul.f32 %v2451, %v2494
        %v2644 = vmul.f32 %v2452, %v2499
        %v2645 = vmul.f32 %v2453, %v2504
        %v2646 = vmul.f32 %v2454, %v2509
        %v2647 = vmul.f32 %v2455, %v2514
        %v2648 = vmul.f32 %v2456, %v2519
        %v2649 = vmul.f32 %v2457, %v2524
        %v2650 = vmul.f32 %v2458, %v2529
        %v2651 = vmul.f32 %v2459, %v2534
        %v2652 = vmul.f32 %v2460, %v2539
        %v2653 = vmul.f32 %v2461, %v2544
        %v2654 = vmul.f32 %v2462, %v2549
        %v2655 = vmul.f32 %v2463, %v2554
        %v2656 = vmul.f32 %v2464, %v2559
        %v2657 = vmul.f32 %v2465, %v2564
        %v2658 = vmul.f32 %v2466, %v2569
        %v2659 = vmul.f32 %v2467, %v2574
        %v2660 = vmul.f32 %v2468, %v2579
        %v2661 = vmul.f32 %v2469, %v2584
        %v2662 = vmul.f32 %v2470, %v2589
        %v2663 = vmul.f32 %v2471, %v2594
        %v2664 = vmul.f32 %v2472, %v2599
        %v2665 = vmul.f32 %v2473, %v2604
        %v2666 = vmul.f32 %v2474, %v2609
        %v2667 = vmul.f32 %v2475, %v2614
        %v2668 = vmul.f32 %v2476, %v2619
        %v2669 = vmul.f32 %v2477, %v2624
        %v2670 = vmul.f32 %v2478, %v2629
        %v2671 = vmul.f32 %v2479, %v2634
        %v2672 = vmul.f32 %v2480, %v2639
        %v2673 = vadd.f32 %v2412, %v2641
        %v2674 = vadd.f32 %v2413, %v2642
        %v2675 = vadd.f32 %v2414, %v2643
        %v2676 = vadd.f32 %v2415, %v2644
        %v2677 = vadd.f32 %v2416, %v2645
        %v2678 = vadd.f32 %v2417, %v2646
        %v2679 = vadd.f32 %v2418, %v2647
        %v2680 = vadd.f32 %v2419, %v2648
        %v2681 = vadd.f32 %v2420, %v2649
        %v2682 = vadd.f32 %v2421, %v2650
        %v2683 = vadd.f32 %v2422, %v2651
        %v2684 = vadd.f32 %v2423, %v2652
        %v2685 = vadd.f32 %v2424, %v2653
        %v2686 = vadd.f32 %v2425, %v2654
        %v2687 = vadd.f32 %v2426, %v2655
        %v2688 = vadd.f32 %v2427, %v2656
        %v2689 = vadd.f32 %v2428, %v2657
        %v2690 = vadd.f32 %v2429, %v2658
        %v2691 = vadd.f32 %v2430, %v2659
        %v2692 = vadd.f32 %v2431, %v2660
        %v2693 = vadd.f32 %v2432, %v2661
        %v2694 = vadd.f32 %v2433, %v2662
        %v2695 = vadd.f32 %v2434, %v2663
        %v2696 = vadd.f32 %v2435, %v2664
        %v2697 = vadd.f32 %v2436, %v2665
        %v2698 = vadd.f32 %v2437, %v2666
        %v2699 = vadd.f32 %v2438, %v2667
        %v2700 = vadd.f32 %v2439, %v2668
        %v2701 = vadd.f32 %v2440, %v2669
        %v2702 = vadd.f32 %v2441, %v2670
        %v2703 = vadd.f32 %v2442, %v2671
        %v2704 = vadd.f32 %v2443, %v2672
        %v2705 = vld [vmem:[%s4 + $0x6] sm:$0x1]
        %v2706 = vlaneseq
        %v2707 = vshrl.u32 %v2706, 7
        %v2708 = vsub.s32 0, %v2707
        %v2709 = vrot.slane %v2705, %v2708
        %v2710 = vmul.f32 %v1359, %v2709
        %v2711 = vmul.f32 %v1358, %v2709
        %v2712 = vmul.f32 %v1357, %v2709
        %v2713 = vmul.f32 %v1356, %v2709
        %v2714 = vmul.f32 %v1355, %v2709
        %v2715 = vmul.f32 %v1354, %v2709
        %v2716 = vmul.f32 %v1353, %v2709
        %v2717 = vmul.f32 %v1352, %v2709
        %v2718 = vmul.f32 %v1351, %v2709
        %v2719 = vmul.f32 %v1350, %v2709
        %v2720 = vmul.f32 %v1349, %v2709
        %v2721 = vmul.f32 %v1348, %v2709
        %v2722 = vmul.f32 %v1347, %v2709
        %v2723 = vmul.f32 %v1346, %v2709
        %v2724 = vmul.f32 %v1345, %v2709
        %v2725 = vmul.f32 %v1344, %v2709
        %v2726 = vmul.f32 %v1343, %v2709
        %v2727 = vmul.f32 %v1342, %v2709
        %v2728 = vmul.f32 %v1341, %v2709
        %v2729 = vmul.f32 %v1340, %v2709
        %v2730 = vmul.f32 %v1339, %v2709
        %v2731 = vmul.f32 %v1338, %v2709
        %v2732 = vmul.f32 %v1337, %v2709
        %v2733 = vmul.f32 %v1336, %v2709
        %v2734 = vmul.f32 %v1335, %v2709
        %v2735 = vmul.f32 %v1334, %v2709
        %v2736 = vmul.f32 %v1333, %v2709
        %v2737 = vmul.f32 %v1332, %v2709
        %v2738 = vmul.f32 %v1331, %v2709
        %v2739 = vmul.f32 %v1330, %v2709
        %v2740 = vmul.f32 %v1361, %v2709
        %v2741 = vmul.f32 %v1360, %v2709
        %v2742 = vmul.f32 %v1137, %v1201
        %v2743 = vmul.f32 %v1138, %v1202
        %v2744 = vmul.f32 %v1139, %v1203
        %v2745 = vmul.f32 %v1140, %v1204
        %v2746 = vmul.f32 %v1141, %v1205
        %v2747 = vmul.f32 %v1142, %v1206
        %v2748 = vmul.f32 %v1143, %v1207
        %v2749 = vmul.f32 %v1144, %v1208
        %v2750 = vmul.f32 %v1145, %v1209
        %v2751 = vmul.f32 %v1146, %v1210
        %v2752 = vmul.f32 %v1147, %v1211
        %v2753 = vmul.f32 %v1148, %v1212
        %v2754 = vmul.f32 %v1149, %v1213
        %v2755 = vmul.f32 %v1150, %v1214
        %v2756 = vmul.f32 %v1151, %v1215
        %v2757 = vmul.f32 %v1152, %v1216
        %v2758 = vmul.f32 %v1153, %v1217
        %v2759 = vmul.f32 %v1154, %v1218
        %v2760 = vmul.f32 %v1155, %v1219
        %v2761 = vmul.f32 %v1156, %v1220
        %v2762 = vmul.f32 %v1157, %v1221
        %v2763 = vmul.f32 %v1158, %v1222
        %v2764 = vmul.f32 %v1159, %v1223
        %v2765 = vmul.f32 %v1160, %v1224
        %v2766 = vmul.f32 %v1161, %v1225
        %v2767 = vmul.f32 %v1162, %v1226
        %v2768 = vmul.f32 %v1163, %v1227
        %v2769 = vmul.f32 %v1164, %v1228
        %v2770 = vmul.f32 %v1165, %v1229
        %v2771 = vmul.f32 %v1166, %v1230
        %v2772 = vmul.f32 %v1167, %v1231
        %v2773 = vmul.f32 %v1168, %v1232
        %2775 = vset.pattern.permute.xlu0 0
        %2776 = vperm.xlu0 %2775, %v2742
        %v2777 = vpop.permute.xlu0 %2776
        %2780 = vset.pattern.permute.xlu0 0
        %2781 = vperm.xlu0 %2780, %v2743
        %v2782 = vpop.permute.xlu0 %2781
        %2785 = vset.pattern.permute.xlu0 0
        %2786 = vperm.xlu0 %2785, %v2744
        %v2787 = vpop.permute.xlu0 %2786
        %2790 = vset.pattern.permute.xlu0 0
        %2791 = vperm.xlu0 %2790, %v2745
        %v2792 = vpop.permute.xlu0 %2791
        %2795 = vset.pattern.permute.xlu0 0
        %2796 = vperm.xlu0 %2795, %v2746
        %v2797 = vpop.permute.xlu0 %2796
        %2800 = vset.pattern.permute.xlu0 0
        %2801 = vperm.xlu0 %2800, %v2747
        %v2802 = vpop.permute.xlu0 %2801
        %2805 = vset.pattern.permute.xlu0 0
        %2806 = vperm.xlu0 %2805, %v2748
        %v2807 = vpop.permute.xlu0 %2806
        %2810 = vset.pattern.permute.xlu0 0
        %2811 = vperm.xlu0 %2810, %v2749
        %v2812 = vpop.permute.xlu0 %2811
        %2815 = vset.pattern.permute.xlu0 0
        %2816 = vperm.xlu0 %2815, %v2750
        %v2817 = vpop.permute.xlu0 %2816
        %2820 = vset.pattern.permute.xlu0 0
        %2821 = vperm.xlu0 %2820, %v2751
        %v2822 = vpop.permute.xlu0 %2821
        %2825 = vset.pattern.permute.xlu0 0
        %2826 = vperm.xlu0 %2825, %v2752
        %v2827 = vpop.permute.xlu0 %2826
        %2830 = vset.pattern.permute.xlu0 0
        %2831 = vperm.xlu0 %2830, %v2753
        %v2832 = vpop.permute.xlu0 %2831
        %2835 = vset.pattern.permute.xlu0 0
        %2836 = vperm.xlu0 %2835, %v2754
        %v2837 = vpop.permute.xlu0 %2836
        %2840 = vset.pattern.permute.xlu0 0
        %2841 = vperm.xlu0 %2840, %v2755
        %v2842 = vpop.permute.xlu0 %2841
        %2845 = vset.pattern.permute.xlu0 0
        %2846 = vperm.xlu0 %2845, %v2756
        %v2847 = vpop.permute.xlu0 %2846
        %2850 = vset.pattern.permute.xlu0 0
        %2851 = vperm.xlu0 %2850, %v2757
        %v2852 = vpop.permute.xlu0 %2851
        %2855 = vset.pattern.permute.xlu0 0
        %2856 = vperm.xlu0 %2855, %v2758
        %v2857 = vpop.permute.xlu0 %2856
        %2860 = vset.pattern.permute.xlu0 0
        %2861 = vperm.xlu0 %2860, %v2759
        %v2862 = vpop.permute.xlu0 %2861
        %2865 = vset.pattern.permute.xlu0 0
        %2866 = vperm.xlu0 %2865, %v2760
        %v2867 = vpop.permute.xlu0 %2866
        %2870 = vset.pattern.permute.xlu0 0
        %2871 = vperm.xlu0 %2870, %v2761
        %v2872 = vpop.permute.xlu0 %2871
        %2875 = vset.pattern.permute.xlu0 0
        %2876 = vperm.xlu0 %2875, %v2762
        %v2877 = vpop.permute.xlu0 %2876
        %2880 = vset.pattern.permute.xlu0 0
        %2881 = vperm.xlu0 %2880, %v2763
        %v2882 = vpop.permute.xlu0 %2881
        %2885 = vset.pattern.permute.xlu0 0
        %2886 = vperm.xlu0 %2885, %v2764
        %v2887 = vpop.permute.xlu0 %2886
        %2890 = vset.pattern.permute.xlu0 0
        %2891 = vperm.xlu0 %2890, %v2765
        %v2892 = vpop.permute.xlu0 %2891
        %2895 = vset.pattern.permute.xlu0 0
        %2896 = vperm.xlu0 %2895, %v2766
        %v2897 = vpop.permute.xlu0 %2896
        %2900 = vset.pattern.permute.xlu0 0
        %2901 = vperm.xlu0 %2900, %v2767
        %v2902 = vpop.permute.xlu0 %2901
        %2905 = vset.pattern.permute.xlu0 0
        %2906 = vperm.xlu0 %2905, %v2768
        %v2907 = vpop.permute.xlu0 %2906
        %2910 = vset.pattern.permute.xlu0 0
        %2911 = vperm.xlu0 %2910, %v2769
        %v2912 = vpop.permute.xlu0 %2911
        %2915 = vset.pattern.permute.xlu0 0
        %2916 = vperm.xlu0 %2915, %v2770
        %v2917 = vpop.permute.xlu0 %2916
        %2920 = vset.pattern.permute.xlu0 0
        %2921 = vperm.xlu0 %2920, %v2771
        %v2922 = vpop.permute.xlu0 %2921
        %2925 = vset.pattern.permute.xlu0 0
        %2926 = vperm.xlu0 %2925, %v2772
        %v2927 = vpop.permute.xlu0 %2926
        %2930 = vset.pattern.permute.xlu0 0
        %2931 = vperm.xlu0 %2930, %v2773
        %v2932 = vpop.permute.xlu0 %2931
        %v2934 = vmul.f32 %v2710, %v2777
        %v2935 = vmul.f32 %v2711, %v2782
        %v2936 = vmul.f32 %v2712, %v2787
        %v2937 = vmul.f32 %v2713, %v2792
        %v2938 = vmul.f32 %v2714, %v2797
        %v2939 = vmul.f32 %v2715, %v2802
        %v2940 = vmul.f32 %v2716, %v2807
        %v2941 = vmul.f32 %v2717, %v2812
        %v2942 = vmul.f32 %v2718, %v2817
        %v2943 = vmul.f32 %v2719, %v2822
        %v2944 = vmul.f32 %v2720, %v2827
        %v2945 = vmul.f32 %v2721, %v2832
        %v2946 = vmul.f32 %v2722, %v2837
        %v2947 = vmul.f32 %v2723, %v2842
        %v2948 = vmul.f32 %v2724, %v2847
        %v2949 = vmul.f32 %v2725, %v2852
        %v2950 = vmul.f32 %v2726, %v2857
        %v2951 = vmul.f32 %v2727, %v2862
        %v2952 = vmul.f32 %v2728, %v2867
        %v2953 = vmul.f32 %v2729, %v2872
        %v2954 = vmul.f32 %v2730, %v2877
        %v2955 = vmul.f32 %v2731, %v2882
        %v2956 = vmul.f32 %v2732, %v2887
        %v2957 = vmul.f32 %v2733, %v2892
        %v2958 = vmul.f32 %v2734, %v2897
        %v2959 = vmul.f32 %v2735, %v2902
        %v2960 = vmul.f32 %v2736, %v2907
        %v2961 = vmul.f32 %v2737, %v2912
        %v2962 = vmul.f32 %v2738, %v2917
        %v2963 = vmul.f32 %v2739, %v2922
        %v2964 = vmul.f32 %v2740, %v2927
        %v2965 = vmul.f32 %v2741, %v2932
        %v2966 = vadd.f32 %v2673, %v2934
        %v2967 = vadd.f32 %v2674, %v2935
        %v2968 = vadd.f32 %v2675, %v2936
        %v2969 = vadd.f32 %v2676, %v2937
        %v2970 = vadd.f32 %v2677, %v2938
        %v2971 = vadd.f32 %v2678, %v2939
        %v2972 = vadd.f32 %v2679, %v2940
        %v2973 = vadd.f32 %v2680, %v2941
        %v2974 = vadd.f32 %v2681, %v2942
        %v2975 = vadd.f32 %v2682, %v2943
        %v2976 = vadd.f32 %v2683, %v2944
        %v2977 = vadd.f32 %v2684, %v2945
        %v2978 = vadd.f32 %v2685, %v2946
        %v2979 = vadd.f32 %v2686, %v2947
        %v2980 = vadd.f32 %v2687, %v2948
        %v2981 = vadd.f32 %v2688, %v2949
        %v2982 = vadd.f32 %v2689, %v2950
        %v2983 = vadd.f32 %v2690, %v2951
        %v2984 = vadd.f32 %v2691, %v2952
        %v2985 = vadd.f32 %v2692, %v2953
        %v2986 = vadd.f32 %v2693, %v2954
        %v2987 = vadd.f32 %v2694, %v2955
        %v2988 = vadd.f32 %v2695, %v2956
        %v2989 = vadd.f32 %v2696, %v2957
        %v2990 = vadd.f32 %v2697, %v2958
        %v2991 = vadd.f32 %v2698, %v2959
        %v2992 = vadd.f32 %v2699, %v2960
        %v2993 = vadd.f32 %v2700, %v2961
        %v2994 = vadd.f32 %v2701, %v2962
        %v2995 = vadd.f32 %v2702, %v2963
        %v2996 = vadd.f32 %v2703, %v2964
        %v2997 = vadd.f32 %v2704, %v2965
        %v2998 = vld [vmem:[%s4 + $0x7] sm:$0x1]
        %v2999 = vlaneseq
        %v3000 = vshrl.u32 %v2999, 7
        %v3001 = vsub.s32 0, %v3000
        %v3002 = vrot.slane %v2998, %v3001
        %v3003 = vmul.f32 %v946, %v3002
        %v3004 = vmul.f32 %v947, %v3002
        %v3005 = vmul.f32 %v948, %v3002
        %v3006 = vmul.f32 %v949, %v3002
        %v3007 = vmul.f32 %v950, %v3002
        %v3008 = vmul.f32 %v951, %v3002
        %v3009 = vmul.f32 %v952, %v3002
        %v3010 = vmul.f32 %v953, %v3002
        %v3011 = vmul.f32 %v954, %v3002
        %v3012 = vmul.f32 %v955, %v3002
        %v3013 = vmul.f32 %v956, %v3002
        %v3014 = vmul.f32 %v957, %v3002
        %v3015 = vmul.f32 %v958, %v3002
        %v3016 = vmul.f32 %v959, %v3002
        %v3017 = vmul.f32 %v960, %v3002
        %v3018 = vmul.f32 %v961, %v3002
        %v3019 = vmul.f32 %v962, %v3002
        %v3020 = vmul.f32 %v963, %v3002
        %v3021 = vmul.f32 %v964, %v3002
        %v3022 = vmul.f32 %v965, %v3002
        %v3023 = vmul.f32 %v966, %v3002
        %v3024 = vmul.f32 %v967, %v3002
        %v3025 = vmul.f32 %v968, %v3002
        %v3026 = vmul.f32 %v969, %v3002
        %v3027 = vmul.f32 %v970, %v3002
        %v3028 = vmul.f32 %v971, %v3002
        %v3029 = vmul.f32 %v972, %v3002
        %v3030 = vmul.f32 %v973, %v3002
        %v3031 = vmul.f32 %v974, %v3002
        %v3032 = vmul.f32 %v975, %v3002
        %v3033 = vmul.f32 %v944, %v3002
        %v3034 = vmul.f32 %v945, %v3002
        %v3035 = vmul.f32 %v3003, %v1137
        %v3036 = vmul.f32 %v3004, %v1138
        %v3037 = vmul.f32 %v3005, %v1139
        %v3038 = vmul.f32 %v3006, %v1140
        %v3039 = vmul.f32 %v3007, %v1141
        %v3040 = vmul.f32 %v3008, %v1142
        %v3041 = vmul.f32 %v3009, %v1143
        %v3042 = vmul.f32 %v3010, %v1144
        %v3043 = vmul.f32 %v3011, %v1145
        %v3044 = vmul.f32 %v3012, %v1146
        %v3045 = vmul.f32 %v3013, %v1147
        %v3046 = vmul.f32 %v3014, %v1148
        %v3047 = vmul.f32 %v3015, %v1149
        %v3048 = vmul.f32 %v3016, %v1150
        %v3049 = vmul.f32 %v3017, %v1151
        %v3050 = vmul.f32 %v3018, %v1152
        %v3051 = vmul.f32 %v3019, %v1153
        %v3052 = vmul.f32 %v3020, %v1154
        %v3053 = vmul.f32 %v3021, %v1155
        %v3054 = vmul.f32 %v3022, %v1156
        %v3055 = vmul.f32 %v3023, %v1157
        %v3056 = vmul.f32 %v3024, %v1158
        %v3057 = vmul.f32 %v3025, %v1159
        %v3058 = vmul.f32 %v3026, %v1160
        %v3059 = vmul.f32 %v3027, %v1161
        %v3060 = vmul.f32 %v3028, %v1162
        %v3061 = vmul.f32 %v3029, %v1163
        %v3062 = vmul.f32 %v3030, %v1164
        %v3063 = vmul.f32 %v3031, %v1165
        %v3064 = vmul.f32 %v3032, %v1166
        %v3065 = vmul.f32 %v3033, %v1167
        %v3066 = vmul.f32 %v3034, %v1168
        %v3067 = vadd.f32 %v2966, %v3035
        %v3068 = vadd.f32 %v2967, %v3036
        %v3069 = vadd.f32 %v2968, %v3037
        %v3070 = vadd.f32 %v2969, %v3038
        %v3071 = vadd.f32 %v2970, %v3039
        %v3072 = vadd.f32 %v2971, %v3040
        %v3073 = vadd.f32 %v2972, %v3041
        %v3074 = vadd.f32 %v2973, %v3042
        %v3075 = vadd.f32 %v2974, %v3043
        %v3076 = vadd.f32 %v2975, %v3044
        %v3077 = vadd.f32 %v2976, %v3045
        %v3078 = vadd.f32 %v2977, %v3046
        %v3079 = vadd.f32 %v2978, %v3047
        %v3080 = vadd.f32 %v2979, %v3048
        %v3081 = vadd.f32 %v2980, %v3049
        %v3082 = vadd.f32 %v2981, %v3050
        %v3083 = vadd.f32 %v2982, %v3051
        %v3084 = vadd.f32 %v2983, %v3052
        %v3085 = vadd.f32 %v2984, %v3053
        %v3086 = vadd.f32 %v2985, %v3054
        %v3087 = vadd.f32 %v2986, %v3055
        %v3088 = vadd.f32 %v2987, %v3056
        %v3089 = vadd.f32 %v2988, %v3057
        %v3090 = vadd.f32 %v2989, %v3058
        %v3091 = vadd.f32 %v2990, %v3059
        %v3092 = vadd.f32 %v2991, %v3060
        %v3093 = vadd.f32 %v2992, %v3061
        %v3094 = vadd.f32 %v2993, %v3062
        %v3095 = vadd.f32 %v2994, %v3063
        %v3096 = vadd.f32 %v2995, %v3064
        %v3097 = vadd.f32 %v2996, %v3065
        %v3098 = vadd.f32 %v2997, %v3066
        %v3099 = vld [vmem:[%s4 + $0x8] sm:$0x1]
        %v3100 = vlaneseq
        %v3101 = vshrl.u32 %v3100, 7
        %v3102 = vsub.s32 0, %v3101
        %v3103 = vrot.slane %v3099, %v3102
        %v3104 = vmul.f32 %v1817, %v3103
        %v3105 = vmul.f32 %v1816, %v3103
        %v3106 = vmul.f32 %v1815, %v3103
        %v3107 = vmul.f32 %v1814, %v3103
        %v3108 = vmul.f32 %v1813, %v3103
        %v3109 = vmul.f32 %v1812, %v3103
        %v3110 = vmul.f32 %v1811, %v3103
        %v3111 = vmul.f32 %v1810, %v3103
        %v3112 = vmul.f32 %v1809, %v3103
        %v3113 = vmul.f32 %v1808, %v3103
        %v3114 = vmul.f32 %v1807, %v3103
        %v3115 = vmul.f32 %v1806, %v3103
        %v3116 = vmul.f32 %v1805, %v3103
        %v3117 = vmul.f32 %v1804, %v3103
        %v3118 = vmul.f32 %v1803, %v3103
        %v3119 = vmul.f32 %v1802, %v3103
        %v3120 = vmul.f32 %v1801, %v3103
        %v3121 = vmul.f32 %v1800, %v3103
        %v3122 = vmul.f32 %v1799, %v3103
        %v3123 = vmul.f32 %v1798, %v3103
        %v3124 = vmul.f32 %v1797, %v3103
        %v3125 = vmul.f32 %v1796, %v3103
        %v3126 = vmul.f32 %v1795, %v3103
        %v3127 = vmul.f32 %v1794, %v3103
        %v3128 = vmul.f32 %v1793, %v3103
        %v3129 = vmul.f32 %v1792, %v3103
        %v3130 = vmul.f32 %v1791, %v3103
        %v3131 = vmul.f32 %v1790, %v3103
        %v3132 = vmul.f32 %v1789, %v3103
        %v3133 = vmul.f32 %v1820, %v3103
        %v3134 = vmul.f32 %v1819, %v3103
        %v3135 = vmul.f32 %v1818, %v3103
        %v3136 = vmul.f32 %v1137, %v1265
        %v3137 = vmul.f32 %v1138, %v1266
        %v3138 = vmul.f32 %v1139, %v1267
        %v3139 = vmul.f32 %v1140, %v1268
        %v3140 = vmul.f32 %v1141, %v1269
        %v3141 = vmul.f32 %v1142, %v1270
        %v3142 = vmul.f32 %v1143, %v1271
        %v3143 = vmul.f32 %v1144, %v1272
        %v3144 = vmul.f32 %v1145, %v1273
        %v3145 = vmul.f32 %v1146, %v1274
        %v3146 = vmul.f32 %v1147, %v1275
        %v3147 = vmul.f32 %v1148, %v1276
        %v3148 = vmul.f32 %v1149, %v1277
        %v3149 = vmul.f32 %v1150, %v1278
        %v3150 = vmul.f32 %v1151, %v1279
        %v3151 = vmul.f32 %v1152, %v1280
        %v3152 = vmul.f32 %v1153, %v1281
        %v3153 = vmul.f32 %v1154, %v1282
        %v3154 = vmul.f32 %v1155, %v1283
        %v3155 = vmul.f32 %v1156, %v1284
        %v3156 = vmul.f32 %v1157, %v1285
        %v3157 = vmul.f32 %v1158, %v1286
        %v3158 = vmul.f32 %v1159, %v1287
        %v3159 = vmul.f32 %v1160, %v1288
        %v3160 = vmul.f32 %v1161, %v1289
        %v3161 = vmul.f32 %v1162, %v1290
        %v3162 = vmul.f32 %v1163, %v1291
        %v3163 = vmul.f32 %v1164, %v1292
        %v3164 = vmul.f32 %v1165, %v1293
        %v3165 = vmul.f32 %v1166, %v1294
        %v3166 = vmul.f32 %v1167, %v1295
        %v3167 = vmul.f32 %v1168, %v1296
        %3169 = vset.pattern.permute.xlu0 0
        %3170 = vperm.xlu0 %3169, %v3136
        %v3171 = vpop.permute.xlu0 %3170
        %3174 = vset.pattern.permute.xlu0 0
        %3175 = vperm.xlu0 %3174, %v3137
        %v3176 = vpop.permute.xlu0 %3175
        %3179 = vset.pattern.permute.xlu0 0
        %3180 = vperm.xlu0 %3179, %v3138
        %v3181 = vpop.permute.xlu0 %3180
        %3184 = vset.pattern.permute.xlu0 0
        %3185 = vperm.xlu0 %3184, %v3139
        %v3186 = vpop.permute.xlu0 %3185
        %3189 = vset.pattern.permute.xlu0 0
        %3190 = vperm.xlu0 %3189, %v3140
        %v3191 = vpop.permute.xlu0 %3190
        %3194 = vset.pattern.permute.xlu0 0
        %3195 = vperm.xlu0 %3194, %v3141
        %v3196 = vpop.permute.xlu0 %3195
        %3199 = vset.pattern.permute.xlu0 0
        %3200 = vperm.xlu0 %3199, %v3142
        %v3201 = vpop.permute.xlu0 %3200
        %3204 = vset.pattern.permute.xlu0 0
        %3205 = vperm.xlu0 %3204, %v3143
        %v3206 = vpop.permute.xlu0 %3205
        %3209 = vset.pattern.permute.xlu0 0
        %3210 = vperm.xlu0 %3209, %v3144
        %v3211 = vpop.permute.xlu0 %3210
        %3214 = vset.pattern.permute.xlu0 0
        %3215 = vperm.xlu0 %3214, %v3145
        %v3216 = vpop.permute.xlu0 %3215
        %3219 = vset.pattern.permute.xlu0 0
        %3220 = vperm.xlu0 %3219, %v3146
        %v3221 = vpop.permute.xlu0 %3220
        %3224 = vset.pattern.permute.xlu0 0
        %3225 = vperm.xlu0 %3224, %v3147
        %v3226 = vpop.permute.xlu0 %3225
        %3229 = vset.pattern.permute.xlu0 0
        %3230 = vperm.xlu0 %3229, %v3148
        %v3231 = vpop.permute.xlu0 %3230
        %3234 = vset.pattern.permute.xlu0 0
        %3235 = vperm.xlu0 %3234, %v3149
        %v3236 = vpop.permute.xlu0 %3235
        %3239 = vset.pattern.permute.xlu0 0
        %3240 = vperm.xlu0 %3239, %v3150
        %v3241 = vpop.permute.xlu0 %3240
        %3244 = vset.pattern.permute.xlu0 0
        %3245 = vperm.xlu0 %3244, %v3151
        %v3246 = vpop.permute.xlu0 %3245
        %3249 = vset.pattern.permute.xlu0 0
        %3250 = vperm.xlu0 %3249, %v3152
        %v3251 = vpop.permute.xlu0 %3250
        %3254 = vset.pattern.permute.xlu0 0
        %3255 = vperm.xlu0 %3254, %v3153
        %v3256 = vpop.permute.xlu0 %3255
        %3259 = vset.pattern.permute.xlu0 0
        %3260 = vperm.xlu0 %3259, %v3154
        %v3261 = vpop.permute.xlu0 %3260
        %3264 = vset.pattern.permute.xlu0 0
        %3265 = vperm.xlu0 %3264, %v3155
        %v3266 = vpop.permute.xlu0 %3265
        %3269 = vset.pattern.permute.xlu0 0
        %3270 = vperm.xlu0 %3269, %v3156
        %v3271 = vpop.permute.xlu0 %3270
        %3274 = vset.pattern.permute.xlu0 0
        %3275 = vperm.xlu0 %3274, %v3157
        %v3276 = vpop.permute.xlu0 %3275
        %3279 = vset.pattern.permute.xlu0 0
        %3280 = vperm.xlu0 %3279, %v3158
        %v3281 = vpop.permute.xlu0 %3280
        %3284 = vset.pattern.permute.xlu0 0
        %3285 = vperm.xlu0 %3284, %v3159
        %v3286 = vpop.permute.xlu0 %3285
        %3289 = vset.pattern.permute.xlu0 0
        %3290 = vperm.xlu0 %3289, %v3160
        %v3291 = vpop.permute.xlu0 %3290
        %3294 = vset.pattern.permute.xlu0 0
        %3295 = vperm.xlu0 %3294, %v3161
        %v3296 = vpop.permute.xlu0 %3295
        %3299 = vset.pattern.permute.xlu0 0
        %3300 = vperm.xlu0 %3299, %v3162
        %v3301 = vpop.permute.xlu0 %3300
        %3304 = vset.pattern.permute.xlu0 0
        %3305 = vperm.xlu0 %3304, %v3163
        %v3306 = vpop.permute.xlu0 %3305
        %3309 = vset.pattern.permute.xlu0 0
        %3310 = vperm.xlu0 %3309, %v3164
        %v3311 = vpop.permute.xlu0 %3310
        %3314 = vset.pattern.permute.xlu0 0
        %3315 = vperm.xlu0 %3314, %v3165
        %v3316 = vpop.permute.xlu0 %3315
        %3319 = vset.pattern.permute.xlu0 0
        %3320 = vperm.xlu0 %3319, %v3166
        %v3321 = vpop.permute.xlu0 %3320
        %3324 = vset.pattern.permute.xlu0 0
        %3325 = vperm.xlu0 %3324, %v3167
        %v3326 = vpop.permute.xlu0 %3325
        %v3328 = vmul.f32 %v3104, %v3171
        %v3329 = vmul.f32 %v3105, %v3176
        %v3330 = vmul.f32 %v3106, %v3181
        %v3331 = vmul.f32 %v3107, %v3186
        %v3332 = vmul.f32 %v3108, %v3191
        %v3333 = vmul.f32 %v3109, %v3196
        %v3334 = vmul.f32 %v3110, %v3201
        %v3335 = vmul.f32 %v3111, %v3206
        %v3336 = vmul.f32 %v3112, %v3211
        %v3337 = vmul.f32 %v3113, %v3216
        %v3338 = vmul.f32 %v3114, %v3221
        %v3339 = vmul.f32 %v3115, %v3226
        %v3340 = vmul.f32 %v3116, %v3231
        %v3341 = vmul.f32 %v3117, %v3236
        %v3342 = vmul.f32 %v3118, %v3241
        %v3343 = vmul.f32 %v3119, %v3246
        %v3344 = vmul.f32 %v3120, %v3251
        %v3345 = vmul.f32 %v3121, %v3256
        %v3346 = vmul.f32 %v3122, %v3261
        %v3347 = vmul.f32 %v3123, %v3266
        %v3348 = vmul.f32 %v3124, %v3271
        %v3349 = vmul.f32 %v3125, %v3276
        %v3350 = vmul.f32 %v3126, %v3281
        %v3351 = vmul.f32 %v3127, %v3286
        %v3352 = vmul.f32 %v3128, %v3291
        %v3353 = vmul.f32 %v3129, %v3296
        %v3354 = vmul.f32 %v3130, %v3301
        %v3355 = vmul.f32 %v3131, %v3306
        %v3356 = vmul.f32 %v3132, %v3311
        %v3357 = vmul.f32 %v3133, %v3316
        %v3358 = vmul.f32 %v3134, %v3321
        %v3359 = vmul.f32 %v3135, %v3326
        %v3360 = vadd.f32 %v3067, %v3328
        %v3361 = vadd.f32 %v3068, %v3329
        %v3362 = vadd.f32 %v3069, %v3330
        %v3363 = vadd.f32 %v3070, %v3331
        %v3364 = vadd.f32 %v3071, %v3332
        %v3365 = vadd.f32 %v3072, %v3333
        %v3366 = vadd.f32 %v3073, %v3334
        %v3367 = vadd.f32 %v3074, %v3335
        %v3368 = vadd.f32 %v3075, %v3336
        %v3369 = vadd.f32 %v3076, %v3337
        %v3370 = vadd.f32 %v3077, %v3338
        %v3371 = vadd.f32 %v3078, %v3339
        %v3372 = vadd.f32 %v3079, %v3340
        %v3373 = vadd.f32 %v3080, %v3341
        %v3374 = vadd.f32 %v3081, %v3342
        %v3375 = vadd.f32 %v3082, %v3343
        %v3376 = vadd.f32 %v3083, %v3344
        %v3377 = vadd.f32 %v3084, %v3345
        %v3378 = vadd.f32 %v3085, %v3346
        %v3379 = vadd.f32 %v3086, %v3347
        %v3380 = vadd.f32 %v3087, %v3348
        %v3381 = vadd.f32 %v3088, %v3349
        %v3382 = vadd.f32 %v3089, %v3350
        %v3383 = vadd.f32 %v3090, %v3351
        %v3384 = vadd.f32 %v3091, %v3352
        %v3385 = vadd.f32 %v3092, %v3353
        %v3386 = vadd.f32 %v3093, %v3354
        %v3387 = vadd.f32 %v3094, %v3355
        %v3388 = vadd.f32 %v3095, %v3356
        %v3389 = vadd.f32 %v3096, %v3357
        %v3390 = vadd.f32 %v3097, %v3358
        %v3391 = vadd.f32 %v3098, %v3359
        %v3392 = vld [vmem:[%s5] sm:$0x1]
        %v3394 = vlaneseq
        %v3395 = vshrl.u32 %v3394, 7
        %v3396 = vsub.s32 0, %v3395
        %v3397 = vrot.slane %v3392, %v3396
        %v3399 = vadd.f32 %v3360, %v3397
        %v3400 = vadd.f32 %v3361, %v3397
        %v3401 = vadd.f32 %v3362, %v3397
        %v3402 = vadd.f32 %v3363, %v3397
        %v3403 = vadd.f32 %v3364, %v3397
        %v3404 = vadd.f32 %v3365, %v3397
        %v3405 = vadd.f32 %v3366, %v3397
        %v3406 = vadd.f32 %v3367, %v3397
        %v3407 = vadd.f32 %v3368, %v3397
        %v3408 = vadd.f32 %v3369, %v3397
        %v3409 = vadd.f32 %v3370, %v3397
        %v3410 = vadd.f32 %v3371, %v3397
        %v3411 = vadd.f32 %v3372, %v3397
        %v3412 = vadd.f32 %v3373, %v3397
        %v3413 = vadd.f32 %v3374, %v3397
        %v3414 = vadd.f32 %v3375, %v3397
        %v3415 = vadd.f32 %v3376, %v3397
        %v3416 = vadd.f32 %v3377, %v3397
        %v3417 = vadd.f32 %v3378, %v3397
        %v3418 = vadd.f32 %v3379, %v3397
        %v3419 = vadd.f32 %v3380, %v3397
        %v3420 = vadd.f32 %v3381, %v3397
        %v3421 = vadd.f32 %v3382, %v3397
        %v3422 = vadd.f32 %v3383, %v3397
        %v3423 = vadd.f32 %v3384, %v3397
        %v3424 = vadd.f32 %v3385, %v3397
        %v3425 = vadd.f32 %v3386, %v3397
        %v3426 = vadd.f32 %v3387, %v3397
        %v3427 = vadd.f32 %v3388, %v3397
        %v3428 = vadd.f32 %v3389, %v3397
        %v3429 = vadd.f32 %v3390, %v3397
        %v3430 = vadd.f32 %v3391, %v3397
        %v3431 = vmul.f32 %v3399, 0.5
        %v3432 = vmul.f32 %v3400, 0.5
        %v3433 = vmul.f32 %v3401, 0.5
        %v3434 = vmul.f32 %v3402, 0.5
        %v3435 = vmul.f32 %v3403, 0.5
        %v3436 = vmul.f32 %v3404, 0.5
        %v3437 = vmul.f32 %v3405, 0.5
        %v3438 = vmul.f32 %v3406, 0.5
        %v3439 = vmul.f32 %v3407, 0.5
        %v3440 = vmul.f32 %v3408, 0.5
        %v3441 = vmul.f32 %v3409, 0.5
        %v3442 = vmul.f32 %v3410, 0.5
        %v3443 = vmul.f32 %v3411, 0.5
        %v3444 = vmul.f32 %v3412, 0.5
        %v3445 = vmul.f32 %v3413, 0.5
        %v3446 = vmul.f32 %v3414, 0.5
        %v3447 = vmul.f32 %v3415, 0.5
        %v3448 = vmul.f32 %v3416, 0.5
        %v3449 = vmul.f32 %v3417, 0.5
        %v3450 = vmul.f32 %v3418, 0.5
        %v3451 = vmul.f32 %v3419, 0.5
        %v3452 = vmul.f32 %v3420, 0.5
        %v3453 = vmul.f32 %v3421, 0.5
        %v3454 = vmul.f32 %v3422, 0.5
        %v3455 = vmul.f32 %v3423, 0.5
        %v3456 = vmul.f32 %v3424, 0.5
        %v3457 = vmul.f32 %v3425, 0.5
        %v3458 = vmul.f32 %v3426, 0.5
        %v3459 = vmul.f32 %v3427, 0.5
        %v3460 = vmul.f32 %v3428, 0.5
        %v3461 = vmul.f32 %v3429, 0.5
        %v3462 = vmul.f32 %v3430, 0.5
        %v3463 = vmul.f32 %v3399, 0.044715
        %v3464 = vmul.f32 %v3400, 0.044715
        %v3465 = vmul.f32 %v3401, 0.044715
        %v3466 = vmul.f32 %v3402, 0.044715
        %v3467 = vmul.f32 %v3403, 0.044715
        %v3468 = vmul.f32 %v3404, 0.044715
        %v3469 = vmul.f32 %v3405, 0.044715
        %v3470 = vmul.f32 %v3406, 0.044715
        %v3471 = vmul.f32 %v3407, 0.044715
        %v3472 = vmul.f32 %v3408, 0.044715
        %v3473 = vmul.f32 %v3409, 0.044715
        %v3474 = vmul.f32 %v3410, 0.044715
        %v3475 = vmul.f32 %v3411, 0.044715
        %v3476 = vmul.f32 %v3412, 0.044715
        %v3477 = vmul.f32 %v3413, 0.044715
        %v3478 = vmul.f32 %v3414, 0.044715
        %v3479 = vmul.f32 %v3415, 0.044715
        %v3480 = vmul.f32 %v3416, 0.044715
        %v3481 = vmul.f32 %v3417, 0.044715
        %v3482 = vmul.f32 %v3418, 0.044715
        %v3483 = vmul.f32 %v3419, 0.044715
        %v3484 = vmul.f32 %v3420, 0.044715
        %v3485 = vmul.f32 %v3421, 0.044715
        %v3486 = vmul.f32 %v3422, 0.044715
        %v3487 = vmul.f32 %v3423, 0.044715
        %v3488 = vmul.f32 %v3424, 0.044715
        %v3489 = vmul.f32 %v3425, 0.044715
        %v3490 = vmul.f32 %v3426, 0.044715
        %v3491 = vmul.f32 %v3427, 0.044715
        %v3492 = vmul.f32 %v3428, 0.044715
        %v3493 = vmul.f32 %v3429, 0.044715
        %v3494 = vmul.f32 %v3430, 0.044715
        %v3495 = vmul.f32 %v3463, %v3399
        %v3496 = vmul.f32 %v3464, %v3400
        %v3497 = vmul.f32 %v3465, %v3401
        %v3498 = vmul.f32 %v3466, %v3402
        %v3499 = vmul.f32 %v3467, %v3403
        %v3500 = vmul.f32 %v3468, %v3404
        %v3501 = vmul.f32 %v3469, %v3405
        %v3502 = vmul.f32 %v3470, %v3406
        %v3503 = vmul.f32 %v3471, %v3407
        %v3504 = vmul.f32 %v3472, %v3408
        %v3505 = vmul.f32 %v3473, %v3409
        %v3506 = vmul.f32 %v3474, %v3410
        %v3507 = vmul.f32 %v3475, %v3411
        %v3508 = vmul.f32 %v3476, %v3412
        %v3509 = vmul.f32 %v3477, %v3413
        %v3510 = vmul.f32 %v3478, %v3414
        %v3511 = vmul.f32 %v3479, %v3415
        %v3512 = vmul.f32 %v3480, %v3416
        %v3513 = vmul.f32 %v3481, %v3417
        %v3514 = vmul.f32 %v3482, %v3418
        %v3515 = vmul.f32 %v3483, %v3419
        %v3516 = vmul.f32 %v3484, %v3420
        %v3517 = vmul.f32 %v3485, %v3421
        %v3518 = vmul.f32 %v3486, %v3422
        %v3519 = vmul.f32 %v3487, %v3423
        %v3520 = vmul.f32 %v3488, %v3424
        %v3521 = vmul.f32 %v3489, %v3425
        %v3522 = vmul.f32 %v3490, %v3426
        %v3523 = vmul.f32 %v3491, %v3427
        %v3524 = vmul.f32 %v3492, %v3428
        %v3525 = vmul.f32 %v3493, %v3429
        %v3526 = vmul.f32 %v3494, %v3430
        %v3527 = vmul.f32 %v3495, %v3399
        %v3528 = vmul.f32 %v3496, %v3400
        %v3529 = vmul.f32 %v3497, %v3401
        %v3530 = vmul.f32 %v3498, %v3402
        %v3531 = vmul.f32 %v3499, %v3403
        %v3532 = vmul.f32 %v3500, %v3404
        %v3533 = vmul.f32 %v3501, %v3405
        %v3534 = vmul.f32 %v3502, %v3406
        %v3535 = vmul.f32 %v3503, %v3407
        %v3536 = vmul.f32 %v3504, %v3408
        %v3537 = vmul.f32 %v3505, %v3409
        %v3538 = vmul.f32 %v3506, %v3410
        %v3539 = vmul.f32 %v3507, %v3411
        %v3540 = vmul.f32 %v3508, %v3412
        %v3541 = vmul.f32 %v3509, %v3413
        %v3542 = vmul.f32 %v3510, %v3414
        %v3543 = vmul.f32 %v3511, %v3415
        %v3544 = vmul.f32 %v3512, %v3416
        %v3545 = vmul.f32 %v3513, %v3417
        %v3546 = vmul.f32 %v3514, %v3418
        %v3547 = vmul.f32 %v3515, %v3419
        %v3548 = vmul.f32 %v3516, %v3420
        %v3549 = vmul.f32 %v3517, %v3421
        %v3550 = vmul.f32 %v3518, %v3422
        %v3551 = vmul.f32 %v3519, %v3423
        %v3552 = vmul.f32 %v3520, %v3424
        %v3553 = vmul.f32 %v3521, %v3425
        %v3554 = vmul.f32 %v3522, %v3426
        %v3555 = vmul.f32 %v3523, %v3427
        %v3556 = vmul.f32 %v3524, %v3428
        %v3557 = vmul.f32 %v3525, %v3429
        %v3558 = vmul.f32 %v3526, %v3430
        %v3559 = vadd.f32 %v3399, %v3527
        %v3560 = vadd.f32 %v3400, %v3528
        %v3561 = vadd.f32 %v3401, %v3529
        %v3562 = vadd.f32 %v3402, %v3530
        %v3563 = vadd.f32 %v3403, %v3531
        %v3564 = vadd.f32 %v3404, %v3532
        %v3565 = vadd.f32 %v3405, %v3533
        %v3566 = vadd.f32 %v3406, %v3534
        %v3567 = vadd.f32 %v3407, %v3535
        %v3568 = vadd.f32 %v3408, %v3536
        %v3569 = vadd.f32 %v3409, %v3537
        %v3570 = vadd.f32 %v3410, %v3538
        %v3571 = vadd.f32 %v3411, %v3539
        %v3572 = vadd.f32 %v3412, %v3540
        %v3573 = vadd.f32 %v3413, %v3541
        %v3574 = vadd.f32 %v3414, %v3542
        %v3575 = vadd.f32 %v3415, %v3543
        %v3576 = vadd.f32 %v3416, %v3544
        %v3577 = vadd.f32 %v3417, %v3545
        %v3578 = vadd.f32 %v3418, %v3546
        %v3579 = vadd.f32 %v3419, %v3547
        %v3580 = vadd.f32 %v3420, %v3548
        %v3581 = vadd.f32 %v3421, %v3549
        %v3582 = vadd.f32 %v3422, %v3550
        %v3583 = vadd.f32 %v3423, %v3551
        %v3584 = vadd.f32 %v3424, %v3552
        %v3585 = vadd.f32 %v3425, %v3553
        %v3586 = vadd.f32 %v3426, %v3554
        %v3587 = vadd.f32 %v3427, %v3555
        %v3588 = vadd.f32 %v3428, %v3556
        %v3589 = vadd.f32 %v3429, %v3557
        %v3590 = vadd.f32 %v3430, %v3558
        %v3591 = vmul.f32 %v3559, 0.7978846
        %v3592 = vmul.f32 %v3560, 0.7978846
        %v3593 = vmul.f32 %v3561, 0.7978846
        %v3594 = vmul.f32 %v3562, 0.7978846
        %v3595 = vmul.f32 %v3563, 0.7978846
        %v3596 = vmul.f32 %v3564, 0.7978846
        %v3597 = vmul.f32 %v3565, 0.7978846
        %v3598 = vmul.f32 %v3566, 0.7978846
        %v3599 = vmul.f32 %v3567, 0.7978846
        %v3600 = vmul.f32 %v3568, 0.7978846
        %v3601 = vmul.f32 %v3569, 0.7978846
        %v3602 = vmul.f32 %v3570, 0.7978846
        %v3603 = vmul.f32 %v3571, 0.7978846
        %v3604 = vmul.f32 %v3572, 0.7978846
        %v3605 = vmul.f32 %v3573, 0.7978846
        %v3606 = vmul.f32 %v3574, 0.7978846
        %v3607 = vmul.f32 %v3575, 0.7978846
        %v3608 = vmul.f32 %v3576, 0.7978846
        %v3609 = vmul.f32 %v3577, 0.7978846
        %v3610 = vmul.f32 %v3578, 0.7978846
        %v3611 = vmul.f32 %v3579, 0.7978846
        %v3612 = vmul.f32 %v3580, 0.7978846
        %v3613 = vmul.f32 %v3581, 0.7978846
        %v3614 = vmul.f32 %v3582, 0.7978846
        %v3615 = vmul.f32 %v3583, 0.7978846
        %v3616 = vmul.f32 %v3584, 0.7978846
        %v3617 = vmul.f32 %v3585, 0.7978846
        %v3618 = vmul.f32 %v3586, 0.7978846
        %v3619 = vmul.f32 %v3587, 0.7978846
        %v3620 = vmul.f32 %v3588, 0.7978846
        %v3621 = vmul.f32 %v3589, 0.7978846
        %v3622 = vmul.f32 %v3590, 0.7978846
        %v3623 = vtanh.pop %v3591
        %v3624 = vtanh.pop %v3592
        %v3625 = vtanh.pop %v3593
        %v3626 = vtanh.pop %v3594
        %v3627 = vtanh.pop %v3595
        %v3628 = vtanh.pop %v3596
        %v3629 = vtanh.pop %v3597
        %v3630 = vtanh.pop %v3598
        %v3631 = vtanh.pop %v3599
        %v3632 = vtanh.pop %v3600
        %v3633 = vtanh.pop %v3601
        %v3634 = vtanh.pop %v3602
        %v3635 = vtanh.pop %v3603
        %v3636 = vtanh.pop %v3604
        %v3637 = vtanh.pop %v3605
        %v3638 = vtanh.pop %v3606
        %v3639 = vtanh.pop %v3607
        %v3640 = vtanh.pop %v3608
        %v3641 = vtanh.pop %v3609
        %v3642 = vtanh.pop %v3610
        %v3643 = vtanh.pop %v3611
        %v3644 = vtanh.pop %v3612
        %v3645 = vtanh.pop %v3613
        %v3646 = vtanh.pop %v3614
        %v3647 = vtanh.pop %v3615
        %v3648 = vtanh.pop %v3616
        %v3649 = vtanh.pop %v3617
        %v3650 = vtanh.pop %v3618
        %v3651 = vtanh.pop %v3619
        %v3652 = vtanh.pop %v3620
        %v3653 = vtanh.pop %v3621
        %v3654 = vtanh.pop %v3622
        %v3655 = vadd.f32 %v3623, 1.0
        %v3656 = vadd.f32 %v3624, 1.0
        %v3657 = vadd.f32 %v3625, 1.0
        %v3658 = vadd.f32 %v3626, 1.0
        %v3659 = vadd.f32 %v3627, 1.0
        %v3660 = vadd.f32 %v3628, 1.0
        %v3661 = vadd.f32 %v3629, 1.0
        %v3662 = vadd.f32 %v3630, 1.0
        %v3663 = vadd.f32 %v3631, 1.0
        %v3664 = vadd.f32 %v3632, 1.0
        %v3665 = vadd.f32 %v3633, 1.0
        %v3666 = vadd.f32 %v3634, 1.0
        %v3667 = vadd.f32 %v3635, 1.0
        %v3668 = vadd.f32 %v3636, 1.0
        %v3669 = vadd.f32 %v3637, 1.0
        %v3670 = vadd.f32 %v3638, 1.0
        %v3671 = vadd.f32 %v3639, 1.0
        %v3672 = vadd.f32 %v3640, 1.0
        %v3673 = vadd.f32 %v3641, 1.0
        %v3674 = vadd.f32 %v3642, 1.0
        %v3675 = vadd.f32 %v3643, 1.0
        %v3676 = vadd.f32 %v3644, 1.0
        %v3677 = vadd.f32 %v3645, 1.0
        %v3678 = vadd.f32 %v3646, 1.0
        %v3679 = vadd.f32 %v3647, 1.0
        %v3680 = vadd.f32 %v3648, 1.0
        %v3681 = vadd.f32 %v3649, 1.0
        %v3682 = vadd.f32 %v3650, 1.0
        %v3683 = vadd.f32 %v3651, 1.0
        %v3684 = vadd.f32 %v3652, 1.0
        %v3685 = vadd.f32 %v3653, 1.0
        %v3686 = vadd.f32 %v3654, 1.0
        %v3687 = vmul.f32 %v3431, %v3655
        %v3688 = vmul.f32 %v3432, %v3656
        %v3689 = vmul.f32 %v3433, %v3657
        %v3690 = vmul.f32 %v3434, %v3658
        %v3691 = vmul.f32 %v3435, %v3659
        %v3692 = vmul.f32 %v3436, %v3660
        %v3693 = vmul.f32 %v3437, %v3661
        %v3694 = vmul.f32 %v3438, %v3662
        %v3695 = vmul.f32 %v3439, %v3663
        %v3696 = vmul.f32 %v3440, %v3664
        %v3697 = vmul.f32 %v3441, %v3665
        %v3698 = vmul.f32 %v3442, %v3666
        %v3699 = vmul.f32 %v3443, %v3667
        %v3700 = vmul.f32 %v3444, %v3668
        %v3701 = vmul.f32 %v3445, %v3669
        %v3702 = vmul.f32 %v3446, %v3670
        %v3703 = vmul.f32 %v3447, %v3671
        %v3704 = vmul.f32 %v3448, %v3672
        %v3705 = vmul.f32 %v3449, %v3673
        %v3706 = vmul.f32 %v3450, %v3674
        %v3707 = vmul.f32 %v3451, %v3675
        %v3708 = vmul.f32 %v3452, %v3676
        %v3709 = vmul.f32 %v3453, %v3677
        %v3710 = vmul.f32 %v3454, %v3678
        %v3711 = vmul.f32 %v3455, %v3679
        %v3712 = vmul.f32 %v3456, %v3680
        %v3713 = vmul.f32 %v3457, %v3681
        %v3714 = vmul.f32 %v3458, %v3682
        %v3715 = vmul.f32 %v3459, %v3683
        %v3716 = vmul.f32 %v3460, %v3684
        %v3717 = vmul.f32 %v3461, %v3685
        %v3718 = vmul.f32 %v3462, %v3686
        %v3719 = vadd.f32 %v3687, %v3688
        %v3720 = vadd.f32 %v3719, %v3689
        %v3721 = vadd.f32 %v3720, %v3690
        %v3722 = vadd.f32 %v3721, %v3691
        %v3723 = vadd.f32 %v3722, %v3692
        %v3724 = vadd.f32 %v3723, %v3693
        %v3725 = vadd.f32 %v3724, %v3694
        %v3726 = vadd.f32 %v3725, %v3695
        %v3727 = vadd.f32 %v3726, %v3696
        %v3728 = vadd.f32 %v3727, %v3697
        %v3729 = vadd.f32 %v3728, %v3698
        %v3730 = vadd.f32 %v3729, %v3699
        %v3731 = vadd.f32 %v3730, %v3700
        %v3732 = vadd.f32 %v3731, %v3701
        %v3733 = vadd.f32 %v3732, %v3702
        %v3734 = vadd.f32 %v3733, %v3703
        %v3735 = vadd.f32 %v3734, %v3704
        %v3736 = vadd.f32 %v3735, %v3705
        %v3737 = vadd.f32 %v3736, %v3706
        %v3738 = vadd.f32 %v3737, %v3707
        %v3739 = vadd.f32 %v3738, %v3708
        %v3740 = vadd.f32 %v3739, %v3709
        %v3741 = vadd.f32 %v3740, %v3710
        %v3742 = vadd.f32 %v3741, %v3711
        %v3743 = vadd.f32 %v3742, %v3712
        %v3744 = vadd.f32 %v3743, %v3713
        %v3745 = vadd.f32 %v3744, %v3714
        %v3746 = vadd.f32 %v3745, %v3715
        %v3747 = vadd.f32 %v3746, %v3716
        %v3748 = vadd.f32 %v3747, %v3717
        %v3749 = vadd.f32 %v3748, %v3718
        %v3750 = vrot.slane %v3749, 4
        %v3751 = vadd.f32 %v3749, %v3750
        %v3752 = vrot.slane %v3751, 2
        %v3753 = vadd.f32 %v3751, %v3752
        %v3754 = vrot.slane %v3753, 1
        %v3755 = vadd.f32 %v3753, %v3754
        %v3756 = vrcp.pop 256.0
        %v3757 = vmul.f32 %v3755, %v3756
        %v3758 = vld [vmem:[%s6] sm:$0xff]
        %v3759 = vld [vmem:[%s6 + $0x8] sm:$0xff]
        %v3760 = vld [vmem:[%s6 + $0x10] sm:$0xff]
        %v3761 = vld [vmem:[%s6 + $0x18] sm:$0xff]
        %v3762 = vld [vmem:[%s6 + $0x20] sm:$0xff]
        %v3763 = vld [vmem:[%s6 + $0x28] sm:$0xff]
        %v3764 = vld [vmem:[%s6 + $0x30] sm:$0xff]
        %v3765 = vld [vmem:[%s6 + $0x38] sm:$0xff]
        %v3766 = vld [vmem:[%s6 + $0x40] sm:$0xff]
        %v3767 = vld [vmem:[%s6 + $0x48] sm:$0xff]
        %v3768 = vld [vmem:[%s6 + $0x50] sm:$0xff]
        %v3769 = vld [vmem:[%s6 + $0x58] sm:$0xff]
        %v3770 = vld [vmem:[%s6 + $0x60] sm:$0xff]
        %v3771 = vld [vmem:[%s6 + $0x68] sm:$0xff]
        %v3772 = vld [vmem:[%s6 + $0x70] sm:$0xff]
        %v3773 = vld [vmem:[%s6 + $0x78] sm:$0xff]
        %3774 = vmatprep.subr.mxu0 0.0
        %3775 = vmatpush1.msra.mxu0 %v3758
        %3776 = vmatprep.subr.mxu0 0.0
        %3777 = vmatpush1.msra.mxu0 %v3759
        %3778 = vmatprep.subr.mxu0 0.0
        %3779 = vmatpush1.msra.mxu0 %v3760
        %3780 = vmatprep.subr.mxu0 0.0
        %3781 = vmatpush1.msra.mxu0 %v3761
        %3782 = vmatprep.subr.mxu0 0.0
        %3783 = vmatpush1.msra.mxu0 %v3762
        %3784 = vmatprep.subr.mxu0 0.0
        %3785 = vmatpush1.msra.mxu0 %v3763
        %3786 = vmatprep.subr.mxu0 0.0
        %3787 = vmatpush1.msra.mxu0 %v3764
        %3788 = vmatprep.subr.mxu0 0.0
        %3789 = vmatpush1.msra.mxu0 %v3765
        %3790 = vmatprep.subr.mxu0 0.0
        %3791 = vmatpush1.msra.mxu0 %v3766
        %3792 = vmatprep.subr.mxu0 0.0
        %3793 = vmatpush1.msra.mxu0 %v3767
        %3794 = vmatprep.subr.mxu0 0.0
        %3795 = vmatpush1.msra.mxu0 %v3768
        %3796 = vmatprep.subr.mxu0 0.0
        %3797 = vmatpush1.msra.mxu0 %v3769
        %3798 = vmatprep.subr.mxu0 0.0
        %3799 = vmatpush1.msra.mxu0 %v3770
        %3800 = vmatprep.subr.mxu0 0.0
        %3801 = vmatpush1.msra.mxu0 %v3771
        %3802 = vmatprep.subr.mxu0 0.0
        %3803 = vmatpush1.msra.mxu0 %v3772
        %3804 = vmatprep.subr.mxu0 0.0
        %3805 = vmatpush1.msra.mxu0 %v3773
        %3806 = vmatprep.subr.mxu0 0.0
        %3807 = vmatpush1.msra.mxu0 0.0
        %3808 = vmatprep.subr.mxu0 0.0
        %3809 = vmatpush1.msra.mxu0 0.0
        %3810 = vmatprep.subr.mxu0 0.0
        %3811 = vmatpush1.msra.mxu0 0.0
        %3812 = vmatprep.subr.mxu0 0.0
        %3813 = vmatpush1.msra.mxu0 0.0
        %3814 = vmatprep.subr.mxu0 0.0
        %3815 = vmatpush1.msra.mxu0 0.0
        %3816 = vmatprep.subr.mxu0 0.0
        %3817 = vmatpush1.msra.mxu0 0.0
        %3818 = vmatprep.subr.mxu0 0.0
        %3819 = vmatpush1.msra.mxu0 0.0
        %3820 = vmatprep.subr.mxu0 0.0
        %3821 = vmatpush1.msra.mxu0 0.0
        %3822 = vmatprep.subr.mxu0 0.0
        %3823 = vmatpush1.msra.mxu0 0.0
        %3824 = vmatprep.subr.mxu0 0.0
        %3825 = vmatpush1.msra.mxu0 0.0
        %3826 = vmatprep.subr.mxu0 0.0
        %3827 = vmatpush1.msra.mxu0 0.0
        %3828 = vmatprep.subr.mxu0 0.0
        %3829 = vmatpush1.msra.mxu0 0.0
        %3830 = vmatprep.subr.mxu0 0.0
        %3831 = vmatpush1.msra.mxu0 0.0
        %3832 = vmatprep.subr.mxu0 0.0
        %3833 = vmatpush1.msra.mxu0 0.0
        %3834 = vmatprep.subr.mxu0 0.0
        %3835 = vmatpush1.msra.mxu0 0.0
        %3836 = vmatprep.subr.mxu0 0.0
        %3837 = vmatpush1.msra.mxu0 0.0
        %3838 = vmatprep.mubr.f32.mxu0 0.0
        %3839 = vmatmul.mubr.f32.gmra.mrb[0].mxu0 %v3757
        %v3840 = vpop.f32.mrb[0].mxu0
        %v3841 = vadd.f32 0.0, %v3840
        %v3842 = vpop.f32.mrb[0].mxu0
        %3843 = vdwg.mxu0
        %v3844 = vxor.u32 %v3841, 2147483648
        %v3845 = vmul.f32 %v3844, 1.442695
        %v3846 = vpow.pop %v3845
        %v3847 = vadd.f32 %v3846, 1.0
        %v3848 = vrcp.pop %v3847
        %v3849 = vmul.f32 1.0, %v3848
        %v3850 = vmul.f32 %v3841, %v3849
        %v3851 = vld [vmem:[%s7] sm:$0xff]
        %v3852 = vld [vmem:[%s7 + $0x8] sm:$0xff]
        %v3853 = vld [vmem:[%s7 + $0x10] sm:$0xff]
        %v3854 = vld [vmem:[%s7 + $0x18] sm:$0xff]
        %v3855 = vld [vmem:[%s7 + $0x20] sm:$0xff]
        %v3856 = vld [vmem:[%s7 + $0x28] sm:$0xff]
        %v3857 = vld [vmem:[%s7 + $0x30] sm:$0xff]
        %v3858 = vld [vmem:[%s7 + $0x38] sm:$0xff]
        %v3859 = vld [vmem:[%s7 + $0x40] sm:$0xff]
        %v3860 = vld [vmem:[%s7 + $0x48] sm:$0xff]
        %v3861 = vld [vmem:[%s7 + $0x50] sm:$0xff]
        %v3862 = vld [vmem:[%s7 + $0x58] sm:$0xff]
        %v3863 = vld [vmem:[%s7 + $0x60] sm:$0xff]
        %v3864 = vld [vmem:[%s7 + $0x68] sm:$0xff]
        %v3865 = vld [vmem:[%s7 + $0x70] sm:$0xff]
        %v3866 = vld [vmem:[%s7 + $0x78] sm:$0xff]
        %3867 = vmatprep.subr.mxu0 0.0
        %3868 = vmatpush1.msra.mxu0 %v3851
        %3869 = vmatprep.subr.mxu0 0.0
        %3870 = vmatpush1.msra.mxu0 %v3852
        %3871 = vmatprep.subr.mxu0 0.0
        %3872 = vmatpush1.msra.mxu0 %v3853
        %3873 = vmatprep.subr.mxu0 0.0
        %3874 = vmatpush1.msra.mxu0 %v3854
        %3875 = vmatprep.subr.mxu0 0.0
        %3876 = vmatpush1.msra.mxu0 %v3855
        %3877 = vmatprep.subr.mxu0 0.0
        %3878 = vmatpush1.msra.mxu0 %v3856
        %3879 = vmatprep.subr.mxu0 0.0
        %3880 = vmatpush1.msra.mxu0 %v3857
        %3881 = vmatprep.subr.mxu0 0.0
        %3882 = vmatpush1.msra.mxu0 %v3858
        %3883 = vmatprep.subr.mxu0 0.0
        %3884 = vmatpush1.msra.mxu0 %v3859
        %3885 = vmatprep.subr.mxu0 0.0
        %3886 = vmatpush1.msra.mxu0 %v3860
        %3887 = vmatprep.subr.mxu0 0.0
        %3888 = vmatpush1.msra.mxu0 %v3861
        %3889 = vmatprep.subr.mxu0 0.0
        %3890 = vmatpush1.msra.mxu0 %v3862
        %3891 = vmatprep.subr.mxu0 0.0
        %3892 = vmatpush1.msra.mxu0 %v3863
        %3893 = vmatprep.subr.mxu0 0.0
        %3894 = vmatpush1.msra.mxu0 %v3864
        %3895 = vmatprep.subr.mxu0 0.0
        %3896 = vmatpush1.msra.mxu0 %v3865
        %3897 = vmatprep.subr.mxu0 0.0
        %3898 = vmatpush1.msra.mxu0 %v3866
        %3899 = vmatprep.subr.mxu0 0.0
        %3900 = vmatpush1.msra.mxu0 0.0
        %3901 = vmatprep.subr.mxu0 0.0
        %3902 = vmatpush1.msra.mxu0 0.0
        %3903 = vmatprep.subr.mxu0 0.0
        %3904 = vmatpush1.msra.mxu0 0.0
        %3905 = vmatprep.subr.mxu0 0.0
        %3906 = vmatpush1.msra.mxu0 0.0
        %3907 = vmatprep.subr.mxu0 0.0
        %3908 = vmatpush1.msra.mxu0 0.0
        %3909 = vmatprep.subr.mxu0 0.0
        %3910 = vmatpush1.msra.mxu0 0.0
        %3911 = vmatprep.subr.mxu0 0.0
        %3912 = vmatpush1.msra.mxu0 0.0
        %3913 = vmatprep.subr.mxu0 0.0
        %3914 = vmatpush1.msra.mxu0 0.0
        %3915 = vmatprep.subr.mxu0 0.0
        %3916 = vmatpush1.msra.mxu0 0.0
        %3917 = vmatprep.subr.mxu0 0.0
        %3918 = vmatpush1.msra.mxu0 0.0
        %3919 = vmatprep.subr.mxu0 0.0
        %3920 = vmatpush1.msra.mxu0 0.0
        %3921 = vmatprep.subr.mxu0 0.0
        %3922 = vmatpush1.msra.mxu0 0.0
        %3923 = vmatprep.subr.mxu0 0.0
        %3924 = vmatpush1.msra.mxu0 0.0
        %3925 = vmatprep.subr.mxu0 0.0
        %3926 = vmatpush1.msra.mxu0 0.0
        %3927 = vmatprep.subr.mxu0 0.0
        %3928 = vmatpush1.msra.mxu0 0.0
        %3929 = vmatprep.subr.mxu0 0.0
        %3930 = vmatpush1.msra.mxu0 0.0
        %3931 = vmatprep.mubr.f32.mxu0 0.0
        %3932 = vmatmul.mubr.f32.gmra.mrb[0].mxu0 %v3850
        %v3933 = vpop.f32.mrb[0].mxu0
        %v3934 = vadd.f32 0.0, %v3933
        %v3935 = vpop.f32.mrb[0].mxu0
        %3936 = vdwg.mxu0
        %v3937 = vxor.u32 %v3934, 2147483648
        %v3938 = vmul.f32 %v3937, 1.442695
        %v3939 = vpow.pop %v3938
        %v3940 = vadd.f32 %v3939, 1.0
        %v3941 = vrcp.pop %v3940
        %v3942 = vmul.f32 1.0, %v3941
        %v3943 = vlaneseq
        %v3944 = vshrl.u32 %v3943, 7
        %v3945 = vsub.s32 0, %v3944
        %v3946 = vrot.slane %v3942, %v3945
        %v3947 = vmul.f32 %v3687, %v3946
        %v3948 = vmul.f32 %v3688, %v3946
        %v3949 = vmul.f32 %v3689, %v3946
        %v3950 = vmul.f32 %v3690, %v3946
        %v3951 = vmul.f32 %v3691, %v3946
        %v3952 = vmul.f32 %v3692, %v3946
        %v3953 = vmul.f32 %v3693, %v3946
        %v3954 = vmul.f32 %v3694, %v3946
        %v3955 = vmul.f32 %v3695, %v3946
        %v3956 = vmul.f32 %v3696, %v3946
        %v3957 = vmul.f32 %v3697, %v3946
        %v3958 = vmul.f32 %v3698, %v3946
        %v3959 = vmul.f32 %v3699, %v3946
        %v3960 = vmul.f32 %v3700, %v3946
        %v3961 = vmul.f32 %v3701, %v3946
        %v3962 = vmul.f32 %v3702, %v3946
        %v3963 = vmul.f32 %v3703, %v3946
        %v3964 = vmul.f32 %v3704, %v3946
        %v3965 = vmul.f32 %v3705, %v3946
        %v3966 = vmul.f32 %v3706, %v3946
        %v3967 = vmul.f32 %v3707, %v3946
        %v3968 = vmul.f32 %v3708, %v3946
        %v3969 = vmul.f32 %v3709, %v3946
        %v3970 = vmul.f32 %v3710, %v3946
        %v3971 = vmul.f32 %v3711, %v3946
        %v3972 = vmul.f32 %v3712, %v3946
        %v3973 = vmul.f32 %v3713, %v3946
        %v3974 = vmul.f32 %v3714, %v3946
        %v3975 = vmul.f32 %v3715, %v3946
        %v3976 = vmul.f32 %v3716, %v3946
        %v3977 = vmul.f32 %v3717, %v3946
        %v3978 = vmul.f32 %v3718, %v3946
        %v3979 = vpack.c.bf16 %v3948, %v3947
        %v3980 = vpack.c.bf16 %v3950, %v3949
        %v3981 = vpack.c.bf16 %v3952, %v3951
        %v3982 = vpack.c.bf16 %v3954, %v3953
        %v3983 = vpack.c.bf16 %v3956, %v3955
        %v3984 = vpack.c.bf16 %v3958, %v3957
        %v3985 = vpack.c.bf16 %v3960, %v3959
        %v3986 = vpack.c.bf16 %v3962, %v3961
        %v3987 = vpack.c.bf16 %v3964, %v3963
        %v3988 = vpack.c.bf16 %v3966, %v3965
        %v3989 = vpack.c.bf16 %v3968, %v3967
        %v3990 = vpack.c.bf16 %v3970, %v3969
        %v3991 = vpack.c.bf16 %v3972, %v3971
        %v3992 = vpack.c.bf16 %v3974, %v3973
        %v3993 = vpack.c.bf16 %v3976, %v3975
        %v3994 = vpack.c.bf16 %v3978, %v3977
        %v3995 = vld [vmem:[#allocation7] sm:$0xf]
        %v3996 = vld [vmem:[#allocation7 + $0x4] sm:$0xf]
        %v3997 = vld [vmem:[#allocation7 + $0x8] sm:$0xf]
        %v3998 = vld [vmem:[#allocation7 + $0xc] sm:$0xf]
        %v3999 = vld [vmem:[#allocation7 + $0x10] sm:$0xf]
        %v4000 = vld [vmem:[#allocation7 + $0x14] sm:$0xf]
        %v4001 = vld [vmem:[#allocation7 + $0x18] sm:$0xf]
        %v4002 = vld [vmem:[#allocation7 + $0x1c] sm:$0xf]
        %v4003 = vld [vmem:[#allocation7 + $0x20] sm:$0xf]
        %v4004 = vld [vmem:[#allocation7 + $0x24] sm:$0xf]
        %v4005 = vld [vmem:[#allocation7 + $0x28] sm:$0xf]
        %v4006 = vld [vmem:[#allocation7 + $0x2c] sm:$0xf]
        %v4007 = vld [vmem:[#allocation7 + $0x30] sm:$0xf]
        %v4008 = vld [vmem:[#allocation7 + $0x34] sm:$0xf]
        %v4009 = vld [vmem:[#allocation7 + $0x38] sm:$0xf]
        %v4010 = vld [vmem:[#allocation7 + $0x3c] sm:$0xf]
        %v4011 = vld [vmem:[%s9] sm:$0x1]
        %v4013 = vlaneseq
        %v4014 = vshrl.u32 %v4013, 7
        %v4015 = vsub.s32 0, %v4014
        %v4016 = vrot.slane %v4011, %v4015
        %v4034 = vunpack.c.l.b16 %v3995
        %v4035 = vunpack.c.l.b16 %v3996
        %v4036 = vunpack.c.l.b16 %v3997
        %v4037 = vunpack.c.l.b16 %v3998
        %v4038 = vunpack.c.l.b16 %v3999
        %v4039 = vunpack.c.l.b16 %v4000
        %v4040 = vunpack.c.l.b16 %v4001
        %v4041 = vunpack.c.l.b16 %v4002
        %v4042 = vunpack.c.l.b16 %v4003
        %v4043 = vunpack.c.l.b16 %v4004
        %v4044 = vunpack.c.l.b16 %v4005
        %v4045 = vunpack.c.l.b16 %v4006
        %v4046 = vunpack.c.l.b16 %v4007
        %v4047 = vunpack.c.l.b16 %v4008
        %v4048 = vunpack.c.l.b16 %v4009
        %v4049 = vunpack.c.l.b16 %v4010
        %v4050 = vpack.c.b16 %v4035, %v4034
        %v4051 = vpack.c.b16 %v4037, %v4036
        %v4052 = vpack.c.b16 %v4039, %v4038
        %v4053 = vpack.c.b16 %v4041, %v4040
        %v4054 = vpack.c.b16 %v4043, %v4042
        %v4055 = vpack.c.b16 %v4045, %v4044
        %v4056 = vpack.c.b16 %v4047, %v4046
        %v4057 = vpack.c.b16 %v4049, %v4048
        %4066 = vmatprep.subr.bf16.mxu0 0
        %4067 = vmatpush1.bf16.msra.mxu0 %v4050
        %4068 = vmatprep.subr.bf16.mxu0 0
        %4069 = vmatpush1.bf16.msra.mxu0 %v4051
        %4070 = vmatprep.subr.bf16.mxu0 0
        %4071 = vmatpush1.bf16.msra.mxu0 %v4052
        %4072 = vmatprep.subr.bf16.mxu0 0
        %4073 = vmatpush1.bf16.msra.mxu0 %v4053
        %4074 = vmatprep.subr.bf16.mxu0 0
        %4075 = vmatpush1.bf16.msra.mxu0 %v4054
        %4076 = vmatprep.subr.bf16.mxu0 0
        %4077 = vmatpush1.bf16.msra.mxu0 %v4055
        %4078 = vmatprep.subr.bf16.mxu0 0
        %4079 = vmatpush1.bf16.msra.mxu0 %v4056
        %4080 = vmatprep.subr.bf16.mxu0 0
        %4081 = vmatpush1.bf16.msra.mxu0 %v4057
        %4082 = vmatprep.subr.bf16.mxu0 0
        %4083 = vmatpush1.bf16.msra.mxu0 0
        %4084 = vmatprep.subr.bf16.mxu0 0
        %4085 = vmatpush1.bf16.msra.mxu0 0
        %4086 = vmatprep.subr.bf16.mxu0 0
        %4087 = vmatpush1.bf16.msra.mxu0 0
        %4088 = vmatprep.subr.bf16.mxu0 0
        %4089 = vmatpush1.bf16.msra.mxu0 0
        %4090 = vmatprep.subr.bf16.mxu0 0
        %4091 = vmatpush1.bf16.msra.mxu0 0
        %4092 = vmatprep.subr.bf16.mxu0 0
        %4093 = vmatpush1.bf16.msra.mxu0 0
        %4094 = vmatprep.subr.bf16.mxu0 0
        %4095 = vmatpush1.bf16.msra.mxu0 0
        %4096 = vmatprep.subr.bf16.mxu0 0
        %4097 = vmatpush1.bf16.msra.mxu0 0
        %4098 = vmatprep.mubr.bf16.mxu0 0
        %4099 = vmatmul.mubr.bf16.gmra.mrb[0].mxu0 %v3979
        %v4100 = vpop.f32.mrb[0].mxu0
        %v4101 = vadd.f32 %v4016, %v4100
        %v4102 = vpop.f32.mrb[0].mxu0
        %v4103 = vpop.f32.mrb[0].mxu0
        %v4104 = vadd.f32 %v4016, %v4103
        %v4105 = vpop.f32.mrb[0].mxu0
        %4106 = vmatprep.mubr.bf16.mxu0 0
        %4107 = vmatmul.mubr.bf16.gmra.mrb[0].mxu0 %v3980
        %v4108 = vpop.f32.mrb[0].mxu0
        %v4109 = vadd.f32 %v4016, %v4108
        %v4110 = vpop.f32.mrb[0].mxu0
        %v4111 = vpop.f32.mrb[0].mxu0
        %v4112 = vadd.f32 %v4016, %v4111
        %v4113 = vpop.f32.mrb[0].mxu0
        %4114 = vmatprep.mubr.bf16.mxu0 0
        %4115 = vmatmul.mubr.bf16.gmra.mrb[0].mxu0 %v3981
        %v4116 = vpop.f32.mrb[0].mxu0
        %v4117 = vadd.f32 %v4016, %v4116
        %v4118 = vpop.f32.mrb[0].mxu0
        %v4119 = vpop.f32.mrb[0].mxu0
        %v4120 = vadd.f32 %v4016, %v4119
        %v4121 = vpop.f32.mrb[0].mxu0
        %4122 = vmatprep.mubr.bf16.mxu0 0
        %4123 = vmatmul.mubr.bf16.gmra.mrb[0].mxu0 %v3982
        %v4124 = vpop.f32.mrb[0].mxu0
        %v4125 = vadd.f32 %v4016, %v4124
        %v4126 = vpop.f32.mrb[0].mxu0
        %v4127 = vpop.f32.mrb[0].mxu0
        %v4128 = vadd.f32 %v4016, %v4127
        %v4129 = vpop.f32.mrb[0].mxu0
        %4130 = vmatprep.mubr.bf16.mxu0 0
        %4131 = vmatmul.mubr.bf16.gmra.mrb[0].mxu0 %v3983
        %v4132 = vpop.f32.mrb[0].mxu0
        %v4133 = vadd.f32 %v4016, %v4132
        %v4134 = vpop.f32.mrb[0].mxu0
        %v4135 = vpop.f32.mrb[0].mxu0
        %v4136 = vadd.f32 %v4016, %v4135
        %v4137 = vpop.f32.mrb[0].mxu0
        %4138 = vmatprep.mubr.bf16.mxu0 0
        %4139 = vmatmul.mubr.bf16.gmra.mrb[0].mxu0 %v3984
        %v4140 = vpop.f32.mrb[0].mxu0
        %v4141 = vadd.f32 %v4016, %v4140
        %v4142 = vpop.f32.mrb[0].mxu0
        %v4143 = vpop.f32.mrb[0].mxu0
        %v4144 = vadd.f32 %v4016, %v4143
        %v4145 = vpop.f32.mrb[0].mxu0
        %4146 = vmatprep.mubr.bf16.mxu0 0
        %4147 = vmatmul.mubr.bf16.gmra.mrb[0].mxu0 %v3985
        %v4148 = vpop.f32.mrb[0].mxu0
        %v4149 = vadd.f32 %v4016, %v4148
        %v4150 = vpop.f32.mrb[0].mxu0
        %v4151 = vpop.f32.mrb[0].mxu0
        %v4152 = vadd.f32 %v4016, %v4151
        %v4153 = vpop.f32.mrb[0].mxu0
        %4154 = vmatprep.mubr.bf16.mxu0 0
        %4155 = vmatmul.mubr.bf16.gmra.mrb[0].mxu0 %v3986
        %v4156 = vpop.f32.mrb[0].mxu0
        %v4157 = vadd.f32 %v4016, %v4156
        %v4158 = vpop.f32.mrb[0].mxu0
        %v4159 = vpop.f32.mrb[0].mxu0
        %v4160 = vadd.f32 %v4016, %v4159
        %v4161 = vpop.f32.mrb[0].mxu0
        %4162 = vmatprep.mubr.bf16.mxu0 0
        %4163 = vmatmul.mubr.bf16.gmra.mrb[0].mxu0 %v3987
        %v4164 = vpop.f32.mrb[0].mxu0
        %v4165 = vadd.f32 %v4016, %v4164
        %v4166 = vpop.f32.mrb[0].mxu0
        %v4167 = vpop.f32.mrb[0].mxu0
        %v4168 = vadd.f32 %v4016, %v4167
        %v4169 = vpop.f32.mrb[0].mxu0
        %4170 = vmatprep.mubr.bf16.mxu0 0
        %4171 = vmatmul.mubr.bf16.gmra.mrb[0].mxu0 %v3988
        %v4172 = vpop.f32.mrb[0].mxu0
        %v4173 = vadd.f32 %v4016, %v4172
        %v4174 = vpop.f32.mrb[0].mxu0
        %v4175 = vpop.f32.mrb[0].mxu0
        %v4176 = vadd.f32 %v4016, %v4175
        %v4177 = vpop.f32.mrb[0].mxu0
        %4178 = vmatprep.mubr.bf16.mxu0 0
        %4179 = vmatmul.mubr.bf16.gmra.mrb[0].mxu0 %v3989
        %v4180 = vpop.f32.mrb[0].mxu0
        %v4181 = vadd.f32 %v4016, %v4180
        %v4182 = vpop.f32.mrb[0].mxu0
        %v4183 = vpop.f32.mrb[0].mxu0
        %v4184 = vadd.f32 %v4016, %v4183
        %v4185 = vpop.f32.mrb[0].mxu0
        %4186 = vmatprep.mubr.bf16.mxu0 0
        %4187 = vmatmul.mubr.bf16.gmra.mrb[0].mxu0 %v3990
        %v4188 = vpop.f32.mrb[0].mxu0
        %v4189 = vadd.f32 %v4016, %v4188
        %v4190 = vpop.f32.mrb[0].mxu0
        %v4191 = vpop.f32.mrb[0].mxu0
        %v4192 = vadd.f32 %v4016, %v4191
        %v4193 = vpop.f32.mrb[0].mxu0
        %4194 = vmatprep.mubr.bf16.mxu0 0
        %4195 = vmatmul.mubr.bf16.gmra.mrb[0].mxu0 %v3991
        %v4196 = vpop.f32.mrb[0].mxu0
        %v4197 = vadd.f32 %v4016, %v4196
        %v4198 = vpop.f32.mrb[0].mxu0
        %v4199 = vpop.f32.mrb[0].mxu0
        %v4200 = vadd.f32 %v4016, %v4199
        %v4201 = vpop.f32.mrb[0].mxu0
        %4202 = vmatprep.mubr.bf16.mxu0 0
        %4203 = vmatmul.mubr.bf16.gmra.mrb[0].mxu0 %v3992
        %v4204 = vpop.f32.mrb[0].mxu0
        %v4205 = vadd.f32 %v4016, %v4204
        %v4206 = vpop.f32.mrb[0].mxu0
        %v4207 = vpop.f32.mrb[0].mxu0
        %v4208 = vadd.f32 %v4016, %v4207
        %v4209 = vpop.f32.mrb[0].mxu0
        %4210 = vmatprep.mubr.bf16.mxu0 0
        %4211 = vmatmul.mubr.bf16.gmra.mrb[0].mxu0 %v3993
        %v4212 = vpop.f32.mrb[0].mxu0
        %v4213 = vadd.f32 %v4016, %v4212
        %v4214 = vpop.f32.mrb[0].mxu0
        %v4215 = vpop.f32.mrb[0].mxu0
        %v4216 = vadd.f32 %v4016, %v4215
        %v4217 = vpop.f32.mrb[0].mxu0
        %4218 = vmatprep.mubr.bf16.mxu0 0
        %4219 = vmatmul.mubr.bf16.gmra.mrb[0].mxu0 %v3994
        %v4220 = vpop.f32.mrb[0].mxu0
        %v4221 = vadd.f32 %v4016, %v4220
        %v4222 = vpop.f32.mrb[0].mxu0
        %v4223 = vpop.f32.mrb[0].mxu0
        %v4224 = vadd.f32 %v4016, %v4223
        %v4225 = vpop.f32.mrb[0].mxu0
        %4226 = vdwg.mxu0
        %v4227 = vadd.f32 %v4101, %v408
        %v4228 = vadd.f32 %v4104, %v409
        %v4229 = vadd.f32 %v4109, %v410
        %v4230 = vadd.f32 %v4112, %v411
        %v4231 = vadd.f32 %v4117, %v412
        %v4232 = vadd.f32 %v4120, %v413
        %v4233 = vadd.f32 %v4125, %v414
        %v4234 = vadd.f32 %v4128, %v415
        %v4235 = vadd.f32 %v4133, %v416
        %v4236 = vadd.f32 %v4136, %v417
        %v4237 = vadd.f32 %v4141, %v418
        %v4238 = vadd.f32 %v4144, %v419
        %v4239 = vadd.f32 %v4149, %v420
        %v4240 = vadd.f32 %v4152, %v421
        %v4241 = vadd.f32 %v4157, %v422
        %v4242 = vadd.f32 %v4160, %v423
        %v4243 = vadd.f32 %v4165, %v424
        %v4244 = vadd.f32 %v4168, %v425
        %v4245 = vadd.f32 %v4173, %v426
        %v4246 = vadd.f32 %v4176, %v427
        %v4247 = vadd.f32 %v4181, %v428
        %v4248 = vadd.f32 %v4184, %v429
        %v4249 = vadd.f32 %v4189, %v430
        %v4250 = vadd.f32 %v4192, %v431
        %v4251 = vadd.f32 %v4197, %v432
        %v4252 = vadd.f32 %v4200, %v433
        %v4253 = vadd.f32 %v4205, %v434
        %v4254 = vadd.f32 %v4208, %v435
        %v4255 = vadd.f32 %v4213, %v436
        %v4256 = vadd.f32 %v4216, %v437
        %v4257 = vadd.f32 %v4221, %v438
        %v4258 = vadd.f32 %v4224, %v439
        %4259 = vst [vmem:[%s406] sm:$0xff] %v4227
        %4260 = vst [vmem:[%s406 + $0x8] sm:$0xff] %v4228
        %4261 = vst [vmem:[%s406 + $0x10] sm:$0xff] %v4229
        %4262 = vst [vmem:[%s406 + $0x18] sm:$0xff] %v4230
        %4263 = vst [vmem:[%s406 + $0x20] sm:$0xff] %v4231
        %4264 = vst [vmem:[%s406 + $0x28] sm:$0xff] %v4232
        %4265 = vst [vmem:[%s406 + $0x30] sm:$0xff] %v4233
        %4266 = vst [vmem:[%s406 + $0x38] sm:$0xff] %v4234
        %4267 = vst [vmem:[%s406 + $0x40] sm:$0xff] %v4235
        %4268 = vst [vmem:[%s406 + $0x48] sm:$0xff] %v4236
        %4269 = vst [vmem:[%s406 + $0x50] sm:$0xff] %v4237
        %4270 = vst [vmem:[%s406 + $0x58] sm:$0xff] %v4238
        %4271 = vst [vmem:[%s406 + $0x60] sm:$0xff] %v4239
        %4272 = vst [vmem:[%s406 + $0x68] sm:$0xff] %v4240
        %4273 = vst [vmem:[%s406 + $0x70] sm:$0xff] %v4241
        %4274 = vst [vmem:[%s406 + $0x78] sm:$0xff] %v4242
        %4275 = vst [vmem:[%s406 + $0x80] sm:$0xff] %v4243
        %4276 = vst [vmem:[%s406 + $0x88] sm:$0xff] %v4244
        %4277 = vst [vmem:[%s406 + $0x90] sm:$0xff] %v4245
        %4278 = vst [vmem:[%s406 + $0x98] sm:$0xff] %v4246
        %4279 = vst [vmem:[%s406 + $0xa0] sm:$0xff] %v4247
        %4280 = vst [vmem:[%s406 + $0xa8] sm:$0xff] %v4248
        %4281 = vst [vmem:[%s406 + $0xb0] sm:$0xff] %v4249
        %4282 = vst [vmem:[%s406 + $0xb8] sm:$0xff] %v4250
        %4283 = vst [vmem:[%s406 + $0xc0] sm:$0xff] %v4251
        %4284 = vst [vmem:[%s406 + $0xc8] sm:$0xff] %v4252
        %4285 = vst [vmem:[%s406 + $0xd0] sm:$0xff] %v4253
        %4286 = vst [vmem:[%s406 + $0xd8] sm:$0xff] %v4254
        %4287 = vst [vmem:[%s406 + $0xe0] sm:$0xff] %v4255
        %4288 = vst [vmem:[%s406 + $0xe8] sm:$0xff] %v4256
        %4289 = vst [vmem:[%s406 + $0xf0] sm:$0xff] %v4257
        %4290 = vst [vmem:[%s406 + $0xf8] sm:$0xff] %v4258
        %s4291 = sand.u32 %s251, 1
        %s4292 = scalar_lea.sflag [#allocation4], %s4291
        %s4293 = sand.u32 %s251, 1
        %s4294 = smul.addr %s4293, 256
        %s4295 = scalar_lea.vmem [#allocation8], %s4294
        // Predicated region
        $region73: #{tpu_custom_call.1} parent=59 // pred_check
          %p4296 = pneg %p261
        $region74: #{tpu_custom_call.1} parent=59 // pred_check_branch
          %4298 = sbr.rel (%p4296) target = $region76
        $region75: #{tpu_custom_call.1} parent=59 // pred_region
          %s4300 = ssub.s32 4096, 4096
          %4301 = vsyncadd %s4292, %s4300
          %s4302 = smul.addr %s28, 32
          %s4303 = smul.addr %s4302, 128
          %s4304 = scalar_lea.hbm %s10, %s4303
          %s4305 = sshll.u32 %s4295, 4
          %s4306 = int_to_ptr.vmem [resolvable:$true] %s4305
          %4311 = dma.vmem_to_hbm [thread:$0]  %s4306, 4096, %s4304, %s4292, 128, 128, 8
        $region76: #{tpu_custom_call.1} parent=59 // pred_fallthru
          _
      $region60: #{tpu_custom_call.1} parent=5 // pred_fallthru
        _
      %p4312 = scmp.le.s32.totalorder 2, %s23
      // Predicated region
      $region77: #{tpu_custom_call.1} parent=5 // pred_check
        %p4313 = pneg %p4312
      $region78: #{tpu_custom_call.1} parent=5 // pred_check_branch
        %4315 = sbr.rel (%p4313) target = $region80
      $region79: #{tpu_custom_call.1} parent=5 // pred_region
        %s4316 = ssub.s32 %s23, 2
        // Predicated region
        $region81: #{tpu_custom_call.1} parent=79 // pred_check
          %p4317 = pneg %p267
        $region82: #{tpu_custom_call.1} parent=79 // pred_check_branch
          %4319 = sbr.rel (%p4317) target = $region84
        $region83: #{tpu_custom_call.1} parent=79 // pred_region
          %s4320 = sand.u32 %s252, 1
          %s4321 = scalar_lea.sflag [#allocation4], %s4320
          %s4322 = sand.u32 %s252, 1
          %s4323 = smul.addr %s4322, 256
          %s4324 = scalar_lea.vmem [#allocation8], %s4323
          %4325 = dma.done %s4321, 4096
        $region84: #{tpu_custom_call.1} parent=79 // pred_fallthru
          _
      $region80: #{tpu_custom_call.1} parent=5 // pred_fallthru
        _
    $region6: #{tpu_custom_call.1} parent=1 // loop_footer
      %s27 = sadd.s32 1, %s23
    $region7: #{tpu_custom_call.1} parent=1 // loop_footer_branch
      %22 = sbr.rel target = $region3
    $region8: #{tpu_custom_call.1} parent=1 // loop_exit
      _
    %4326 = vsyncpa [#allocation3], 1
    %s4327 = scalar_lea.sflag [#allocation3], 1
    %4328 = vsyncpa %s4327, 1
    %4329 = vsyncpa [#allocation6], 1
    %4330 = vsyncpa [#allocation4], 1
    %s4331 = scalar_lea.sflag [#allocation4], 1
    %4332 = vsyncpa %s4331, 1

</llo_original>
